<compile_context>
chip_gen: v6e
topology: v6e:2x2x1
jax: 0.10.0
libtpu: 0.0.40
codegen_flags: <defaults>
</compile_context>

<pallas_src>
import jax
import jax.numpy as jnp
from jax.experimental import pallas as pl
from jax.experimental.pallas import tpu as pltpu

H = 56            # real LSTM hidden / per-gate width
L = 5             # LSTM layers
HP = 128          # padded hidden / per-gate width (lane multiple)
GP = 4 * HP       # padded gate width (512)
SP = 384          # padded state-input width  (324 -> 384)
MP = 256          # padded moves-input width  (224 -> 256)
FP = 256          # padded MLP feature width  (162 / 81 / 28 / 112 -> 256)


def _rubiks_kernel(sm_ref, hc0_ref, w_s1_ref, w_mlp_ref, b_mlp_ref,
                   w_in0_ref, w_rec_ref, b_lstm_ref, hc_out_ref):
    f32 = jnp.float32
    bf16 = jnp.bfloat16

    def mm(x, w):                       # bf16 MXU matmul, f32 accumulation
        return jnp.dot(x.astype(bf16), w, preferred_element_type=f32)

    def linear_relu(x, w, b):
        return jnp.maximum(mm(x, w) + b, 0.0)

    sm = sm_ref[...]                    # (1, SP + MP), zero-padded
    s = sm[:, :SP]                      # (1, 384) padded state   (lane-aligned slice)
    m = sm[:, SP:SP + MP]               # (1, 256) padded moves

    # ----- state MLP: 324 -> 162 -> 81 -> 28 (all padded to 256 lanes) -----
    s = linear_relu(s, w_s1_ref[...], b_mlp_ref[0])       # (1, 256)
    s = linear_relu(s, w_mlp_ref[0], b_mlp_ref[1])        # (1, 256)
    s = linear_relu(s, w_mlp_ref[1], b_mlp_ref[2])        # (1, 256)

    # ----- moves MLP: 224 -> 112 -> 28 -----
    m = linear_relu(m, w_mlp_ref[2], b_mlp_ref[3])        # (1, 256)
    m = linear_relu(m, w_mlp_ref[3], b_mlp_ref[4])        # (1, 256)

    # ----- 5-layer LSTM, seq_len = 1, batch = 1, gate order (i, f, g, o) -----
    hc0 = hc0_ref[...]                  # (2L, 1, HP): rows 0..L-1 = h0, L..2L-1 = c0

    # Hoisted recurrent terms: h0[l] @ W_hh[l] + (b_ih[l] + b_hh[l]).  These do
    # not depend on x_t, so they stay off the serial layer-to-layer chain.
    gb = [mm(hc0[l], w_rec_ref[l]) + b_lstm_ref[l] for l in range(L)]

    x_t = None
    for l in range(L):
        if l == 0:
            # concat(state28, moves28) @ W_ih0  ==  s @ Ws + m @ Wm  (no concat)
            ih = mm(s, w_in0_ref[0]) + mm(m, w_in0_ref[1])
        else:
            ih = mm(x_t, w_rec_ref[L + l - 1])            # W_ih of layer l
        gates = ih + gb[l]                                # (1, 512)
        i_g = jax.nn.sigmoid(gates[:, 0 * HP:1 * HP])     # 128-lane aligned slices
        f_g = jax.nn.sigmoid(gates[:, 1 * HP:2 * HP])
        g_g = jnp.tanh(gates[:, 2 * HP:3 * HP])
        o_g = jax.nn.sigmoid(gates[:, 3 * HP:4 * HP])
        c_new = f_g * hc0[L + l] + i_g * g_g              # padded lanes stay exactly 0
        h_new = o_g * jnp.tanh(c_new)
        hc_out_ref[l] = h_new                             # lane-dense (1, 128) stores
        hc_out_ref[L + l] = c_new
        x_t = h_new


@jax.jit
def rubiks_forward(state, moves, hidden, packed):
    """state: (1, 324), moves: (1, 224), hidden = (h0, c0) each (L, 1, 56)."""
    h0, c0 = hidden
    sm = jnp.zeros((1, SP + MP), jnp.float32)
    sm = sm.at[:, :324].set(state.astype(jnp.float32))
    sm = sm.at[:, SP:SP + 224].set(moves.astype(jnp.float32))
    hc0 = jnp.zeros((2 * L, 1, HP), jnp.float32)
    hc0 = hc0.at[:L, :, :H].set(h0.astype(jnp.float32))
    hc0 = hc0.at[L:, :, :H].set(c0.astype(jnp.float32))

    vmem = pl.BlockSpec(memory_space=pltpu.MemorySpace.VMEM)
    # TODO(synk): if the solver runs many moves per cube (decode-style), lift
    # that step loop into the kernel as an "arbitrary" grid axis with constant
    # weight index_maps so the ~2.5 MB of weights stays VMEM-resident, and add
    # a batch axis (parallel) to use both v7x TensorCores / fill the MXU.
    hc = pl.pallas_call(
        _rubiks_kernel,
        out_shape=jax.ShapeDtypeStruct((2 * L, 1, HP), jnp.float32),
        in_specs=[vmem] * 8,
        out_specs=vmem,
    )(sm, hc0, packed["w_s1"], packed["w_mlp"], packed["b_mlp"],
      packed["w_in0"], packed["w_rec"], packed["b_lstm"])

    h_n = hc[:L, :, :H]                 # (L, 1, 56)
    c_n = hc[L:, :, :H]                 # (L, 1, 56)
    out = h_n[L - 1:L]                  # (1, 1, 56): single-timestep LSTM output
    return out, (h_n, c_n)


def init_raw_params(key):
    """Torch-layout params: Linear W (out,in), b (out,); LSTM W_ih/W_hh (4H,56)."""
    def linear(k, in_f, out_f):
        k1, k2 = jax.random.split(k)
        bound = 1.0 / float(in_f) ** 0.5
        w = jax.random.uniform(k1, (out_f, in_f), jnp.float32, -bound, bound)
        b = jax.random.uniform(k2, (out_f,), jnp.float32, -bound, bound)
        return w, b

    keys = jax.random.split(key, 6)
    raw = {}
    raw["l1state.w"], raw["l1state.b"] = linear(keys[0], 324, 162)
    raw["l2state.w"], raw["l2state.b"] = linear(keys[1], 162, 81)
    raw["l3state.w"], raw["l3state.b"] = linear(keys[2], 81, 28)
    raw["l1moves.w"], raw["l1moves.b"] = linear(keys[3], 224, 112)
    raw["l2moves.w"], raw["l2moves.b"] = linear(keys[4], 112, 28)

    bound = 1.0 / float(H) ** 0.5
    lk = jax.random.split(keys[5], 4)
    raw["w_ih"] = jax.random.uniform(lk[0], (L, 4 * H, H), jnp.float32, -bound, bound)
    raw["w_hh"] = jax.random.uniform(lk[1], (L, 4 * H, H), jnp.float32, -bound, bound)
    raw["b_ih"] = jax.random.uniform(lk[2], (L, 4 * H), jnp.float32, -bound, bound)
    raw["b_hh"] = jax.random.uniform(lk[3], (L, 4 * H), jnp.float32, -bound, bound)
    return raw


def pack_params(raw):
    """Transpose / zero-pad / stack torch-layout params into lane-dense buffers."""
    bf16 = jnp.bfloat16

    def pad_mat(w, rows, cols):         # torch (out,in) -> padded (in, out)
        wt = jnp.asarray(w, jnp.float32).T
        out = jnp.zeros((rows, cols), jnp.float32)
        return out.at[:wt.shape[0], :wt.shape[1]].set(wt)

    def pad_vec(b, cols):               # (out,) -> (1, cols)
        out = jnp.zeros((1, cols), jnp.float32)
        return out.at[0, :b.shape[0]].set(jnp.asarray(b, jnp.float32))

    def pad_gate_wt(wt, rows):          # (in, 4H) -> (rows, GP), per-gate lane pad
        out = jnp.zeros((rows, GP), jnp.float32)
        for g in range(4):
            out = out.at[:wt.shape[0], g * HP:g * HP + H].set(wt[:, g * H:(g + 1) * H])
        return out

    def pad_gate_b(b):                  # (4H,) -> (1, GP), per-gate lane pad
        out = jnp.zeros((1, GP), jnp.float32)
        for g in range(4):
            out = out.at[0, g * HP:g * HP + H].set(b[g * H:(g + 1) * H])
        return out

    packed = {}
    packed["w_s1"] = pad_mat(raw["l1state.w"], SP, FP).astype(bf16)       # (384,256)
    packed["w_mlp"] = jnp.stack([                                         # (4,256,256)
        pad_mat(raw["l2state.w"], FP, FP),
        pad_mat(raw["l3state.w"], FP, FP),
        pad_mat(raw["l1moves.w"], FP, FP),
        pad_mat(raw["l2moves.w"], FP, FP),
    ]).astype(bf16)
    packed["b_mlp"] = jnp.stack([                                         # (5,1,256)
        pad_vec(raw["l1state.b"], FP),
        pad_vec(raw["l2state.b"], FP),
        pad_vec(raw["l3state.b"], FP),
        pad_vec(raw["l1moves.b"], FP),
        pad_vec(raw["l2moves.b"], FP),
    ])

    # Layer-0 input weight split into the state (rows 0..27) and moves
    # (rows 28..55) halves of concat(state, moves); each padded to FP rows.
    wih0_t = jnp.asarray(raw["w_ih"][0], jnp.float32).T                   # (56, 4H)
    packed["w_in0"] = jnp.stack([                                         # (2,256,512)
        pad_gate_wt(wih0_t[:28], FP),
        pad_gate_wt(wih0_t[28:56], FP),
    ]).astype(bf16)

    # [0..L-1] = W_hh for layers 0..L-1 ; [L..2L-2] = W_ih for layers 1..L-1
    rec = [pad_gate_wt(jnp.asarray(raw["w_hh"][l], jnp.float32).T, HP) for l in range(L)]
    rec += [pad_gate_wt(jnp.asarray(raw["w_ih"][l], jnp.float32).T, HP) for l in range(1, L)]
    packed["w_rec"] = jnp.stack(rec).astype(bf16)                         # (9,128,512)

    packed["b_lstm"] = jnp.stack([                                        # (5,1,512)
        pad_gate_b(jnp.asarray(raw["b_ih"][l] + raw["b_hh"][l], jnp.float32))
        for l in range(L)
    ])
    return packed


if __name__ == "__main__":
    root = jax.random.PRNGKey(0)
    k_param, k_state, k_moves = jax.random.split(root, 3)

    raw = init_raw_params(k_param)
    packed = pack_params(raw)

    state = jax.random.normal(k_state, (1, 324), jnp.float32)
    moves = jax.random.normal(k_moves, (1, 224), jnp.float32)
    h0 = jnp.zeros((L, 1, H), jnp.float32)   # RubiksCubeSolver.init_hidden()
    c0 = jnp.zeros((L, 1, H), jnp.float32)

    out, (h_n, c_n) = rubiks_forward(state, moves, (h0, c0), packed)
    jax.block_until_ready((out, h_n, c_n))

    assert out.shape == (1, 1, H)
    assert h_n.shape == (L, 1, H) and c_n.shape == (L, 1, H)
    print("KERNEL_OK")
</pallas_src>

<mosaic_0001>
module attributes {stable_mosaic.version = 11 : i64} {
  func.func @_rubiks_kernel(%arg0: memref<1x640xf32, #tpu.memory_space<vmem>>, %arg1: memref<10x1x128xf32, #tpu.memory_space<vmem>>, %arg2: memref<384x256xbf16, #tpu.memory_space<vmem>>, %arg3: memref<4x256x256xbf16, #tpu.memory_space<vmem>>, %arg4: memref<5x1x256xf32, #tpu.memory_space<vmem>>, %arg5: memref<2x256x512xbf16, #tpu.memory_space<vmem>>, %arg6: memref<9x128x512xbf16, #tpu.memory_space<vmem>>, %arg7: memref<5x1x512xf32, #tpu.memory_space<vmem>>, %arg8: memref<10x1x128xf32, #tpu.memory_space<vmem>>) attributes {dimension_semantics = [], scalar_prefetch = 0 : i64, scratch_operands = 0 : i64, tpu.core_type = #tpu.core_type<tc>} {
    %c0 = arith.constant 0 : index
    %c0_0 = arith.constant 0 : index
    %0 = vector.load %arg0[%c0, %c0_0] : memref<1x640xf32, #tpu.memory_space<vmem>>, vector<1x640xf32>
    %1 = vector.extract_strided_slice %0 {offsets = [0, 0], sizes = [1, 384], strides = [1, 1]} : vector<1x640xf32> to vector<1x384xf32>
    %2 = vector.extract_strided_slice %0 {offsets = [0, 384], sizes = [1, 256], strides = [1, 1]} : vector<1x640xf32> to vector<1x256xf32>
    %c0_1 = arith.constant 0 : index
    %c0_2 = arith.constant 0 : index
    %3 = vector.load %arg2[%c0_1, %c0_2] : memref<384x256xbf16, #tpu.memory_space<vmem>>, vector<384x256xbf16>
    %c0_3 = arith.constant 0 : index
    %c0_4 = arith.constant 0 : index
    %c0_5 = arith.constant 0 : index
    %4 = vector.load %arg4[%c0_3, %c0_4, %c0_5] : memref<5x1x256xf32, #tpu.memory_space<vmem>>, vector<1x1x256xf32>
    %5 = vector.shape_cast %4 : vector<1x1x256xf32> to vector<1x256xf32>
    %6 = arith.truncf %1 : vector<1x384xf32> to vector<1x384xbf16>
    %cst = arith.constant dense<0.000000e+00> : vector<1x256xf32>
    %7 = tpu.matmul %6, %3, %cst {dimension_numbers = #tpu.dot_dimension_numbers<[1], [0], [0], [1], [0, 0, 1, 1], [], []>} : vector<1x384xbf16>, vector<384x256xbf16>, vector<1x256xf32> -> vector<1x256xf32>
    %8 = arith.addf %7, %5 : vector<1x256xf32>
    %cst_6 = arith.constant 0.000000e+00 : f32
    %9 = vector.broadcast %cst_6 : f32 to vector<1x256xf32>
    %10 = arith.maximumf %8, %9 : vector<1x256xf32>
    %c0_7 = arith.constant 0 : index
    %c0_8 = arith.constant 0 : index
    %c0_9 = arith.constant 0 : index
    %11 = vector.load %arg3[%c0_7, %c0_8, %c0_9] : memref<4x256x256xbf16, #tpu.memory_space<vmem>>, vector<1x256x256xbf16>
    %12 = vector.shape_cast %11 : vector<1x256x256xbf16> to vector<256x256xbf16>
    %c1 = arith.constant 1 : index
    %c0_10 = arith.constant 0 : index
    %c0_11 = arith.constant 0 : index
    %13 = vector.load %arg4[%c1, %c0_10, %c0_11] : memref<5x1x256xf32, #tpu.memory_space<vmem>>, vector<1x1x256xf32>
    %14 = vector.shape_cast %13 : vector<1x1x256xf32> to vector<1x256xf32>
    %15 = arith.truncf %10 : vector<1x256xf32> to vector<1x256xbf16>
    %cst_12 = arith.constant dense<0.000000e+00> : vector<1x256xf32>
    %16 = tpu.matmul %15, %12, %cst_12 {dimension_numbers = #tpu.dot_dimension_numbers<[1], [0], [0], [1], [0, 0, 1, 1], [], []>} : vector<1x256xbf16>, vector<256x256xbf16>, vector<1x256xf32> -> vector<1x256xf32>
    %17 = arith.addf %16, %14 : vector<1x256xf32>
    %cst_13 = arith.constant 0.000000e+00 : f32
    %18 = vector.broadcast %cst_13 : f32 to vector<1x256xf32>
    %19 = arith.maximumf %17, %18 : vector<1x256xf32>
    %c1_14 = arith.constant 1 : index
    %c0_15 = arith.constant 0 : index
    %c0_16 = arith.constant 0 : index
    %20 = vector.load %arg3[%c1_14, %c0_15, %c0_16] : memref<4x256x256xbf16, #tpu.memory_space<vmem>>, vector<1x256x256xbf16>
    %21 = vector.shape_cast %20 : vector<1x256x256xbf16> to vector<256x256xbf16>
    %c2 = arith.constant 2 : index
    %c0_17 = arith.constant 0 : index
    %c0_18 = arith.constant 0 : index
    %22 = vector.load %arg4[%c2, %c0_17, %c0_18] : memref<5x1x256xf32, #tpu.memory_space<vmem>>, vector<1x1x256xf32>
    %23 = vector.shape_cast %22 : vector<1x1x256xf32> to vector<1x256xf32>
    %24 = arith.truncf %19 : vector<1x256xf32> to vector<1x256xbf16>
    %cst_19 = arith.constant dense<0.000000e+00> : vector<1x256xf32>
    %25 = tpu.matmul %24, %21, %cst_19 {dimension_numbers = #tpu.dot_dimension_numbers<[1], [0], [0], [1], [0, 0, 1, 1], [], []>} : vector<1x256xbf16>, vector<256x256xbf16>, vector<1x256xf32> -> vector<1x256xf32>
    %26 = arith.addf %25, %23 : vector<1x256xf32>
    %cst_20 = arith.constant 0.000000e+00 : f32
    %27 = vector.broadcast %cst_20 : f32 to vector<1x256xf32>
    %28 = arith.maximumf %26, %27 : vector<1x256xf32>
    %c2_21 = arith.constant 2 : index
    %c0_22 = arith.constant 0 : index
    %c0_23 = arith.constant 0 : index
    %29 = vector.load %arg3[%c2_21, %c0_22, %c0_23] : memref<4x256x256xbf16, #tpu.memory_space<vmem>>, vector<1x256x256xbf16>
    %30 = vector.shape_cast %29 : vector<1x256x256xbf16> to vector<256x256xbf16>
    %c3 = arith.constant 3 : index
    %c0_24 = arith.constant 0 : index
    %c0_25 = arith.constant 0 : index
    %31 = vector.load %arg4[%c3, %c0_24, %c0_25] : memref<5x1x256xf32, #tpu.memory_space<vmem>>, vector<1x1x256xf32>
    %32 = vector.shape_cast %31 : vector<1x1x256xf32> to vector<1x256xf32>
    %33 = arith.truncf %2 : vector<1x256xf32> to vector<1x256xbf16>
    %cst_26 = arith.constant dense<0.000000e+00> : vector<1x256xf32>
    %34 = tpu.matmul %33, %30, %cst_26 {dimension_numbers = #tpu.dot_dimension_numbers<[1], [0], [0], [1], [0, 0, 1, 1], [], []>} : vector<1x256xbf16>, vector<256x256xbf16>, vector<1x256xf32> -> vector<1x256xf32>
    %35 = arith.addf %34, %32 : vector<1x256xf32>
    %cst_27 = arith.constant 0.000000e+00 : f32
    %36 = vector.broadcast %cst_27 : f32 to vector<1x256xf32>
    %37 = arith.maximumf %35, %36 : vector<1x256xf32>
    %c3_28 = arith.constant 3 : index
    %c0_29 = arith.constant 0 : index
    %c0_30 = arith.constant 0 : index
    %38 = vector.load %arg3[%c3_28, %c0_29, %c0_30] : memref<4x256x256xbf16, #tpu.memory_space<vmem>>, vector<1x256x256xbf16>
    %39 = vector.shape_cast %38 : vector<1x256x256xbf16> to vector<256x256xbf16>
    %c4 = arith.constant 4 : index
    %c0_31 = arith.constant 0 : index
    %c0_32 = arith.constant 0 : index
    %40 = vector.load %arg4[%c4, %c0_31, %c0_32] : memref<5x1x256xf32, #tpu.memory_space<vmem>>, vector<1x1x256xf32>
    %41 = vector.shape_cast %40 : vector<1x1x256xf32> to vector<1x256xf32>
    %42 = arith.truncf %37 : vector<1x256xf32> to vector<1x256xbf16>
    %cst_33 = arith.constant dense<0.000000e+00> : vector<1x256xf32>
    %43 = tpu.matmul %42, %39, %cst_33 {dimension_numbers = #tpu.dot_dimension_numbers<[1], [0], [0], [1], [0, 0, 1, 1], [], []>} : vector<1x256xbf16>, vector<256x256xbf16>, vector<1x256xf32> -> vector<1x256xf32>
    %44 = arith.addf %43, %41 : vector<1x256xf32>
    %cst_34 = arith.constant 0.000000e+00 : f32
    %45 = vector.broadcast %cst_34 : f32 to vector<1x256xf32>
    %46 = arith.maximumf %44, %45 : vector<1x256xf32>
    %c0_35 = arith.constant 0 : index
    %c0_36 = arith.constant 0 : index
    %c0_37 = arith.constant 0 : index
    %47 = vector.load %arg1[%c0_35, %c0_36, %c0_37] : memref<10x1x128xf32, #tpu.memory_space<vmem>>, vector<10x1x128xf32>
    %48 = vector.extract_strided_slice %47 {offsets = [0, 0, 0], sizes = [1, 1, 128], strides = [1, 1, 1]} : vector<10x1x128xf32> to vector<1x1x128xf32>
    %49 = vector.shape_cast %48 : vector<1x1x128xf32> to vector<1x128xf32>
    %c0_38 = arith.constant 0 : index
    %c0_39 = arith.constant 0 : index
    %c0_40 = arith.constant 0 : index
    %50 = vector.load %arg6[%c0_38, %c0_39, %c0_40] : memref<9x128x512xbf16, #tpu.memory_space<vmem>>, vector<1x128x512xbf16>
    %51 = vector.shape_cast %50 : vector<1x128x512xbf16> to vector<128x512xbf16>
    %52 = arith.truncf %49 : vector<1x128xf32> to vector<1x128xbf16>
    %cst_41 = arith.constant dense<0.000000e+00> : vector<1x512xf32>
    %53 = tpu.matmul %52, %51, %cst_41 {dimension_numbers = #tpu.dot_dimension_numbers<[1], [0], [0], [1], [0, 0, 1, 1], [], []>} : vector<1x128xbf16>, vector<128x512xbf16>, vector<1x512xf32> -> vector<1x512xf32>
    %c0_42 = arith.constant 0 : index
    %c0_43 = arith.constant 0 : index
    %c0_44 = arith.constant 0 : index
    %54 = vector.load %arg7[%c0_42, %c0_43, %c0_44] : memref<5x1x512xf32, #tpu.memory_space<vmem>>, vector<1x1x512xf32>
    %55 = vector.shape_cast %54 : vector<1x1x512xf32> to vector<1x512xf32>
    %56 = arith.addf %53, %55 : vector<1x512xf32>
    %57 = vector.extract_strided_slice %47 {offsets = [1, 0, 0], sizes = [1, 1, 128], strides = [1, 1, 1]} : vector<10x1x128xf32> to vector<1x1x128xf32>
    %58 = vector.shape_cast %57 : vector<1x1x128xf32> to vector<1x128xf32>
    %c1_45 = arith.constant 1 : index
    %c0_46 = arith.constant 0 : index
    %c0_47 = arith.constant 0 : index
    %59 = vector.load %arg6[%c1_45, %c0_46, %c0_47] : memref<9x128x512xbf16, #tpu.memory_space<vmem>>, vector<1x128x512xbf16>
    %60 = vector.shape_cast %59 : vector<1x128x512xbf16> to vector<128x512xbf16>
    %61 = arith.truncf %58 : vector<1x128xf32> to vector<1x128xbf16>
    %cst_48 = arith.constant dense<0.000000e+00> : vector<1x512xf32>
    %62 = tpu.matmul %61, %60, %cst_48 {dimension_numbers = #tpu.dot_dimension_numbers<[1], [0], [0], [1], [0, 0, 1, 1], [], []>} : vector<1x128xbf16>, vector<128x512xbf16>, vector<1x512xf32> -> vector<1x512xf32>
    %c1_49 = arith.constant 1 : index
    %c0_50 = arith.constant 0 : index
    %c0_51 = arith.constant 0 : index
    %63 = vector.load %arg7[%c1_49, %c0_50, %c0_51] : memref<5x1x512xf32, #tpu.memory_space<vmem>>, vector<1x1x512xf32>
    %64 = vector.shape_cast %63 : vector<1x1x512xf32> to vector<1x512xf32>
    %65 = arith.addf %62, %64 : vector<1x512xf32>
    %66 = vector.extract_strided_slice %47 {offsets = [2, 0, 0], sizes = [1, 1, 128], strides = [1, 1, 1]} : vector<10x1x128xf32> to vector<1x1x128xf32>
    %67 = vector.shape_cast %66 : vector<1x1x128xf32> to vector<1x128xf32>
    %c2_52 = arith.constant 2 : index
    %c0_53 = arith.constant 0 : index
    %c0_54 = arith.constant 0 : index
    %68 = vector.load %arg6[%c2_52, %c0_53, %c0_54] : memref<9x128x512xbf16, #tpu.memory_space<vmem>>, vector<1x128x512xbf16>
    %69 = vector.shape_cast %68 : vector<1x128x512xbf16> to vector<128x512xbf16>
    %70 = arith.truncf %67 : vector<1x128xf32> to vector<1x128xbf16>
    %cst_55 = arith.constant dense<0.000000e+00> : vector<1x512xf32>
    %71 = tpu.matmul %70, %69, %cst_55 {dimension_numbers = #tpu.dot_dimension_numbers<[1], [0], [0], [1], [0, 0, 1, 1], [], []>} : vector<1x128xbf16>, vector<128x512xbf16>, vector<1x512xf32> -> vector<1x512xf32>
    %c2_56 = arith.constant 2 : index
    %c0_57 = arith.constant 0 : index
    %c0_58 = arith.constant 0 : index
    %72 = vector.load %arg7[%c2_56, %c0_57, %c0_58] : memref<5x1x512xf32, #tpu.memory_space<vmem>>, vector<1x1x512xf32>
    %73 = vector.shape_cast %72 : vector<1x1x512xf32> to vector<1x512xf32>
    %74 = arith.addf %71, %73 : vector<1x512xf32>
    %75 = vector.extract_strided_slice %47 {offsets = [3, 0, 0], sizes = [1, 1, 128], strides = [1, 1, 1]} : vector<10x1x128xf32> to vector<1x1x128xf32>
    %76 = vector.shape_cast %75 : vector<1x1x128xf32> to vector<1x128xf32>
    %c3_59 = arith.constant 3 : index
    %c0_60 = arith.constant 0 : index
    %c0_61 = arith.constant 0 : index
    %77 = vector.load %arg6[%c3_59, %c0_60, %c0_61] : memref<9x128x512xbf16, #tpu.memory_space<vmem>>, vector<1x128x512xbf16>
    %78 = vector.shape_cast %77 : vector<1x128x512xbf16> to vector<128x512xbf16>
    %79 = arith.truncf %76 : vector<1x128xf32> to vector<1x128xbf16>
    %cst_62 = arith.constant dense<0.000000e+00> : vector<1x512xf32>
    %80 = tpu.matmul %79, %78, %cst_62 {dimension_numbers = #tpu.dot_dimension_numbers<[1], [0], [0], [1], [0, 0, 1, 1], [], []>} : vector<1x128xbf16>, vector<128x512xbf16>, vector<1x512xf32> -> vector<1x512xf32>
    %c3_63 = arith.constant 3 : index
    %c0_64 = arith.constant 0 : index
    %c0_65 = arith.constant 0 : index
    %81 = vector.load %arg7[%c3_63, %c0_64, %c0_65] : memref<5x1x512xf32, #tpu.memory_space<vmem>>, vector<1x1x512xf32>
    %82 = vector.shape_cast %81 : vector<1x1x512xf32> to vector<1x512xf32>
    %83 = arith.addf %80, %82 : vector<1x512xf32>
    %84 = vector.extract_strided_slice %47 {offsets = [4, 0, 0], sizes = [1, 1, 128], strides = [1, 1, 1]} : vector<10x1x128xf32> to vector<1x1x128xf32>
    %85 = vector.shape_cast %84 : vector<1x1x128xf32> to vector<1x128xf32>
    %c4_66 = arith.constant 4 : index
    %c0_67 = arith.constant 0 : index
    %c0_68 = arith.constant 0 : index
    %86 = vector.load %arg6[%c4_66, %c0_67, %c0_68] : memref<9x128x512xbf16, #tpu.memory_space<vmem>>, vector<1x128x512xbf16>
    %87 = vector.shape_cast %86 : vector<1x128x512xbf16> to vector<128x512xbf16>
    %88 = arith.truncf %85 : vector<1x128xf32> to vector<1x128xbf16>
    %cst_69 = arith.constant dense<0.000000e+00> : vector<1x512xf32>
    %89 = tpu.matmul %88, %87, %cst_69 {dimension_numbers = #tpu.dot_dimension_numbers<[1], [0], [0], [1], [0, 0, 1, 1], [], []>} : vector<1x128xbf16>, vector<128x512xbf16>, vector<1x512xf32> -> vector<1x512xf32>
    %c4_70 = arith.constant 4 : index
    %c0_71 = arith.constant 0 : index
    %c0_72 = arith.constant 0 : index
    %90 = vector.load %arg7[%c4_70, %c0_71, %c0_72] : memref<5x1x512xf32, #tpu.memory_space<vmem>>, vector<1x1x512xf32>
    %91 = vector.shape_cast %90 : vector<1x1x512xf32> to vector<1x512xf32>
    %92 = arith.addf %89, %91 : vector<1x512xf32>
    %c0_73 = arith.constant 0 : index
    %c0_74 = arith.constant 0 : index
    %c0_75 = arith.constant 0 : index
    %93 = vector.load %arg5[%c0_73, %c0_74, %c0_75] : memref<2x256x512xbf16, #tpu.memory_space<vmem>>, vector<1x256x512xbf16>
    %94 = vector.shape_cast %93 : vector<1x256x512xbf16> to vector<256x512xbf16>
    %95 = arith.truncf %28 : vector<1x256xf32> to vector<1x256xbf16>
    %cst_76 = arith.constant dense<0.000000e+00> : vector<1x512xf32>
    %96 = tpu.matmul %95, %94, %cst_76 {dimension_numbers = #tpu.dot_dimension_numbers<[1], [0], [0], [1], [0, 0, 1, 1], [], []>} : vector<1x256xbf16>, vector<256x512xbf16>, vector<1x512xf32> -> vector<1x512xf32>
    %c1_77 = arith.constant 1 : index
    %c0_78 = arith.constant 0 : index
    %c0_79 = arith.constant 0 : index
    %97 = vector.load %arg5[%c1_77, %c0_78, %c0_79] : memref<2x256x512xbf16, #tpu.memory_space<vmem>>, vector<1x256x512xbf16>
    %98 = vector.shape_cast %97 : vector<1x256x512xbf16> to vector<256x512xbf16>
    %99 = arith.truncf %46 : vector<1x256xf32> to vector<1x256xbf16>
    %cst_80 = arith.constant dense<0.000000e+00> : vector<1x512xf32>
    %100 = tpu.matmul %99, %98, %cst_80 {dimension_numbers = #tpu.dot_dimension_numbers<[1], [0], [0], [1], [0, 0, 1, 1], [], []>} : vector<1x256xbf16>, vector<256x512xbf16>, vector<1x512xf32> -> vector<1x512xf32>
    %101 = arith.addf %96, %100 : vector<1x512xf32>
    %102 = arith.addf %101, %56 : vector<1x512xf32>
    %103 = vector.extract_strided_slice %102 {offsets = [0, 0], sizes = [1, 128], strides = [1, 1]} : vector<1x512xf32> to vector<1x128xf32>
    %104 = arith.negf %103 : vector<1x128xf32>
    %105 = math.exp %104 : vector<1x128xf32>
    %cst_81 = arith.constant 1.000000e+00 : f32
    %106 = vector.broadcast %cst_81 : f32 to vector<1x128xf32>
    %107 = arith.addf %106, %105 : vector<1x128xf32>
    %108 = arith.divf %106, %107 : vector<1x128xf32>
    %109 = vector.extract_strided_slice %102 {offsets = [0, 128], sizes = [1, 128], strides = [1, 1]} : vector<1x512xf32> to vector<1x128xf32>
    %110 = arith.negf %109 : vector<1x128xf32>
    %111 = math.exp %110 : vector<1x128xf32>
    %cst_82 = arith.constant 1.000000e+00 : f32
    %112 = vector.broadcast %cst_82 : f32 to vector<1x128xf32>
    %113 = arith.addf %112, %111 : vector<1x128xf32>
    %114 = arith.divf %112, %113 : vector<1x128xf32>
    %115 = vector.extract_strided_slice %102 {offsets = [0, 256], sizes = [1, 128], strides = [1, 1]} : vector<1x512xf32> to vector<1x128xf32>
    %116 = math.tanh %115 : vector<1x128xf32>
    %117 = vector.extract_strided_slice %102 {offsets = [0, 384], sizes = [1, 128], strides = [1, 1]} : vector<1x512xf32> to vector<1x128xf32>
    %118 = arith.negf %117 : vector<1x128xf32>
    %119 = math.exp %118 : vector<1x128xf32>
    %cst_83 = arith.constant 1.000000e+00 : f32
    %120 = vector.broadcast %cst_83 : f32 to vector<1x128xf32>
    %121 = arith.addf %120, %119 : vector<1x128xf32>
    %122 = arith.divf %120, %121 : vector<1x128xf32>
    %123 = vector.extract_strided_slice %47 {offsets = [5, 0, 0], sizes = [1, 1, 128], strides = [1, 1, 1]} : vector<10x1x128xf32> to vector<1x1x128xf32>
    %124 = vector.shape_cast %123 : vector<1x1x128xf32> to vector<1x128xf32>
    %125 = arith.mulf %114, %124 : vector<1x128xf32>
    %126 = arith.mulf %108, %116 : vector<1x128xf32>
    %127 = arith.addf %125, %126 : vector<1x128xf32>
    %128 = math.tanh %127 : vector<1x128xf32>
    %129 = arith.mulf %122, %128 : vector<1x128xf32>
    %c0_84 = arith.constant 0 : index
    %c0_85 = arith.constant 0 : index
    %c0_86 = arith.constant 0 : index
    %130 = vector.load %arg8[%c0_84, %c0_85, %c0_86] : memref<10x1x128xf32, #tpu.memory_space<vmem>>, vector<1x1x128xf32>
    %131 = vector.shape_cast %130 : vector<1x1x128xf32> to vector<1x128xf32>
    %132 = vector.shape_cast %129 : vector<1x128xf32> to vector<1x1x128xf32>
    tpu.vector_store %arg8[%c0_84, %c0_85, %c0_86], %132 {strides = array<i32>} : memref<10x1x128xf32, #tpu.memory_space<vmem>>, vector<1x1x128xf32>,
    %c5 = arith.constant 5 : index
    %c0_87 = arith.constant 0 : index
    %c0_88 = arith.constant 0 : index
    %133 = vector.load %arg8[%c5, %c0_87, %c0_88] : memref<10x1x128xf32, #tpu.memory_space<vmem>>, vector<1x1x128xf32>
    %134 = vector.shape_cast %133 : vector<1x1x128xf32> to vector<1x128xf32>
    %135 = vector.shape_cast %127 : vector<1x128xf32> to vector<1x1x128xf32>
    tpu.vector_store %arg8[%c5, %c0_87, %c0_88], %135 {strides = array<i32>} : memref<10x1x128xf32, #tpu.memory_space<vmem>>, vector<1x1x128xf32>,
    %c5_89 = arith.constant 5 : index
    %c0_90 = arith.constant 0 : index
    %c0_91 = arith.constant 0 : index
    %136 = vector.load %arg6[%c5_89, %c0_90, %c0_91] : memref<9x128x512xbf16, #tpu.memory_space<vmem>>, vector<1x128x512xbf16>
    %137 = vector.shape_cast %136 : vector<1x128x512xbf16> to vector<128x512xbf16>
    %138 = arith.truncf %129 : vector<1x128xf32> to vector<1x128xbf16>
    %cst_92 = arith.constant dense<0.000000e+00> : vector<1x512xf32>
    %139 = tpu.matmul %138, %137, %cst_92 {dimension_numbers = #tpu.dot_dimension_numbers<[1], [0], [0], [1], [0, 0, 1, 1], [], []>} : vector<1x128xbf16>, vector<128x512xbf16>, vector<1x512xf32> -> vector<1x512xf32>
    %140 = arith.addf %139, %65 : vector<1x512xf32>
    %141 = vector.extract_strided_slice %140 {offsets = [0, 0], sizes = [1, 128], strides = [1, 1]} : vector<1x512xf32> to vector<1x128xf32>
    %142 = arith.negf %141 : vector<1x128xf32>
    %143 = math.exp %142 : vector<1x128xf32>
    %cst_93 = arith.constant 1.000000e+00 : f32
    %144 = vector.broadcast %cst_93 : f32 to vector<1x128xf32>
    %145 = arith.addf %144, %143 : vector<1x128xf32>
    %146 = arith.divf %144, %145 : vector<1x128xf32>
    %147 = vector.extract_strided_slice %140 {offsets = [0, 128], sizes = [1, 128], strides = [1, 1]} : vector<1x512xf32> to vector<1x128xf32>
    %148 = arith.negf %147 : vector<1x128xf32>
    %149 = math.exp %148 : vector<1x128xf32>
    %cst_94 = arith.constant 1.000000e+00 : f32
    %150 = vector.broadcast %cst_94 : f32 to vector<1x128xf32>
    %151 = arith.addf %150, %149 : vector<1x128xf32>
    %152 = arith.divf %150, %151 : vector<1x128xf32>
    %153 = vector.extract_strided_slice %140 {offsets = [0, 256], sizes = [1, 128], strides = [1, 1]} : vector<1x512xf32> to vector<1x128xf32>
    %154 = math.tanh %153 : vector<1x128xf32>
    %155 = vector.extract_strided_slice %140 {offsets = [0, 384], sizes = [1, 128], strides = [1, 1]} : vector<1x512xf32> to vector<1x128xf32>
    %156 = arith.negf %155 : vector<1x128xf32>
    %157 = math.exp %156 : vector<1x128xf32>
    %cst_95 = arith.constant 1.000000e+00 : f32
    %158 = vector.broadcast %cst_95 : f32 to vector<1x128xf32>
    %159 = arith.addf %158, %157 : vector<1x128xf32>
    %160 = arith.divf %158, %159 : vector<1x128xf32>
    %161 = vector.extract_strided_slice %47 {offsets = [6, 0, 0], sizes = [1, 1, 128], strides = [1, 1, 1]} : vector<10x1x128xf32> to vector<1x1x128xf32>
    %162 = vector.shape_cast %161 : vector<1x1x128xf32> to vector<1x128xf32>
    %163 = arith.mulf %152, %162 : vector<1x128xf32>
    %164 = arith.mulf %146, %154 : vector<1x128xf32>
    %165 = arith.addf %163, %164 : vector<1x128xf32>
    %166 = math.tanh %165 : vector<1x128xf32>
    %167 = arith.mulf %160, %166 : vector<1x128xf32>
    %c1_96 = arith.constant 1 : index
    %c0_97 = arith.constant 0 : index
    %c0_98 = arith.constant 0 : index
    %168 = vector.load %arg8[%c1_96, %c0_97, %c0_98] : memref<10x1x128xf32, #tpu.memory_space<vmem>>, vector<1x1x128xf32>
    %169 = vector.shape_cast %168 : vector<1x1x128xf32> to vector<1x128xf32>
    %170 = vector.shape_cast %167 : vector<1x128xf32> to vector<1x1x128xf32>
    tpu.vector_store %arg8[%c1_96, %c0_97, %c0_98], %170 {strides = array<i32>} : memref<10x1x128xf32, #tpu.memory_space<vmem>>, vector<1x1x128xf32>,
    %c6 = arith.constant 6 : index
    %c0_99 = arith.constant 0 : index
    %c0_100 = arith.constant 0 : index
    %171 = vector.load %arg8[%c6, %c0_99, %c0_100] : memref<10x1x128xf32, #tpu.memory_space<vmem>>, vector<1x1x128xf32>
    %172 = vector.shape_cast %171 : vector<1x1x128xf32> to vector<1x128xf32>
    %173 = vector.shape_cast %165 : vector<1x128xf32> to vector<1x1x128xf32>
    tpu.vector_store %arg8[%c6, %c0_99, %c0_100], %173 {strides = array<i32>} : memref<10x1x128xf32, #tpu.memory_space<vmem>>, vector<1x1x128xf32>,
    %c6_101 = arith.constant 6 : index
    %c0_102 = arith.constant 0 : index
    %c0_103 = arith.constant 0 : index
    %174 = vector.load %arg6[%c6_101, %c0_102, %c0_103] : memref<9x128x512xbf16, #tpu.memory_space<vmem>>, vector<1x128x512xbf16>
    %175 = vector.shape_cast %174 : vector<1x128x512xbf16> to vector<128x512xbf16>
    %176 = arith.truncf %167 : vector<1x128xf32> to vector<1x128xbf16>
    %cst_104 = arith.constant dense<0.000000e+00> : vector<1x512xf32>
    %177 = tpu.matmul %176, %175, %cst_104 {dimension_numbers = #tpu.dot_dimension_numbers<[1], [0], [0], [1], [0, 0, 1, 1], [], []>} : vector<1x128xbf16>, vector<128x512xbf16>, vector<1x512xf32> -> vector<1x512xf32>
    %178 = arith.addf %177, %74 : vector<1x512xf32>
    %179 = vector.extract_strided_slice %178 {offsets = [0, 0], sizes = [1, 128], strides = [1, 1]} : vector<1x512xf32> to vector<1x128xf32>
    %180 = arith.negf %179 : vector<1x128xf32>
    %181 = math.exp %180 : vector<1x128xf32>
    %cst_105 = arith.constant 1.000000e+00 : f32
    %182 = vector.broadcast %cst_105 : f32 to vector<1x128xf32>
    %183 = arith.addf %182, %181 : vector<1x128xf32>
    %184 = arith.divf %182, %183 : vector<1x128xf32>
    %185 = vector.extract_strided_slice %178 {offsets = [0, 128], sizes = [1, 128], strides = [1, 1]} : vector<1x512xf32> to vector<1x128xf32>
    %186 = arith.negf %185 : vector<1x128xf32>
    %187 = math.exp %186 : vector<1x128xf32>
    %cst_106 = arith.constant 1.000000e+00 : f32
    %188 = vector.broadcast %cst_106 : f32 to vector<1x128xf32>
    %189 = arith.addf %188, %187 : vector<1x128xf32>
    %190 = arith.divf %188, %189 : vector<1x128xf32>
    %191 = vector.extract_strided_slice %178 {offsets = [0, 256], sizes = [1, 128], strides = [1, 1]} : vector<1x512xf32> to vector<1x128xf32>
    %192 = math.tanh %191 : vector<1x128xf32>
    %193 = vector.extract_strided_slice %178 {offsets = [0, 384], sizes = [1, 128], strides = [1, 1]} : vector<1x512xf32> to vector<1x128xf32>
    %194 = arith.negf %193 : vector<1x128xf32>
    %195 = math.exp %194 : vector<1x128xf32>
    %cst_107 = arith.constant 1.000000e+00 : f32
    %196 = vector.broadcast %cst_107 : f32 to vector<1x128xf32>
    %197 = arith.addf %196, %195 : vector<1x128xf32>
    %198 = arith.divf %196, %197 : vector<1x128xf32>
    %199 = vector.extract_strided_slice %47 {offsets = [7, 0, 0], sizes = [1, 1, 128], strides = [1, 1, 1]} : vector<10x1x128xf32> to vector<1x1x128xf32>
    %200 = vector.shape_cast %199 : vector<1x1x128xf32> to vector<1x128xf32>
    %201 = arith.mulf %190, %200 : vector<1x128xf32>
    %202 = arith.mulf %184, %192 : vector<1x128xf32>
    %203 = arith.addf %201, %202 : vector<1x128xf32>
    %204 = math.tanh %203 : vector<1x128xf32>
    %205 = arith.mulf %198, %204 : vector<1x128xf32>
    %c2_108 = arith.constant 2 : index
    %c0_109 = arith.constant 0 : index
    %c0_110 = arith.constant 0 : index
    %206 = vector.load %arg8[%c2_108, %c0_109, %c0_110] : memref<10x1x128xf32, #tpu.memory_space<vmem>>, vector<1x1x128xf32>
    %207 = vector.shape_cast %206 : vector<1x1x128xf32> to vector<1x128xf32>
    %208 = vector.shape_cast %205 : vector<1x128xf32> to vector<1x1x128xf32>
    tpu.vector_store %arg8[%c2_108, %c0_109, %c0_110], %208 {strides = array<i32>} : memref<10x1x128xf32, #tpu.memory_space<vmem>>, vector<1x1x128xf32>,
    %c7 = arith.constant 7 : index
    %c0_111 = arith.constant 0 : index
    %c0_112 = arith.constant 0 : index
    %209 = vector.load %arg8[%c7, %c0_111, %c0_112] : memref<10x1x128xf32, #tpu.memory_space<vmem>>, vector<1x1x128xf32>
    %210 = vector.shape_cast %209 : vector<1x1x128xf32> to vector<1x128xf32>
    %211 = vector.shape_cast %203 : vector<1x128xf32> to vector<1x1x128xf32>
    tpu.vector_store %arg8[%c7, %c0_111, %c0_112], %211 {strides = array<i32>} : memref<10x1x128xf32, #tpu.memory_space<vmem>>, vector<1x1x128xf32>,
    %c7_113 = arith.constant 7 : index
    %c0_114 = arith.constant 0 : index
    %c0_115 = arith.constant 0 : index
    %212 = vector.load %arg6[%c7_113, %c0_114, %c0_115] : memref<9x128x512xbf16, #tpu.memory_space<vmem>>, vector<1x128x512xbf16>
    %213 = vector.shape_cast %212 : vector<1x128x512xbf16> to vector<128x512xbf16>
    %214 = arith.truncf %205 : vector<1x128xf32> to vector<1x128xbf16>
    %cst_116 = arith.constant dense<0.000000e+00> : vector<1x512xf32>
    %215 = tpu.matmul %214, %213, %cst_116 {dimension_numbers = #tpu.dot_dimension_numbers<[1], [0], [0], [1], [0, 0, 1, 1], [], []>} : vector<1x128xbf16>, vector<128x512xbf16>, vector<1x512xf32> -> vector<1x512xf32>
    %216 = arith.addf %215, %83 : vector<1x512xf32>
    %217 = vector.extract_strided_slice %216 {offsets = [0, 0], sizes = [1, 128], strides = [1, 1]} : vector<1x512xf32> to vector<1x128xf32>
    %218 = arith.negf %217 : vector<1x128xf32>
    %219 = math.exp %218 : vector<1x128xf32>
    %cst_117 = arith.constant 1.000000e+00 : f32
    %220 = vector.broadcast %cst_117 : f32 to vector<1x128xf32>
    %221 = arith.addf %220, %219 : vector<1x128xf32>
    %222 = arith.divf %220, %221 : vector<1x128xf32>
    %223 = vector.extract_strided_slice %216 {offsets = [0, 128], sizes = [1, 128], strides = [1, 1]} : vector<1x512xf32> to vector<1x128xf32>
    %224 = arith.negf %223 : vector<1x128xf32>
    %225 = math.exp %224 : vector<1x128xf32>
    %cst_118 = arith.constant 1.000000e+00 : f32
    %226 = vector.broadcast %cst_118 : f32 to vector<1x128xf32>
    %227 = arith.addf %226, %225 : vector<1x128xf32>
    %228 = arith.divf %226, %227 : vector<1x128xf32>
    %229 = vector.extract_strided_slice %216 {offsets = [0, 256], sizes = [1, 128], strides = [1, 1]} : vector<1x512xf32> to vector<1x128xf32>
    %230 = math.tanh %229 : vector<1x128xf32>
    %231 = vector.extract_strided_slice %216 {offsets = [0, 384], sizes = [1, 128], strides = [1, 1]} : vector<1x512xf32> to vector<1x128xf32>
    %232 = arith.negf %231 : vector<1x128xf32>
    %233 = math.exp %232 : vector<1x128xf32>
    %cst_119 = arith.constant 1.000000e+00 : f32
    %234 = vector.broadcast %cst_119 : f32 to vector<1x128xf32>
    %235 = arith.addf %234, %233 : vector<1x128xf32>
    %236 = arith.divf %234, %235 : vector<1x128xf32>
    %237 = vector.extract_strided_slice %47 {offsets = [8, 0, 0], sizes = [1, 1, 128], strides = [1, 1, 1]} : vector<10x1x128xf32> to vector<1x1x128xf32>
    %238 = vector.shape_cast %237 : vector<1x1x128xf32> to vector<1x128xf32>
    %239 = arith.mulf %228, %238 : vector<1x128xf32>
    %240 = arith.mulf %222, %230 : vector<1x128xf32>
    %241 = arith.addf %239, %240 : vector<1x128xf32>
    %242 = math.tanh %241 : vector<1x128xf32>
    %243 = arith.mulf %236, %242 : vector<1x128xf32>
    %c3_120 = arith.constant 3 : index
    %c0_121 = arith.constant 0 : index
    %c0_122 = arith.constant 0 : index
    %244 = vector.load %arg8[%c3_120, %c0_121, %c0_122] : memref<10x1x128xf32, #tpu.memory_space<vmem>>, vector<1x1x128xf32>
    %245 = vector.shape_cast %244 : vector<1x1x128xf32> to vector<1x128xf32>
    %246 = vector.shape_cast %243 : vector<1x128xf32> to vector<1x1x128xf32>
    tpu.vector_store %arg8[%c3_120, %c0_121, %c0_122], %246 {strides = array<i32>} : memref<10x1x128xf32, #tpu.memory_space<vmem>>, vector<1x1x128xf32>,
    %c8 = arith.constant 8 : index
    %c0_123 = arith.constant 0 : index
    %c0_124 = arith.constant 0 : index
    %247 = vector.load %arg8[%c8, %c0_123, %c0_124] : memref<10x1x128xf32, #tpu.memory_space<vmem>>, vector<1x1x128xf32>
    %248 = vector.shape_cast %247 : vector<1x1x128xf32> to vector<1x128xf32>
    %249 = vector.shape_cast %241 : vector<1x128xf32> to vector<1x1x128xf32>
    tpu.vector_store %arg8[%c8, %c0_123, %c0_124], %249 {strides = array<i32>} : memref<10x1x128xf32, #tpu.memory_space<vmem>>, vector<1x1x128xf32>,
    %c8_125 = arith.constant 8 : index
    %c0_126 = arith.constant 0 : index
    %c0_127 = arith.constant 0 : index
    %250 = vector.load %arg6[%c8_125, %c0_126, %c0_127] : memref<9x128x512xbf16, #tpu.memory_space<vmem>>, vector<1x128x512xbf16>
    %251 = vector.shape_cast %250 : vector<1x128x512xbf16> to vector<128x512xbf16>
    %252 = arith.truncf %243 : vector<1x128xf32> to vector<1x128xbf16>
    %cst_128 = arith.constant dense<0.000000e+00> : vector<1x512xf32>
    %253 = tpu.matmul %252, %251, %cst_128 {dimension_numbers = #tpu.dot_dimension_numbers<[1], [0], [0], [1], [0, 0, 1, 1], [], []>} : vector<1x128xbf16>, vector<128x512xbf16>, vector<1x512xf32> -> vector<1x512xf32>
    %254 = arith.addf %253, %92 : vector<1x512xf32>
    %255 = vector.extract_strided_slice %254 {offsets = [0, 0], sizes = [1, 128], strides = [1, 1]} : vector<1x512xf32> to vector<1x128xf32>
    %256 = arith.negf %255 : vector<1x128xf32>
    %257 = math.exp %256 : vector<1x128xf32>
    %cst_129 = arith.constant 1.000000e+00 : f32
    %258 = vector.broadcast %cst_129 : f32 to vector<1x128xf32>
    %259 = arith.addf %258, %257 : vector<1x128xf32>
    %260 = arith.divf %258, %259 : vector<1x128xf32>
    %261 = vector.extract_strided_slice %254 {offsets = [0, 128], sizes = [1, 128], strides = [1, 1]} : vector<1x512xf32> to vector<1x128xf32>
    %262 = arith.negf %261 : vector<1x128xf32>
    %263 = math.exp %262 : vector<1x128xf32>
    %cst_130 = arith.constant 1.000000e+00 : f32
    %264 = vector.broadcast %cst_130 : f32 to vector<1x128xf32>
    %265 = arith.addf %264, %263 : vector<1x128xf32>
    %266 = arith.divf %264, %265 : vector<1x128xf32>
    %267 = vector.extract_strided_slice %254 {offsets = [0, 256], sizes = [1, 128], strides = [1, 1]} : vector<1x512xf32> to vector<1x128xf32>
    %268 = math.tanh %267 : vector<1x128xf32>
    %269 = vector.extract_strided_slice %254 {offsets = [0, 384], sizes = [1, 128], strides = [1, 1]} : vector<1x512xf32> to vector<1x128xf32>
    %270 = arith.negf %269 : vector<1x128xf32>
    %271 = math.exp %270 : vector<1x128xf32>
    %cst_131 = arith.constant 1.000000e+00 : f32
    %272 = vector.broadcast %cst_131 : f32 to vector<1x128xf32>
    %273 = arith.addf %272, %271 : vector<1x128xf32>
    %274 = arith.divf %272, %273 : vector<1x128xf32>
    %275 = vector.extract_strided_slice %47 {offsets = [9, 0, 0], sizes = [1, 1, 128], strides = [1, 1, 1]} : vector<10x1x128xf32> to vector<1x1x128xf32>
    %276 = vector.shape_cast %275 : vector<1x1x128xf32> to vector<1x128xf32>
    %277 = arith.mulf %266, %276 : vector<1x128xf32>
    %278 = arith.mulf %260, %268 : vector<1x128xf32>
    %279 = arith.addf %277, %278 : vector<1x128xf32>
    %280 = math.tanh %279 : vector<1x128xf32>
    %281 = arith.mulf %274, %280 : vector<1x128xf32>
    %c4_132 = arith.constant 4 : index
    %c0_133 = arith.constant 0 : index
    %c0_134 = arith.constant 0 : index
    %282 = vector.load %arg8[%c4_132, %c0_133, %c0_134] : memref<10x1x128xf32, #tpu.memory_space<vmem>>, vector<1x1x128xf32>
    %283 = vector.shape_cast %282 : vector<1x1x128xf32> to vector<1x128xf32>
    %284 = vector.shape_cast %281 : vector<1x128xf32> to vector<1x1x128xf32>
    tpu.vector_store %arg8[%c4_132, %c0_133, %c0_134], %284 {strides = array<i32>} : memref<10x1x128xf32, #tpu.memory_space<vmem>>, vector<1x1x128xf32>,
    %c9 = arith.constant 9 : index
    %c0_135 = arith.constant 0 : index
    %c0_136 = arith.constant 0 : index
    %285 = vector.load %arg8[%c9, %c0_135, %c0_136] : memref<10x1x128xf32, #tpu.memory_space<vmem>>, vector<1x1x128xf32>
    %286 = vector.shape_cast %285 : vector<1x1x128xf32> to vector<1x128xf32>
    %287 = vector.shape_cast %279 : vector<1x128xf32> to vector<1x1x128xf32>
    tpu.vector_store %arg8[%c9, %c0_135, %c0_136], %287 {strides = array<i32>} : memref<10x1x128xf32, #tpu.memory_space<vmem>>, vector<1x1x128xf32>,
    return
  }
}

</mosaic_0001>

<llo_original>
// kernel: rubiks_forward.1
$region0: #{rubiks_forward.1}
  #allocation0 [shape = 'u32[]', space=smem, size = 0x4, offset = 0x4, fixed_abs, tag = 'smem constant byte address 0x4 - core index']
  #allocation1 [shape = 'u32[144,128]{1,0:T(1,128)}', space=vmem, size = 0x12000, scoped, tag = 'internal scratch']
  %s0 = inlined_call_operand.vmem [shape: f32[1,640], index: 0, kind: input, shape index: {}]
  %s1 = inlined_call_operand.vmem [shape: f32[10,1,128], index: 1, kind: input, shape index: {}]
  %s2 = inlined_call_operand.hbm [shape: bf16[384,256], index: 2, kind: input, shape index: {}]
  %s3 = inlined_call_operand.hbm [shape: bf16[4,256,256], index: 3, kind: input, shape index: {}]
  %s4 = inlined_call_operand.hbm [shape: f32[5,1,256], index: 4, kind: input, shape index: {}]
  %s5 = inlined_call_operand.hbm [shape: bf16[2,256,512], index: 5, kind: input, shape index: {}]
  %s6 = inlined_call_operand.hbm [shape: bf16[9,128,512], index: 6, kind: input, shape index: {}]
  %s7 = inlined_call_operand.hbm [shape: f32[5,1,512], index: 7, kind: input, shape index: {}]
  %s8 = inlined_call_operand.vmem [shape: f32[10,1,128], index: 8, kind: output, shape index: {}]
  %s9 = sld [smem:[#allocation0]]
  $region66: #{rubiks_forward.1} parent=0
    _
  %s11 = ssub.s32 1, %s9
  %s12 = scalar_select 0, %s11, %s9
  $region1: #{rubiks_forward.1} parent=0
    #allocation2 [shape = 'u8[196608]{0}', space=vmem, size = 0x30000, scoped, tag = 'input window, operand 2, single buffered']
    #allocation3 [shape = 's32[1]{0}', space=sflag, size = 0x4, scoped, tag = 'scoped memory for rubiks_forward.1']
    #allocation4 [shape = 'u8[524288]{0}', space=vmem, size = 0x80000, scoped, tag = 'input window, operand 3, single buffered']
    #allocation5 [shape = 's32[1]{0}', space=sflag, size = 0x4, scoped, tag = 'scoped memory for rubiks_forward.1']
    #allocation6 [shape = 'u8[5120]{0}', space=vmem, size = 0x1400, scoped, tag = 'input window, operand 4, single buffered']
    #allocation7 [shape = 'u8[524288]{0}', space=vmem, size = 0x80000, scoped, tag = 'input window, operand 5, single buffered']
    #allocation8 [shape = 's32[1]{0}', space=sflag, size = 0x4, scoped, tag = 'scoped memory for rubiks_forward.1']
    #allocation9 [shape = 'u8[1179648]{0}', space=vmem, size = 0x120000, scoped, tag = 'input window, operand 6, single buffered']
    #allocation10 [shape = 'u8[10240]{0}', space=vmem, size = 0x2800, scoped, tag = 'input window, operand 7, single buffered']
    #allocation11 [shape = 's32[1]{0}', space=sflag, size = 0x4, scoped, tag = 'scoped memory for rubiks_forward.1']
    %13 = vsyncpa [#allocation3], 0
    %14 = vsyncpa [#allocation5], 0
    %15 = vsyncpa [#allocation8], 0
    %16 = vsyncpa [#allocation11], 0
    // Predicated region
    $region2: #{rubiks_forward.1} parent=1 // pred_check
      _
    $region3: #{rubiks_forward.1} parent=1 // pred_check_branch
      %18 = sbr.rel (0) target = $region5
    $region4: #{rubiks_forward.1} parent=1 // pred_region
      _
    $region5: #{rubiks_forward.1} parent=1 // pred_fallthru
      _
    // Predicated region
    $region6: #{rubiks_forward.1} parent=1 // pred_check
      _
    $region7: #{rubiks_forward.1} parent=1 // pred_check_branch
      %20 = sbr.rel (0) target = $region9
    $region8: #{rubiks_forward.1} parent=1 // pred_region
      _
    $region9: #{rubiks_forward.1} parent=1 // pred_fallthru
      _
    // Predicated region
    $region10: #{rubiks_forward.1} parent=1 // pred_check
      _
    $region11: #{rubiks_forward.1} parent=1 // pred_check_branch
      %22 = sbr.rel (0) target = $region13
    $region12: #{rubiks_forward.1} parent=1 // pred_region
      %s24 = ssub.s32 6144, 6144
      %25 = vsyncadd [#allocation3], %s24
      %s26 = sshll.u32 [#allocation2], 4
      %s27 = int_to_ptr.vmem [resolvable:$true] %s26
      %32 = dma.hbm_to_vmem [thread:$0]  %s2, 6144, %s27, [#allocation3], 128, 128, 8
    $region13: #{rubiks_forward.1} parent=1 // pred_fallthru
      _
    // Predicated region
    $region14: #{rubiks_forward.1} parent=1 // pred_check
      _
    $region15: #{rubiks_forward.1} parent=1 // pred_check_branch
      %34 = sbr.rel (0) target = $region17
    $region16: #{rubiks_forward.1} parent=1 // pred_region
      %s36 = ssub.s32 16384, 16384
      %37 = vsyncadd [#allocation5], %s36
      %s38 = sshll.u32 [#allocation4], 4
      %s39 = int_to_ptr.vmem [resolvable:$true] %s38
      %44 = dma.hbm_to_vmem [thread:$0]  %s3, 16384, %s39, [#allocation5], 128, 128, 8
    $region17: #{rubiks_forward.1} parent=1 // pred_fallthru
      _
    // Predicated region
    $region18: #{rubiks_forward.1} parent=1 // pred_check
      _
    $region19: #{rubiks_forward.1} parent=1 // pred_check_branch
      %46 = sbr.rel (0) target = $region21
    $region20: #{rubiks_forward.1} parent=1 // pred_region
      %s48 = ssub.s32 160, 160
      %49 = vsyncadd [#allocation5], %s48
      %s50 = sshll.u32 [#allocation6], 4
      %s51 = int_to_ptr.vmem [resolvable:$true] %s50
      %56 = dma.hbm_to_vmem [thread:$0]  %s4, 160, %s51, [#allocation5], 32, 32, 2
    $region21: #{rubiks_forward.1} parent=1 // pred_fallthru
      _
    // Predicated region
    $region22: #{rubiks_forward.1} parent=1 // pred_check
      _
    $region23: #{rubiks_forward.1} parent=1 // pred_check_branch
      %58 = sbr.rel (0) target = $region25
    $region24: #{rubiks_forward.1} parent=1 // pred_region
      %s60 = ssub.s32 16384, 16384
      %61 = vsyncadd [#allocation8], %s60
      %s62 = sshll.u32 [#allocation7], 4
      %s63 = int_to_ptr.vmem [resolvable:$true] %s62
      %68 = dma.hbm_to_vmem [thread:$0]  %s5, 16384, %s63, [#allocation8], 256, 256, 16
    $region25: #{rubiks_forward.1} parent=1 // pred_fallthru
      _
    // Predicated region
    $region26: #{rubiks_forward.1} parent=1 // pred_check
      _
    $region27: #{rubiks_forward.1} parent=1 // pred_check_branch
      %70 = sbr.rel (0) target = $region29
    $region28: #{rubiks_forward.1} parent=1 // pred_region
      %s72 = ssub.s32 36864, 36864
      %73 = vsyncadd [#allocation8], %s72
      %s74 = sshll.u32 [#allocation9], 4
      %s75 = int_to_ptr.vmem [resolvable:$true] %s74
      %80 = dma.hbm_to_vmem [thread:$0]  %s6, 36864, %s75, [#allocation8], 256, 256, 16
    $region29: #{rubiks_forward.1} parent=1 // pred_fallthru
      _
    // Predicated region
    $region30: #{rubiks_forward.1} parent=1 // pred_check
      _
    $region31: #{rubiks_forward.1} parent=1 // pred_check_branch
      %82 = sbr.rel (0) target = $region33
    $region32: #{rubiks_forward.1} parent=1 // pred_region
      %s84 = ssub.s32 320, 320
      %85 = vsyncadd [#allocation11], %s84
      %s86 = sshll.u32 [#allocation10], 4
      %s87 = int_to_ptr.vmem [resolvable:$true] %s86
      %92 = dma.hbm_to_vmem [thread:$0]  %s7, 320, %s87, [#allocation11], 64, 64, 4
    $region33: #{rubiks_forward.1} parent=1 // pred_fallthru
      _
    // Predicated region
    $region34: #{rubiks_forward.1} parent=1 // pred_check
      _
    $region35: #{rubiks_forward.1} parent=1 // pred_check_branch
      %94 = sbr.rel (0) target = $region37
    $region36: #{rubiks_forward.1} parent=1 // pred_region
      %95 = dma.done [#allocation3], 6144
    $region37: #{rubiks_forward.1} parent=1 // pred_fallthru
      _
    // Predicated region
    $region38: #{rubiks_forward.1} parent=1 // pred_check
      _
    $region39: #{rubiks_forward.1} parent=1 // pred_check_branch
      %97 = sbr.rel (0) target = $region41
    $region40: #{rubiks_forward.1} parent=1 // pred_region
      %98 = dma.done [#allocation5], 16384
    $region41: #{rubiks_forward.1} parent=1 // pred_fallthru
      _
    // Predicated region
    $region42: #{rubiks_forward.1} parent=1 // pred_check
      _
    $region43: #{rubiks_forward.1} parent=1 // pred_check_branch
      %100 = sbr.rel (0) target = $region45
    $region44: #{rubiks_forward.1} parent=1 // pred_region
      %101 = dma.done [#allocation5], 160
    $region45: #{rubiks_forward.1} parent=1 // pred_fallthru
      _
    // Predicated region
    $region46: #{rubiks_forward.1} parent=1 // pred_check
      _
    $region47: #{rubiks_forward.1} parent=1 // pred_check_branch
      %103 = sbr.rel (0) target = $region49
    $region48: #{rubiks_forward.1} parent=1 // pred_region
      %104 = dma.done [#allocation8], 16384
    $region49: #{rubiks_forward.1} parent=1 // pred_fallthru
      _
    // Predicated region
    $region50: #{rubiks_forward.1} parent=1 // pred_check
      _
    $region51: #{rubiks_forward.1} parent=1 // pred_check_branch
      %106 = sbr.rel (0) target = $region53
    $region52: #{rubiks_forward.1} parent=1 // pred_region
      %107 = dma.done [#allocation8], 36864
    $region53: #{rubiks_forward.1} parent=1 // pred_fallthru
      _
    // Predicated region
    $region54: #{rubiks_forward.1} parent=1 // pred_check
      _
    $region55: #{rubiks_forward.1} parent=1 // pred_check_branch
      %109 = sbr.rel (0) target = $region57
    $region56: #{rubiks_forward.1} parent=1 // pred_region
      %110 = dma.done [#allocation11], 320
    $region57: #{rubiks_forward.1} parent=1 // pred_fallthru
      _
    %v112 = vld [vmem:[%s0] sm:$0x1f]
    %v113 = vld [vmem:[#allocation2] sm:$0xff]
    %v114 = vld [vmem:[#allocation2 + $0x8] sm:$0xff]
    %v115 = vld [vmem:[#allocation2 + $0x10] sm:$0xff]
    %v116 = vld [vmem:[#allocation2 + $0x18] sm:$0xff]
    %v117 = vld [vmem:[#allocation2 + $0x20] sm:$0xff]
    %v118 = vld [vmem:[#allocation2 + $0x28] sm:$0xff]
    %v119 = vld [vmem:[#allocation2 + $0x30] sm:$0xff]
    %v120 = vld [vmem:[#allocation2 + $0x38] sm:$0xff]
    %v121 = vld [vmem:[#allocation2 + $0x40] sm:$0xff]
    %v122 = vld [vmem:[#allocation2 + $0x48] sm:$0xff]
    %v123 = vld [vmem:[#allocation2 + $0x50] sm:$0xff]
    %v124 = vld [vmem:[#allocation2 + $0x58] sm:$0xff]
    %v125 = vld [vmem:[#allocation2 + $0x60] sm:$0xff]
    %v126 = vld [vmem:[#allocation2 + $0x68] sm:$0xff]
    %v127 = vld [vmem:[#allocation2 + $0x70] sm:$0xff]
    %v128 = vld [vmem:[#allocation2 + $0x78] sm:$0xff]
    %v129 = vld [vmem:[#allocation2 + $0x80] sm:$0xff]
    %v130 = vld [vmem:[#allocation2 + $0x88] sm:$0xff]
    %v131 = vld [vmem:[#allocation2 + $0x90] sm:$0xff]
    %v132 = vld [vmem:[#allocation2 + $0x98] sm:$0xff]
    %v133 = vld [vmem:[#allocation2 + $0xa0] sm:$0xff]
    %v134 = vld [vmem:[#allocation2 + $0xa8] sm:$0xff]
    %v135 = vld [vmem:[#allocation2 + $0xb0] sm:$0xff]
    %v136 = vld [vmem:[#allocation2 + $0xb8] sm:$0xff]
    %v137 = vld [vmem:[#allocation2 + $0xc0] sm:$0xff]
    %v138 = vld [vmem:[#allocation2 + $0xc8] sm:$0xff]
    %v139 = vld [vmem:[#allocation2 + $0xd0] sm:$0xff]
    %v140 = vld [vmem:[#allocation2 + $0xd8] sm:$0xff]
    %v141 = vld [vmem:[#allocation2 + $0xe0] sm:$0xff]
    %v142 = vld [vmem:[#allocation2 + $0xe8] sm:$0xff]
    %v143 = vld [vmem:[#allocation2 + $0xf0] sm:$0xff]
    %v144 = vld [vmem:[#allocation2 + $0xf8] sm:$0xff]
    %v145 = vld [vmem:[#allocation2 + $0x100] sm:$0xff]
    %v146 = vld [vmem:[#allocation2 + $0x108] sm:$0xff]
    %v147 = vld [vmem:[#allocation2 + $0x110] sm:$0xff]
    %v148 = vld [vmem:[#allocation2 + $0x118] sm:$0xff]
    %v149 = vld [vmem:[#allocation2 + $0x120] sm:$0xff]
    %v150 = vld [vmem:[#allocation2 + $0x128] sm:$0xff]
    %v151 = vld [vmem:[#allocation2 + $0x130] sm:$0xff]
    %v152 = vld [vmem:[#allocation2 + $0x138] sm:$0xff]
    %v153 = vld [vmem:[#allocation2 + $0x140] sm:$0xff]
    %v154 = vld [vmem:[#allocation2 + $0x148] sm:$0xff]
    %v155 = vld [vmem:[#allocation2 + $0x150] sm:$0xff]
    %v156 = vld [vmem:[#allocation2 + $0x158] sm:$0xff]
    %v157 = vld [vmem:[#allocation2 + $0x160] sm:$0xff]
    %v158 = vld [vmem:[#allocation2 + $0x168] sm:$0xff]
    %v159 = vld [vmem:[#allocation2 + $0x170] sm:$0xff]
    %v160 = vld [vmem:[#allocation2 + $0x178] sm:$0xff]
    %v161 = vld [vmem:[#allocation6] sm:$0x3]
    %v163 = vlaneseq
    %v164 = vshrl.u32 %v163, 7
    %v165 = vsub.s32 0, %v164
    %v166 = vrot.slane %v112, %v165
    %v167 = vlaneseq
    %v168 = vshrl.u32 %v167, 7
    %v169 = vsub.s32 1, %v168
    %v170 = vrot.slane %v112, %v169
    %v171 = vlaneseq
    %v172 = vshrl.u32 %v171, 7
    %v173 = vsub.s32 2, %v172
    %v174 = vrot.slane %v112, %v173
    %v178 = vpack.c.bf16 %v166, %v166
    %v179 = vpack.c.bf16 %v170, %v170
    %v180 = vpack.c.bf16 %v174, %v174
    %v229 = vunpack.c.l.b16 %v113
    %v230 = vunpack.c.h.b16 %v113
    %v231 = vunpack.c.l.b16 %v114
    %v232 = vunpack.c.h.b16 %v114
    %v233 = vunpack.c.l.b16 %v115
    %v234 = vunpack.c.h.b16 %v115
    %v235 = vunpack.c.l.b16 %v116
    %v236 = vunpack.c.h.b16 %v116
    %v237 = vunpack.c.l.b16 %v117
    %v238 = vunpack.c.h.b16 %v117
    %v239 = vunpack.c.l.b16 %v118
    %v240 = vunpack.c.h.b16 %v118
    %v241 = vunpack.c.l.b16 %v119
    %v242 = vunpack.c.h.b16 %v119
    %v243 = vunpack.c.l.b16 %v120
    %v244 = vunpack.c.h.b16 %v120
    %v245 = vunpack.c.l.b16 %v121
    %v246 = vunpack.c.h.b16 %v121
    %v247 = vunpack.c.l.b16 %v122
    %v248 = vunpack.c.h.b16 %v122
    %v249 = vunpack.c.l.b16 %v123
    %v250 = vunpack.c.h.b16 %v123
    %v251 = vunpack.c.l.b16 %v124
    %v252 = vunpack.c.h.b16 %v124
    %v253 = vunpack.c.l.b16 %v125
    %v254 = vunpack.c.h.b16 %v125
    %v255 = vunpack.c.l.b16 %v126
    %v256 = vunpack.c.h.b16 %v126
    %v257 = vunpack.c.l.b16 %v127
    %v258 = vunpack.c.h.b16 %v127
    %v259 = vunpack.c.l.b16 %v128
    %v260 = vunpack.c.h.b16 %v128
    %v261 = vunpack.c.l.b16 %v129
    %v262 = vunpack.c.h.b16 %v129
    %v263 = vunpack.c.l.b16 %v130
    %v264 = vunpack.c.h.b16 %v130
    %v265 = vunpack.c.l.b16 %v131
    %v266 = vunpack.c.h.b16 %v131
    %v267 = vunpack.c.l.b16 %v132
    %v268 = vunpack.c.h.b16 %v132
    %v269 = vunpack.c.l.b16 %v133
    %v270 = vunpack.c.h.b16 %v133
    %v271 = vunpack.c.l.b16 %v134
    %v272 = vunpack.c.h.b16 %v134
    %v273 = vunpack.c.l.b16 %v135
    %v274 = vunpack.c.h.b16 %v135
    %v275 = vunpack.c.l.b16 %v136
    %v276 = vunpack.c.h.b16 %v136
    %v277 = vunpack.c.l.b16 %v137
    %v278 = vunpack.c.h.b16 %v137
    %v279 = vunpack.c.l.b16 %v138
    %v280 = vunpack.c.h.b16 %v138
    %v281 = vunpack.c.l.b16 %v139
    %v282 = vunpack.c.h.b16 %v139
    %v283 = vunpack.c.l.b16 %v140
    %v284 = vunpack.c.h.b16 %v140
    %v285 = vunpack.c.l.b16 %v141
    %v286 = vunpack.c.h.b16 %v141
    %v287 = vunpack.c.l.b16 %v142
    %v288 = vunpack.c.h.b16 %v142
    %v289 = vunpack.c.l.b16 %v143
    %v290 = vunpack.c.h.b16 %v143
    %v291 = vunpack.c.l.b16 %v144
    %v292 = vunpack.c.h.b16 %v144
    %v293 = vunpack.c.l.b16 %v145
    %v294 = vunpack.c.h.b16 %v145
    %v295 = vunpack.c.l.b16 %v146
    %v296 = vunpack.c.h.b16 %v146
    %v297 = vunpack.c.l.b16 %v147
    %v298 = vunpack.c.h.b16 %v147
    %v299 = vunpack.c.l.b16 %v148
    %v300 = vunpack.c.h.b16 %v148
    %v301 = vunpack.c.l.b16 %v149
    %v302 = vunpack.c.h.b16 %v149
    %v303 = vunpack.c.l.b16 %v150
    %v304 = vunpack.c.h.b16 %v150
    %v305 = vunpack.c.l.b16 %v151
    %v306 = vunpack.c.h.b16 %v151
    %v307 = vunpack.c.l.b16 %v152
    %v308 = vunpack.c.h.b16 %v152
    %v309 = vunpack.c.l.b16 %v153
    %v310 = vunpack.c.h.b16 %v153
    %v311 = vunpack.c.l.b16 %v154
    %v312 = vunpack.c.h.b16 %v154
    %v313 = vunpack.c.l.b16 %v155
    %v314 = vunpack.c.h.b16 %v155
    %v315 = vunpack.c.l.b16 %v156
    %v316 = vunpack.c.h.b16 %v156
    %v317 = vunpack.c.l.b16 %v157
    %v318 = vunpack.c.h.b16 %v157
    %v319 = vunpack.c.l.b16 %v158
    %v320 = vunpack.c.h.b16 %v158
    %v321 = vunpack.c.l.b16 %v159
    %v322 = vunpack.c.h.b16 %v159
    %v323 = vunpack.c.l.b16 %v160
    %v324 = vunpack.c.h.b16 %v160
    %v325 = vpack.c.b16 %v231, %v229
    %v326 = vpack.c.b16 %v232, %v230
    %v327 = vpack.c.b16 %v235, %v233
    %v328 = vpack.c.b16 %v236, %v234
    %v329 = vpack.c.b16 %v239, %v237
    %v330 = vpack.c.b16 %v240, %v238
    %v331 = vpack.c.b16 %v243, %v241
    %v332 = vpack.c.b16 %v244, %v242
    %v333 = vpack.c.b16 %v247, %v245
    %v334 = vpack.c.b16 %v248, %v246
    %v335 = vpack.c.b16 %v251, %v249
    %v336 = vpack.c.b16 %v252, %v250
    %v337 = vpack.c.b16 %v255, %v253
    %v338 = vpack.c.b16 %v256, %v254
    %v339 = vpack.c.b16 %v259, %v257
    %v340 = vpack.c.b16 %v260, %v258
    %v341 = vpack.c.b16 %v263, %v261
    %v342 = vpack.c.b16 %v264, %v262
    %v343 = vpack.c.b16 %v267, %v265
    %v344 = vpack.c.b16 %v268, %v266
    %v345 = vpack.c.b16 %v271, %v269
    %v346 = vpack.c.b16 %v272, %v270
    %v347 = vpack.c.b16 %v275, %v273
    %v348 = vpack.c.b16 %v276, %v274
    %v349 = vpack.c.b16 %v279, %v277
    %v350 = vpack.c.b16 %v280, %v278
    %v351 = vpack.c.b16 %v283, %v281
    %v352 = vpack.c.b16 %v284, %v282
    %v353 = vpack.c.b16 %v287, %v285
    %v354 = vpack.c.b16 %v288, %v286
    %v355 = vpack.c.b16 %v291, %v289
    %v356 = vpack.c.b16 %v292, %v290
    %v357 = vpack.c.b16 %v295, %v293
    %v358 = vpack.c.b16 %v296, %v294
    %v359 = vpack.c.b16 %v299, %v297
    %v360 = vpack.c.b16 %v300, %v298
    %v361 = vpack.c.b16 %v303, %v301
    %v362 = vpack.c.b16 %v304, %v302
    %v363 = vpack.c.b16 %v307, %v305
    %v364 = vpack.c.b16 %v308, %v306
    %v365 = vpack.c.b16 %v311, %v309
    %v366 = vpack.c.b16 %v312, %v310
    %v367 = vpack.c.b16 %v315, %v313
    %v368 = vpack.c.b16 %v316, %v314
    %v369 = vpack.c.b16 %v319, %v317
    %v370 = vpack.c.b16 %v320, %v318
    %v371 = vpack.c.b16 %v323, %v321
    %v372 = vpack.c.b16 %v324, %v322
    %v422 = vlaneseq
    %v423 = vshrl.u32 %v422, 7
    %v424 = vsub.s32 0, %v423
    %v425 = vrot.slane %v161, %v424
    %v426 = vlaneseq
    %v427 = vshrl.u32 %v426, 7
    %v428 = vsub.s32 1, %v427
    %v429 = vrot.slane %v161, %v428
    %432 = vmatprep.subr.bf16.mxu0 %v340
    %433 = vmatpush1.bf16.msra.mxu0 %v339
    %434 = vmatprep.subr.bf16.mxu0 %v338
    %435 = vmatpush1.bf16.msra.mxu0 %v337
    %436 = vmatprep.subr.bf16.mxu0 %v336
    %437 = vmatpush1.bf16.msra.mxu0 %v335
    %438 = vmatprep.subr.bf16.mxu0 %v334
    %439 = vmatpush1.bf16.msra.mxu0 %v333
    %440 = vmatprep.subr.bf16.mxu0 %v332
    %441 = vmatpush1.bf16.msra.mxu0 %v331
    %442 = vmatprep.subr.bf16.mxu0 %v330
    %443 = vmatpush1.bf16.msra.mxu0 %v329
    %444 = vmatprep.subr.bf16.mxu0 %v328
    %445 = vmatpush1.bf16.msra.mxu0 %v327
    %446 = vmatprep.subr.bf16.mxu0 %v326
    %447 = vmatpush1.bf16.msra.mxu0 %v325
    %448 = vmatprep.subr.bf16.mxu0 %v356
    %449 = vmatpush2.bf16.msra.mxu0 %v355
    %450 = vmatprep.subr.bf16.mxu0 %v354
    %451 = vmatpush2.bf16.msra.mxu0 %v353
    %452 = vmatprep.subr.bf16.mxu0 %v352
    %453 = vmatpush2.bf16.msra.mxu0 %v351
    %454 = vmatprep.subr.bf16.mxu0 %v350
    %455 = vmatpush2.bf16.msra.mxu0 %v349
    %456 = vmatprep.subr.bf16.mxu0 %v348
    %457 = vmatpush2.bf16.msra.mxu0 %v347
    %458 = vmatprep.subr.bf16.mxu0 %v346
    %459 = vmatpush2.bf16.msra.mxu0 %v345
    %460 = vmatprep.subr.bf16.mxu0 %v344
    %461 = vmatpush2.bf16.msra.mxu0 %v343
    %462 = vmatprep.subr.bf16.mxu0 %v342
    %463 = vmatpush2.bf16.msra.mxu0 %v341
    %464 = vmatprep.mubr.bf16.mxu0 %v179
    %465 = vmatmul.mubr.bf16.gmra.mxu0 %v178
    %v466 = vpop.f32.mrf.mxu0
    %v467 = vadd.f32 %v425, %v466
    %v468 = vpop.f32.mrf.mxu0
    %v469 = vadd.f32 %v429, %v468
    %v470 = vpop.f32.mrf.mxu0
    %v471 = vpop.f32.mrf.mxu0
    %472 = vdwg.mxu0
    %473 = vmatprep.subr.bf16.mxu0 %v372
    %474 = vmatpush1.bf16.msra.mxu0 %v371
    %475 = vmatprep.subr.bf16.mxu0 %v370
    %476 = vmatpush1.bf16.msra.mxu0 %v369
    %477 = vmatprep.subr.bf16.mxu0 %v368
    %478 = vmatpush1.bf16.msra.mxu0 %v367
    %479 = vmatprep.subr.bf16.mxu0 %v366
    %480 = vmatpush1.bf16.msra.mxu0 %v365
    %481 = vmatprep.subr.bf16.mxu0 %v364
    %482 = vmatpush1.bf16.msra.mxu0 %v363
    %483 = vmatprep.subr.bf16.mxu0 %v362
    %484 = vmatpush1.bf16.msra.mxu0 %v361
    %485 = vmatprep.subr.bf16.mxu0 %v360
    %486 = vmatpush1.bf16.msra.mxu0 %v359
    %487 = vmatprep.subr.bf16.mxu0 %v358
    %488 = vmatpush1.bf16.msra.mxu0 %v357
    %489 = vmatprep.subr.bf16.mxu0 0
    %490 = vmatpush2.bf16.msra.mxu0 0
    %491 = vmatprep.subr.bf16.mxu0 0
    %492 = vmatpush2.bf16.msra.mxu0 0
    %493 = vmatprep.subr.bf16.mxu0 0
    %494 = vmatpush2.bf16.msra.mxu0 0
    %495 = vmatprep.subr.bf16.mxu0 0
    %496 = vmatpush2.bf16.msra.mxu0 0
    %497 = vmatprep.subr.bf16.mxu0 0
    %498 = vmatpush2.bf16.msra.mxu0 0
    %499 = vmatprep.subr.bf16.mxu0 0
    %500 = vmatpush2.bf16.msra.mxu0 0
    %501 = vmatprep.subr.bf16.mxu0 0
    %502 = vmatpush2.bf16.msra.mxu0 0
    %503 = vmatprep.subr.bf16.mxu0 0
    %504 = vmatpush2.bf16.msra.mxu0 0
    %505 = vmatprep.mubr.bf16.mxu0 0
    %506 = vmatmul.mubr.bf16.gmra.mxu0 %v180
    %v507 = vpop.f32.mrf.mxu0
    %v508 = vadd.f32 %v467, %v507
    %v509 = vpop.f32.mrf.mxu0
    %v510 = vadd.f32 %v469, %v509
    %v511 = vpop.f32.mrf.mxu0
    %v512 = vpop.f32.mrf.mxu0
    %513 = vdwg.mxu0
    %v514 = vmax.f32 %v508, 0.0
    %v515 = vmax.f32 %v510, 0.0
    %v516 = vld [vmem:[#allocation4] sm:$0xff]
    %v517 = vld [vmem:[#allocation4 + $0x8] sm:$0xff]
    %v518 = vld [vmem:[#allocation4 + $0x10] sm:$0xff]
    %v519 = vld [vmem:[#allocation4 + $0x18] sm:$0xff]
    %v520 = vld [vmem:[#allocation4 + $0x20] sm:$0xff]
    %v521 = vld [vmem:[#allocation4 + $0x28] sm:$0xff]
    %v522 = vld [vmem:[#allocation4 + $0x30] sm:$0xff]
    %v523 = vld [vmem:[#allocation4 + $0x38] sm:$0xff]
    %v524 = vld [vmem:[#allocation4 + $0x40] sm:$0xff]
    %v525 = vld [vmem:[#allocation4 + $0x48] sm:$0xff]
    %v526 = vld [vmem:[#allocation4 + $0x50] sm:$0xff]
    %v527 = vld [vmem:[#allocation4 + $0x58] sm:$0xff]
    %v528 = vld [vmem:[#allocation4 + $0x60] sm:$0xff]
    %v529 = vld [vmem:[#allocation4 + $0x68] sm:$0xff]
    %v530 = vld [vmem:[#allocation4 + $0x70] sm:$0xff]
    %v531 = vld [vmem:[#allocation4 + $0x78] sm:$0xff]
    %v532 = vld [vmem:[#allocation4 + $0x80] sm:$0xff]
    %v533 = vld [vmem:[#allocation4 + $0x88] sm:$0xff]
    %v534 = vld [vmem:[#allocation4 + $0x90] sm:$0xff]
    %v535 = vld [vmem:[#allocation4 + $0x98] sm:$0xff]
    %v536 = vld [vmem:[#allocation4 + $0xa0] sm:$0xff]
    %v537 = vld [vmem:[#allocation4 + $0xa8] sm:$0xff]
    %v538 = vld [vmem:[#allocation4 + $0xb0] sm:$0xff]
    %v539 = vld [vmem:[#allocation4 + $0xb8] sm:$0xff]
    %v540 = vld [vmem:[#allocation4 + $0xc0] sm:$0xff]
    %v541 = vld [vmem:[#allocation4 + $0xc8] sm:$0xff]
    %v542 = vld [vmem:[#allocation4 + $0xd0] sm:$0xff]
    %v543 = vld [vmem:[#allocation4 + $0xd8] sm:$0xff]
    %v544 = vld [vmem:[#allocation4 + $0xe0] sm:$0xff]
    %v545 = vld [vmem:[#allocation4 + $0xe8] sm:$0xff]
    %v546 = vld [vmem:[#allocation4 + $0xf0] sm:$0xff]
    %v547 = vld [vmem:[#allocation4 + $0xf8] sm:$0xff]
    %s548 = scalar_lea.vmem [#allocation6], 2
    %v549 = vld [vmem:[%s548] sm:$0x3]
    %v550 = vpack.c.bf16 %v514, %v514
    %v551 = vpack.c.bf16 %v515, %v515
    %v584 = vunpack.c.l.b16 %v516
    %v585 = vunpack.c.h.b16 %v516
    %v586 = vunpack.c.l.b16 %v517
    %v587 = vunpack.c.h.b16 %v517
    %v588 = vunpack.c.l.b16 %v518
    %v589 = vunpack.c.h.b16 %v518
    %v590 = vunpack.c.l.b16 %v519
    %v591 = vunpack.c.h.b16 %v519
    %v592 = vunpack.c.l.b16 %v520
    %v593 = vunpack.c.h.b16 %v520
    %v594 = vunpack.c.l.b16 %v521
    %v595 = vunpack.c.h.b16 %v521
    %v596 = vunpack.c.l.b16 %v522
    %v597 = vunpack.c.h.b16 %v522
    %v598 = vunpack.c.l.b16 %v523
    %v599 = vunpack.c.h.b16 %v523
    %v600 = vunpack.c.l.b16 %v524
    %v601 = vunpack.c.h.b16 %v524
    %v602 = vunpack.c.l.b16 %v525
    %v603 = vunpack.c.h.b16 %v525
    %v604 = vunpack.c.l.b16 %v526
    %v605 = vunpack.c.h.b16 %v526
    %v606 = vunpack.c.l.b16 %v527
    %v607 = vunpack.c.h.b16 %v527
    %v608 = vunpack.c.l.b16 %v528
    %v609 = vunpack.c.h.b16 %v528
    %v610 = vunpack.c.l.b16 %v529
    %v611 = vunpack.c.h.b16 %v529
    %v612 = vunpack.c.l.b16 %v530
    %v613 = vunpack.c.h.b16 %v530
    %v614 = vunpack.c.l.b16 %v531
    %v615 = vunpack.c.h.b16 %v531
    %v616 = vunpack.c.l.b16 %v532
    %v617 = vunpack.c.h.b16 %v532
    %v618 = vunpack.c.l.b16 %v533
    %v619 = vunpack.c.h.b16 %v533
    %v620 = vunpack.c.l.b16 %v534
    %v621 = vunpack.c.h.b16 %v534
    %v622 = vunpack.c.l.b16 %v535
    %v623 = vunpack.c.h.b16 %v535
    %v624 = vunpack.c.l.b16 %v536
    %v625 = vunpack.c.h.b16 %v536
    %v626 = vunpack.c.l.b16 %v537
    %v627 = vunpack.c.h.b16 %v537
    %v628 = vunpack.c.l.b16 %v538
    %v629 = vunpack.c.h.b16 %v538
    %v630 = vunpack.c.l.b16 %v539
    %v631 = vunpack.c.h.b16 %v539
    %v632 = vunpack.c.l.b16 %v540
    %v633 = vunpack.c.h.b16 %v540
    %v634 = vunpack.c.l.b16 %v541
    %v635 = vunpack.c.h.b16 %v541
    %v636 = vunpack.c.l.b16 %v542
    %v637 = vunpack.c.h.b16 %v542
    %v638 = vunpack.c.l.b16 %v543
    %v639 = vunpack.c.h.b16 %v543
    %v640 = vunpack.c.l.b16 %v544
    %v641 = vunpack.c.h.b16 %v544
    %v642 = vunpack.c.l.b16 %v545
    %v643 = vunpack.c.h.b16 %v545
    %v644 = vunpack.c.l.b16 %v546
    %v645 = vunpack.c.h.b16 %v546
    %v646 = vunpack.c.l.b16 %v547
    %v647 = vunpack.c.h.b16 %v547
    %v648 = vpack.c.b16 %v586, %v584
    %v649 = vpack.c.b16 %v587, %v585
    %v650 = vpack.c.b16 %v590, %v588
    %v651 = vpack.c.b16 %v591, %v589
    %v652 = vpack.c.b16 %v594, %v592
    %v653 = vpack.c.b16 %v595, %v593
    %v654 = vpack.c.b16 %v598, %v596
    %v655 = vpack.c.b16 %v599, %v597
    %v656 = vpack.c.b16 %v602, %v600
    %v657 = vpack.c.b16 %v603, %v601
    %v658 = vpack.c.b16 %v606, %v604
    %v659 = vpack.c.b16 %v607, %v605
    %v660 = vpack.c.b16 %v610, %v608
    %v661 = vpack.c.b16 %v611, %v609
    %v662 = vpack.c.b16 %v614, %v612
    %v663 = vpack.c.b16 %v615, %v613
    %v664 = vpack.c.b16 %v618, %v616
    %v665 = vpack.c.b16 %v619, %v617
    %v666 = vpack.c.b16 %v622, %v620
    %v667 = vpack.c.b16 %v623, %v621
    %v668 = vpack.c.b16 %v626, %v624
    %v669 = vpack.c.b16 %v627, %v625
    %v670 = vpack.c.b16 %v630, %v628
    %v671 = vpack.c.b16 %v631, %v629
    %v672 = vpack.c.b16 %v634, %v632
    %v673 = vpack.c.b16 %v635, %v633
    %v674 = vpack.c.b16 %v638, %v636
    %v675 = vpack.c.b16 %v639, %v637
    %v676 = vpack.c.b16 %v642, %v640
    %v677 = vpack.c.b16 %v643, %v641
    %v678 = vpack.c.b16 %v646, %v644
    %v679 = vpack.c.b16 %v647, %v645
    %v713 = vlaneseq
    %v714 = vshrl.u32 %v713, 7
    %v715 = vsub.s32 0, %v714
    %v716 = vrot.slane %v549, %v715
    %v717 = vlaneseq
    %v718 = vshrl.u32 %v717, 7
    %v719 = vsub.s32 1, %v718
    %v720 = vrot.slane %v549, %v719
    %723 = vmatprep.subr.bf16.mxu0 %v663
    %724 = vmatpush1.bf16.msra.mxu0 %v662
    %725 = vmatprep.subr.bf16.mxu0 %v661
    %726 = vmatpush1.bf16.msra.mxu0 %v660
    %727 = vmatprep.subr.bf16.mxu0 %v659
    %728 = vmatpush1.bf16.msra.mxu0 %v658
    %729 = vmatprep.subr.bf16.mxu0 %v657
    %730 = vmatpush1.bf16.msra.mxu0 %v656
    %731 = vmatprep.subr.bf16.mxu0 %v655
    %732 = vmatpush1.bf16.msra.mxu0 %v654
    %733 = vmatprep.subr.bf16.mxu0 %v653
    %734 = vmatpush1.bf16.msra.mxu0 %v652
    %735 = vmatprep.subr.bf16.mxu0 %v651
    %736 = vmatpush1.bf16.msra.mxu0 %v650
    %737 = vmatprep.subr.bf16.mxu0 %v649
    %738 = vmatpush1.bf16.msra.mxu0 %v648
    %739 = vmatprep.subr.bf16.mxu0 %v679
    %740 = vmatpush2.bf16.msra.mxu0 %v678
    %741 = vmatprep.subr.bf16.mxu0 %v677
    %742 = vmatpush2.bf16.msra.mxu0 %v676
    %743 = vmatprep.subr.bf16.mxu0 %v675
    %744 = vmatpush2.bf16.msra.mxu0 %v674
    %745 = vmatprep.subr.bf16.mxu0 %v673
    %746 = vmatpush2.bf16.msra.mxu0 %v672
    %747 = vmatprep.subr.bf16.mxu0 %v671
    %748 = vmatpush2.bf16.msra.mxu0 %v670
    %749 = vmatprep.subr.bf16.mxu0 %v669
    %750 = vmatpush2.bf16.msra.mxu0 %v668
    %751 = vmatprep.subr.bf16.mxu0 %v667
    %752 = vmatpush2.bf16.msra.mxu0 %v666
    %753 = vmatprep.subr.bf16.mxu0 %v665
    %754 = vmatpush2.bf16.msra.mxu0 %v664
    %755 = vmatprep.mubr.bf16.mxu0 %v551
    %756 = vmatmul.mubr.bf16.gmra.mxu0 %v550
    %v757 = vpop.f32.mrf.mxu0
    %v758 = vadd.f32 %v716, %v757
    %v759 = vpop.f32.mrf.mxu0
    %v760 = vadd.f32 %v720, %v759
    %v761 = vpop.f32.mrf.mxu0
    %v762 = vpop.f32.mrf.mxu0
    %763 = vdwg.mxu0
    %v764 = vmax.f32 %v758, 0.0
    %v765 = vmax.f32 %v760, 0.0
    %s766 = scalar_lea.vmem [#allocation4], 256
    %v767 = vld [vmem:[%s766] sm:$0xff]
    %v768 = vld [vmem:[%s766 + $0x8] sm:$0xff]
    %v769 = vld [vmem:[%s766 + $0x10] sm:$0xff]
    %v770 = vld [vmem:[%s766 + $0x18] sm:$0xff]
    %v771 = vld [vmem:[%s766 + $0x20] sm:$0xff]
    %v772 = vld [vmem:[%s766 + $0x28] sm:$0xff]
    %v773 = vld [vmem:[%s766 + $0x30] sm:$0xff]
    %v774 = vld [vmem:[%s766 + $0x38] sm:$0xff]
    %v775 = vld [vmem:[%s766 + $0x40] sm:$0xff]
    %v776 = vld [vmem:[%s766 + $0x48] sm:$0xff]
    %v777 = vld [vmem:[%s766 + $0x50] sm:$0xff]
    %v778 = vld [vmem:[%s766 + $0x58] sm:$0xff]
    %v779 = vld [vmem:[%s766 + $0x60] sm:$0xff]
    %v780 = vld [vmem:[%s766 + $0x68] sm:$0xff]
    %v781 = vld [vmem:[%s766 + $0x70] sm:$0xff]
    %v782 = vld [vmem:[%s766 + $0x78] sm:$0xff]
    %v783 = vld [vmem:[%s766 + $0x80] sm:$0xff]
    %v784 = vld [vmem:[%s766 + $0x88] sm:$0xff]
    %v785 = vld [vmem:[%s766 + $0x90] sm:$0xff]
    %v786 = vld [vmem:[%s766 + $0x98] sm:$0xff]
    %v787 = vld [vmem:[%s766 + $0xa0] sm:$0xff]
    %v788 = vld [vmem:[%s766 + $0xa8] sm:$0xff]
    %v789 = vld [vmem:[%s766 + $0xb0] sm:$0xff]
    %v790 = vld [vmem:[%s766 + $0xb8] sm:$0xff]
    %v791 = vld [vmem:[%s766 + $0xc0] sm:$0xff]
    %v792 = vld [vmem:[%s766 + $0xc8] sm:$0xff]
    %v793 = vld [vmem:[%s766 + $0xd0] sm:$0xff]
    %v794 = vld [vmem:[%s766 + $0xd8] sm:$0xff]
    %v795 = vld [vmem:[%s766 + $0xe0] sm:$0xff]
    %v796 = vld [vmem:[%s766 + $0xe8] sm:$0xff]
    %v797 = vld [vmem:[%s766 + $0xf0] sm:$0xff]
    %v798 = vld [vmem:[%s766 + $0xf8] sm:$0xff]
    %s799 = scalar_lea.vmem [#allocation6], 4
    %v800 = vld [vmem:[%s799] sm:$0x3]
    %v801 = vpack.c.bf16 %v764, %v764
    %v802 = vpack.c.bf16 %v765, %v765
    %v835 = vunpack.c.l.b16 %v767
    %v836 = vunpack.c.h.b16 %v767
    %v837 = vunpack.c.l.b16 %v768
    %v838 = vunpack.c.h.b16 %v768
    %v839 = vunpack.c.l.b16 %v769
    %v840 = vunpack.c.h.b16 %v769
    %v841 = vunpack.c.l.b16 %v770
    %v842 = vunpack.c.h.b16 %v770
    %v843 = vunpack.c.l.b16 %v771
    %v844 = vunpack.c.h.b16 %v771
    %v845 = vunpack.c.l.b16 %v772
    %v846 = vunpack.c.h.b16 %v772
    %v847 = vunpack.c.l.b16 %v773
    %v848 = vunpack.c.h.b16 %v773
    %v849 = vunpack.c.l.b16 %v774
    %v850 = vunpack.c.h.b16 %v774
    %v851 = vunpack.c.l.b16 %v775
    %v852 = vunpack.c.h.b16 %v775
    %v853 = vunpack.c.l.b16 %v776
    %v854 = vunpack.c.h.b16 %v776
    %v855 = vunpack.c.l.b16 %v777
    %v856 = vunpack.c.h.b16 %v777
    %v857 = vunpack.c.l.b16 %v778
    %v858 = vunpack.c.h.b16 %v778
    %v859 = vunpack.c.l.b16 %v779
    %v860 = vunpack.c.h.b16 %v779
    %v861 = vunpack.c.l.b16 %v780
    %v862 = vunpack.c.h.b16 %v780
    %v863 = vunpack.c.l.b16 %v781
    %v864 = vunpack.c.h.b16 %v781
    %v865 = vunpack.c.l.b16 %v782
    %v866 = vunpack.c.h.b16 %v782
    %v867 = vunpack.c.l.b16 %v783
    %v868 = vunpack.c.h.b16 %v783
    %v869 = vunpack.c.l.b16 %v784
    %v870 = vunpack.c.h.b16 %v784
    %v871 = vunpack.c.l.b16 %v785
    %v872 = vunpack.c.h.b16 %v785
    %v873 = vunpack.c.l.b16 %v786
    %v874 = vunpack.c.h.b16 %v786
    %v875 = vunpack.c.l.b16 %v787
    %v876 = vunpack.c.h.b16 %v787
    %v877 = vunpack.c.l.b16 %v788
    %v878 = vunpack.c.h.b16 %v788
    %v879 = vunpack.c.l.b16 %v789
    %v880 = vunpack.c.h.b16 %v789
    %v881 = vunpack.c.l.b16 %v790
    %v882 = vunpack.c.h.b16 %v790
    %v883 = vunpack.c.l.b16 %v791
    %v884 = vunpack.c.h.b16 %v791
    %v885 = vunpack.c.l.b16 %v792
    %v886 = vunpack.c.h.b16 %v792
    %v887 = vunpack.c.l.b16 %v793
    %v888 = vunpack.c.h.b16 %v793
    %v889 = vunpack.c.l.b16 %v794
    %v890 = vunpack.c.h.b16 %v794
    %v891 = vunpack.c.l.b16 %v795
    %v892 = vunpack.c.h.b16 %v795
    %v893 = vunpack.c.l.b16 %v796
    %v894 = vunpack.c.h.b16 %v796
    %v895 = vunpack.c.l.b16 %v797
    %v896 = vunpack.c.h.b16 %v797
    %v897 = vunpack.c.l.b16 %v798
    %v898 = vunpack.c.h.b16 %v798
    %v899 = vpack.c.b16 %v837, %v835
    %v900 = vpack.c.b16 %v838, %v836
    %v901 = vpack.c.b16 %v841, %v839
    %v902 = vpack.c.b16 %v842, %v840
    %v903 = vpack.c.b16 %v845, %v843
    %v904 = vpack.c.b16 %v846, %v844
    %v905 = vpack.c.b16 %v849, %v847
    %v906 = vpack.c.b16 %v850, %v848
    %v907 = vpack.c.b16 %v853, %v851
    %v908 = vpack.c.b16 %v854, %v852
    %v909 = vpack.c.b16 %v857, %v855
    %v910 = vpack.c.b16 %v858, %v856
    %v911 = vpack.c.b16 %v861, %v859
    %v912 = vpack.c.b16 %v862, %v860
    %v913 = vpack.c.b16 %v865, %v863
    %v914 = vpack.c.b16 %v866, %v864
    %v915 = vpack.c.b16 %v869, %v867
    %v916 = vpack.c.b16 %v870, %v868
    %v917 = vpack.c.b16 %v873, %v871
    %v918 = vpack.c.b16 %v874, %v872
    %v919 = vpack.c.b16 %v877, %v875
    %v920 = vpack.c.b16 %v878, %v876
    %v921 = vpack.c.b16 %v881, %v879
    %v922 = vpack.c.b16 %v882, %v880
    %v923 = vpack.c.b16 %v885, %v883
    %v924 = vpack.c.b16 %v886, %v884
    %v925 = vpack.c.b16 %v889, %v887
    %v926 = vpack.c.b16 %v890, %v888
    %v927 = vpack.c.b16 %v893, %v891
    %v928 = vpack.c.b16 %v894, %v892
    %v929 = vpack.c.b16 %v897, %v895
    %v930 = vpack.c.b16 %v898, %v896
    %v964 = vlaneseq
    %v965 = vshrl.u32 %v964, 7
    %v966 = vsub.s32 0, %v965
    %v967 = vrot.slane %v800, %v966
    %v968 = vlaneseq
    %v969 = vshrl.u32 %v968, 7
    %v970 = vsub.s32 1, %v969
    %v971 = vrot.slane %v800, %v970
    %974 = vmatprep.subr.bf16.mxu0 %v914
    %975 = vmatpush1.bf16.msra.mxu0 %v913
    %976 = vmatprep.subr.bf16.mxu0 %v912
    %977 = vmatpush1.bf16.msra.mxu0 %v911
    %978 = vmatprep.subr.bf16.mxu0 %v910
    %979 = vmatpush1.bf16.msra.mxu0 %v909
    %980 = vmatprep.subr.bf16.mxu0 %v908
    %981 = vmatpush1.bf16.msra.mxu0 %v907
    %982 = vmatprep.subr.bf16.mxu0 %v906
    %983 = vmatpush1.bf16.msra.mxu0 %v905
    %984 = vmatprep.subr.bf16.mxu0 %v904
    %985 = vmatpush1.bf16.msra.mxu0 %v903
    %986 = vmatprep.subr.bf16.mxu0 %v902
    %987 = vmatpush1.bf16.msra.mxu0 %v901
    %988 = vmatprep.subr.bf16.mxu0 %v900
    %989 = vmatpush1.bf16.msra.mxu0 %v899
    %990 = vmatprep.subr.bf16.mxu0 %v930
    %991 = vmatpush2.bf16.msra.mxu0 %v929
    %992 = vmatprep.subr.bf16.mxu0 %v928
    %993 = vmatpush2.bf16.msra.mxu0 %v927
    %994 = vmatprep.subr.bf16.mxu0 %v926
    %995 = vmatpush2.bf16.msra.mxu0 %v925
    %996 = vmatprep.subr.bf16.mxu0 %v924
    %997 = vmatpush2.bf16.msra.mxu0 %v923
    %998 = vmatprep.subr.bf16.mxu0 %v922
    %999 = vmatpush2.bf16.msra.mxu0 %v921
    %1000 = vmatprep.subr.bf16.mxu0 %v920
    %1001 = vmatpush2.bf16.msra.mxu0 %v919
    %1002 = vmatprep.subr.bf16.mxu0 %v918
    %1003 = vmatpush2.bf16.msra.mxu0 %v917
    %1004 = vmatprep.subr.bf16.mxu0 %v916
    %1005 = vmatpush2.bf16.msra.mxu0 %v915
    %1006 = vmatprep.mubr.bf16.mxu0 %v802
    %1007 = vmatmul.mubr.bf16.gmra.mxu0 %v801
    %v1008 = vpop.f32.mrf.mxu0
    %v1009 = vadd.f32 %v967, %v1008
    %v1010 = vpop.f32.mrf.mxu0
    %v1011 = vadd.f32 %v971, %v1010
    %v1012 = vpop.f32.mrf.mxu0
    %v1013 = vpop.f32.mrf.mxu0
    %1014 = vdwg.mxu0
    %v1015 = vmax.f32 %v1009, 0.0
    %v1016 = vmax.f32 %v1011, 0.0
    %s1017 = scalar_lea.vmem [#allocation4], 512
    %v1018 = vld [vmem:[%s1017] sm:$0xff]
    %v1019 = vld [vmem:[%s1017 + $0x8] sm:$0xff]
    %v1020 = vld [vmem:[%s1017 + $0x10] sm:$0xff]
    %v1021 = vld [vmem:[%s1017 + $0x18] sm:$0xff]
    %v1022 = vld [vmem:[%s1017 + $0x20] sm:$0xff]
    %v1023 = vld [vmem:[%s1017 + $0x28] sm:$0xff]
    %v1024 = vld [vmem:[%s1017 + $0x30] sm:$0xff]
    %v1025 = vld [vmem:[%s1017 + $0x38] sm:$0xff]
    %v1026 = vld [vmem:[%s1017 + $0x40] sm:$0xff]
    %v1027 = vld [vmem:[%s1017 + $0x48] sm:$0xff]
    %v1028 = vld [vmem:[%s1017 + $0x50] sm:$0xff]
    %v1029 = vld [vmem:[%s1017 + $0x58] sm:$0xff]
    %v1030 = vld [vmem:[%s1017 + $0x60] sm:$0xff]
    %v1031 = vld [vmem:[%s1017 + $0x68] sm:$0xff]
    %v1032 = vld [vmem:[%s1017 + $0x70] sm:$0xff]
    %v1033 = vld [vmem:[%s1017 + $0x78] sm:$0xff]
    %v1034 = vld [vmem:[%s1017 + $0x80] sm:$0xff]
    %v1035 = vld [vmem:[%s1017 + $0x88] sm:$0xff]
    %v1036 = vld [vmem:[%s1017 + $0x90] sm:$0xff]
    %v1037 = vld [vmem:[%s1017 + $0x98] sm:$0xff]
    %v1038 = vld [vmem:[%s1017 + $0xa0] sm:$0xff]
    %v1039 = vld [vmem:[%s1017 + $0xa8] sm:$0xff]
    %v1040 = vld [vmem:[%s1017 + $0xb0] sm:$0xff]
    %v1041 = vld [vmem:[%s1017 + $0xb8] sm:$0xff]
    %v1042 = vld [vmem:[%s1017 + $0xc0] sm:$0xff]
    %v1043 = vld [vmem:[%s1017 + $0xc8] sm:$0xff]
    %v1044 = vld [vmem:[%s1017 + $0xd0] sm:$0xff]
    %v1045 = vld [vmem:[%s1017 + $0xd8] sm:$0xff]
    %v1046 = vld [vmem:[%s1017 + $0xe0] sm:$0xff]
    %v1047 = vld [vmem:[%s1017 + $0xe8] sm:$0xff]
    %v1048 = vld [vmem:[%s1017 + $0xf0] sm:$0xff]
    %v1049 = vld [vmem:[%s1017 + $0xf8] sm:$0xff]
    %s1050 = scalar_lea.vmem [#allocation6], 6
    %v1051 = vld [vmem:[%s1050] sm:$0x3]
    %v1052 = vlaneseq
    %v1053 = vshrl.u32 %v1052, 7
    %v1054 = vsub.s32 3, %v1053
    %v1055 = vrot.slane %v112, %v1054
    %v1056 = vlaneseq
    %v1057 = vshrl.u32 %v1056, 7
    %v1058 = vsub.s32 4, %v1057
    %v1059 = vrot.slane %v112, %v1058
    %v1062 = vpack.c.bf16 %v1055, %v1055
    %v1063 = vpack.c.bf16 %v1059, %v1059
    %v1096 = vunpack.c.l.b16 %v1018
    %v1097 = vunpack.c.h.b16 %v1018
    %v1098 = vunpack.c.l.b16 %v1019
    %v1099 = vunpack.c.h.b16 %v1019
    %v1100 = vunpack.c.l.b16 %v1020
    %v1101 = vunpack.c.h.b16 %v1020
    %v1102 = vunpack.c.l.b16 %v1021
    %v1103 = vunpack.c.h.b16 %v1021
    %v1104 = vunpack.c.l.b16 %v1022
    %v1105 = vunpack.c.h.b16 %v1022
    %v1106 = vunpack.c.l.b16 %v1023
    %v1107 = vunpack.c.h.b16 %v1023
    %v1108 = vunpack.c.l.b16 %v1024
    %v1109 = vunpack.c.h.b16 %v1024
    %v1110 = vunpack.c.l.b16 %v1025
    %v1111 = vunpack.c.h.b16 %v1025
    %v1112 = vunpack.c.l.b16 %v1026
    %v1113 = vunpack.c.h.b16 %v1026
    %v1114 = vunpack.c.l.b16 %v1027
    %v1115 = vunpack.c.h.b16 %v1027
    %v1116 = vunpack.c.l.b16 %v1028
    %v1117 = vunpack.c.h.b16 %v1028
    %v1118 = vunpack.c.l.b16 %v1029
    %v1119 = vunpack.c.h.b16 %v1029
    %v1120 = vunpack.c.l.b16 %v1030
    %v1121 = vunpack.c.h.b16 %v1030
    %v1122 = vunpack.c.l.b16 %v1031
    %v1123 = vunpack.c.h.b16 %v1031
    %v1124 = vunpack.c.l.b16 %v1032
    %v1125 = vunpack.c.h.b16 %v1032
    %v1126 = vunpack.c.l.b16 %v1033
    %v1127 = vunpack.c.h.b16 %v1033
    %v1128 = vunpack.c.l.b16 %v1034
    %v1129 = vunpack.c.h.b16 %v1034
    %v1130 = vunpack.c.l.b16 %v1035
    %v1131 = vunpack.c.h.b16 %v1035
    %v1132 = vunpack.c.l.b16 %v1036
    %v1133 = vunpack.c.h.b16 %v1036
    %v1134 = vunpack.c.l.b16 %v1037
    %v1135 = vunpack.c.h.b16 %v1037
    %v1136 = vunpack.c.l.b16 %v1038
    %v1137 = vunpack.c.h.b16 %v1038
    %v1138 = vunpack.c.l.b16 %v1039
    %v1139 = vunpack.c.h.b16 %v1039
    %v1140 = vunpack.c.l.b16 %v1040
    %v1141 = vunpack.c.h.b16 %v1040
    %v1142 = vunpack.c.l.b16 %v1041
    %v1143 = vunpack.c.h.b16 %v1041
    %v1144 = vunpack.c.l.b16 %v1042
    %v1145 = vunpack.c.h.b16 %v1042
    %v1146 = vunpack.c.l.b16 %v1043
    %v1147 = vunpack.c.h.b16 %v1043
    %v1148 = vunpack.c.l.b16 %v1044
    %v1149 = vunpack.c.h.b16 %v1044
    %v1150 = vunpack.c.l.b16 %v1045
    %v1151 = vunpack.c.h.b16 %v1045
    %v1152 = vunpack.c.l.b16 %v1046
    %v1153 = vunpack.c.h.b16 %v1046
    %v1154 = vunpack.c.l.b16 %v1047
    %v1155 = vunpack.c.h.b16 %v1047
    %v1156 = vunpack.c.l.b16 %v1048
    %v1157 = vunpack.c.h.b16 %v1048
    %v1158 = vunpack.c.l.b16 %v1049
    %v1159 = vunpack.c.h.b16 %v1049
    %v1160 = vpack.c.b16 %v1098, %v1096
    %v1161 = vpack.c.b16 %v1099, %v1097
    %v1162 = vpack.c.b16 %v1102, %v1100
    %v1163 = vpack.c.b16 %v1103, %v1101
    %v1164 = vpack.c.b16 %v1106, %v1104
    %v1165 = vpack.c.b16 %v1107, %v1105
    %v1166 = vpack.c.b16 %v1110, %v1108
    %v1167 = vpack.c.b16 %v1111, %v1109
    %v1168 = vpack.c.b16 %v1114, %v1112
    %v1169 = vpack.c.b16 %v1115, %v1113
    %v1170 = vpack.c.b16 %v1118, %v1116
    %v1171 = vpack.c.b16 %v1119, %v1117
    %v1172 = vpack.c.b16 %v1122, %v1120
    %v1173 = vpack.c.b16 %v1123, %v1121
    %v1174 = vpack.c.b16 %v1126, %v1124
    %v1175 = vpack.c.b16 %v1127, %v1125
    %v1176 = vpack.c.b16 %v1130, %v1128
    %v1177 = vpack.c.b16 %v1131, %v1129
    %v1178 = vpack.c.b16 %v1134, %v1132
    %v1179 = vpack.c.b16 %v1135, %v1133
    %v1180 = vpack.c.b16 %v1138, %v1136
    %v1181 = vpack.c.b16 %v1139, %v1137
    %v1182 = vpack.c.b16 %v1142, %v1140
    %v1183 = vpack.c.b16 %v1143, %v1141
    %v1184 = vpack.c.b16 %v1146, %v1144
    %v1185 = vpack.c.b16 %v1147, %v1145
    %v1186 = vpack.c.b16 %v1150, %v1148
    %v1187 = vpack.c.b16 %v1151, %v1149
    %v1188 = vpack.c.b16 %v1154, %v1152
    %v1189 = vpack.c.b16 %v1155, %v1153
    %v1190 = vpack.c.b16 %v1158, %v1156
    %v1191 = vpack.c.b16 %v1159, %v1157
    %v1225 = vlaneseq
    %v1226 = vshrl.u32 %v1225, 7
    %v1227 = vsub.s32 0, %v1226
    %v1228 = vrot.slane %v1051, %v1227
    %v1229 = vlaneseq
    %v1230 = vshrl.u32 %v1229, 7
    %v1231 = vsub.s32 1, %v1230
    %v1232 = vrot.slane %v1051, %v1231
    %1235 = vmatprep.subr.bf16.mxu0 %v1175
    %1236 = vmatpush1.bf16.msra.mxu0 %v1174
    %1237 = vmatprep.subr.bf16.mxu0 %v1173
    %1238 = vmatpush1.bf16.msra.mxu0 %v1172
    %1239 = vmatprep.subr.bf16.mxu0 %v1171
    %1240 = vmatpush1.bf16.msra.mxu0 %v1170
    %1241 = vmatprep.subr.bf16.mxu0 %v1169
    %1242 = vmatpush1.bf16.msra.mxu0 %v1168
    %1243 = vmatprep.subr.bf16.mxu0 %v1167
    %1244 = vmatpush1.bf16.msra.mxu0 %v1166
    %1245 = vmatprep.subr.bf16.mxu0 %v1165
    %1246 = vmatpush1.bf16.msra.mxu0 %v1164
    %1247 = vmatprep.subr.bf16.mxu0 %v1163
    %1248 = vmatpush1.bf16.msra.mxu0 %v1162
    %1249 = vmatprep.subr.bf16.mxu0 %v1161
    %1250 = vmatpush1.bf16.msra.mxu0 %v1160
    %1251 = vmatprep.subr.bf16.mxu0 %v1191
    %1252 = vmatpush2.bf16.msra.mxu0 %v1190
    %1253 = vmatprep.subr.bf16.mxu0 %v1189
    %1254 = vmatpush2.bf16.msra.mxu0 %v1188
    %1255 = vmatprep.subr.bf16.mxu0 %v1187
    %1256 = vmatpush2.bf16.msra.mxu0 %v1186
    %1257 = vmatprep.subr.bf16.mxu0 %v1185
    %1258 = vmatpush2.bf16.msra.mxu0 %v1184
    %1259 = vmatprep.subr.bf16.mxu0 %v1183
    %1260 = vmatpush2.bf16.msra.mxu0 %v1182
    %1261 = vmatprep.subr.bf16.mxu0 %v1181
    %1262 = vmatpush2.bf16.msra.mxu0 %v1180
    %1263 = vmatprep.subr.bf16.mxu0 %v1179
    %1264 = vmatpush2.bf16.msra.mxu0 %v1178
    %1265 = vmatprep.subr.bf16.mxu0 %v1177
    %1266 = vmatpush2.bf16.msra.mxu0 %v1176
    %1267 = vmatprep.mubr.bf16.mxu0 %v1063
    %1268 = vmatmul.mubr.bf16.gmra.mxu0 %v1062
    %v1269 = vpop.f32.mrf.mxu0
    %v1270 = vadd.f32 %v1228, %v1269
    %v1271 = vpop.f32.mrf.mxu0
    %v1272 = vadd.f32 %v1232, %v1271
    %v1273 = vpop.f32.mrf.mxu0
    %v1274 = vpop.f32.mrf.mxu0
    %1275 = vdwg.mxu0
    %v1276 = vmax.f32 %v1270, 0.0
    %v1277 = vmax.f32 %v1272, 0.0
    %s1278 = scalar_lea.vmem [#allocation4], 768
    %v1279 = vld [vmem:[%s1278] sm:$0xff]
    %v1280 = vld [vmem:[%s1278 + $0x8] sm:$0xff]
    %v1281 = vld [vmem:[%s1278 + $0x10] sm:$0xff]
    %v1282 = vld [vmem:[%s1278 + $0x18] sm:$0xff]
    %v1283 = vld [vmem:[%s1278 + $0x20] sm:$0xff]
    %v1284 = vld [vmem:[%s1278 + $0x28] sm:$0xff]
    %v1285 = vld [vmem:[%s1278 + $0x30] sm:$0xff]
    %v1286 = vld [vmem:[%s1278 + $0x38] sm:$0xff]
    %v1287 = vld [vmem:[%s1278 + $0x40] sm:$0xff]
    %v1288 = vld [vmem:[%s1278 + $0x48] sm:$0xff]
    %v1289 = vld [vmem:[%s1278 + $0x50] sm:$0xff]
    %v1290 = vld [vmem:[%s1278 + $0x58] sm:$0xff]
    %v1291 = vld [vmem:[%s1278 + $0x60] sm:$0xff]
    %v1292 = vld [vmem:[%s1278 + $0x68] sm:$0xff]
    %v1293 = vld [vmem:[%s1278 + $0x70] sm:$0xff]
    %v1294 = vld [vmem:[%s1278 + $0x78] sm:$0xff]
    %v1295 = vld [vmem:[%s1278 + $0x80] sm:$0xff]
    %v1296 = vld [vmem:[%s1278 + $0x88] sm:$0xff]
    %v1297 = vld [vmem:[%s1278 + $0x90] sm:$0xff]
    %v1298 = vld [vmem:[%s1278 + $0x98] sm:$0xff]
    %v1299 = vld [vmem:[%s1278 + $0xa0] sm:$0xff]
    %v1300 = vld [vmem:[%s1278 + $0xa8] sm:$0xff]
    %v1301 = vld [vmem:[%s1278 + $0xb0] sm:$0xff]
    %v1302 = vld [vmem:[%s1278 + $0xb8] sm:$0xff]
    %v1303 = vld [vmem:[%s1278 + $0xc0] sm:$0xff]
    %v1304 = vld [vmem:[%s1278 + $0xc8] sm:$0xff]
    %v1305 = vld [vmem:[%s1278 + $0xd0] sm:$0xff]
    %v1306 = vld [vmem:[%s1278 + $0xd8] sm:$0xff]
    %v1307 = vld [vmem:[%s1278 + $0xe0] sm:$0xff]
    %v1308 = vld [vmem:[%s1278 + $0xe8] sm:$0xff]
    %v1309 = vld [vmem:[%s1278 + $0xf0] sm:$0xff]
    %v1310 = vld [vmem:[%s1278 + $0xf8] sm:$0xff]
    %s1311 = scalar_lea.vmem [#allocation6], 8
    %v1312 = vld [vmem:[%s1311] sm:$0x3]
    %v1313 = vpack.c.bf16 %v1276, %v1276
    %v1314 = vpack.c.bf16 %v1277, %v1277
    %v1347 = vunpack.c.l.b16 %v1279
    %v1348 = vunpack.c.h.b16 %v1279
    %v1349 = vunpack.c.l.b16 %v1280
    %v1350 = vunpack.c.h.b16 %v1280
    %v1351 = vunpack.c.l.b16 %v1281
    %v1352 = vunpack.c.h.b16 %v1281
    %v1353 = vunpack.c.l.b16 %v1282
    %v1354 = vunpack.c.h.b16 %v1282
    %v1355 = vunpack.c.l.b16 %v1283
    %v1356 = vunpack.c.h.b16 %v1283
    %v1357 = vunpack.c.l.b16 %v1284
    %v1358 = vunpack.c.h.b16 %v1284
    %v1359 = vunpack.c.l.b16 %v1285
    %v1360 = vunpack.c.h.b16 %v1285
    %v1361 = vunpack.c.l.b16 %v1286
    %v1362 = vunpack.c.h.b16 %v1286
    %v1363 = vunpack.c.l.b16 %v1287
    %v1364 = vunpack.c.h.b16 %v1287
    %v1365 = vunpack.c.l.b16 %v1288
    %v1366 = vunpack.c.h.b16 %v1288
    %v1367 = vunpack.c.l.b16 %v1289
    %v1368 = vunpack.c.h.b16 %v1289
    %v1369 = vunpack.c.l.b16 %v1290
    %v1370 = vunpack.c.h.b16 %v1290
    %v1371 = vunpack.c.l.b16 %v1291
    %v1372 = vunpack.c.h.b16 %v1291
    %v1373 = vunpack.c.l.b16 %v1292
    %v1374 = vunpack.c.h.b16 %v1292
    %v1375 = vunpack.c.l.b16 %v1293
    %v1376 = vunpack.c.h.b16 %v1293
    %v1377 = vunpack.c.l.b16 %v1294
    %v1378 = vunpack.c.h.b16 %v1294
    %v1379 = vunpack.c.l.b16 %v1295
    %v1380 = vunpack.c.h.b16 %v1295
    %v1381 = vunpack.c.l.b16 %v1296
    %v1382 = vunpack.c.h.b16 %v1296
    %v1383 = vunpack.c.l.b16 %v1297
    %v1384 = vunpack.c.h.b16 %v1297
    %v1385 = vunpack.c.l.b16 %v1298
    %v1386 = vunpack.c.h.b16 %v1298
    %v1387 = vunpack.c.l.b16 %v1299
    %v1388 = vunpack.c.h.b16 %v1299
    %v1389 = vunpack.c.l.b16 %v1300
    %v1390 = vunpack.c.h.b16 %v1300
    %v1391 = vunpack.c.l.b16 %v1301
    %v1392 = vunpack.c.h.b16 %v1301
    %v1393 = vunpack.c.l.b16 %v1302
    %v1394 = vunpack.c.h.b16 %v1302
    %v1395 = vunpack.c.l.b16 %v1303
    %v1396 = vunpack.c.h.b16 %v1303
    %v1397 = vunpack.c.l.b16 %v1304
    %v1398 = vunpack.c.h.b16 %v1304
    %v1399 = vunpack.c.l.b16 %v1305
    %v1400 = vunpack.c.h.b16 %v1305
    %v1401 = vunpack.c.l.b16 %v1306
    %v1402 = vunpack.c.h.b16 %v1306
    %v1403 = vunpack.c.l.b16 %v1307
    %v1404 = vunpack.c.h.b16 %v1307
    %v1405 = vunpack.c.l.b16 %v1308
    %v1406 = vunpack.c.h.b16 %v1308
    %v1407 = vunpack.c.l.b16 %v1309
    %v1408 = vunpack.c.h.b16 %v1309
    %v1409 = vunpack.c.l.b16 %v1310
    %v1410 = vunpack.c.h.b16 %v1310
    %v1411 = vpack.c.b16 %v1349, %v1347
    %v1412 = vpack.c.b16 %v1350, %v1348
    %v1413 = vpack.c.b16 %v1353, %v1351
    %v1414 = vpack.c.b16 %v1354, %v1352
    %v1415 = vpack.c.b16 %v1357, %v1355
    %v1416 = vpack.c.b16 %v1358, %v1356
    %v1417 = vpack.c.b16 %v1361, %v1359
    %v1418 = vpack.c.b16 %v1362, %v1360
    %v1419 = vpack.c.b16 %v1365, %v1363
    %v1420 = vpack.c.b16 %v1366, %v1364
    %v1421 = vpack.c.b16 %v1369, %v1367
    %v1422 = vpack.c.b16 %v1370, %v1368
    %v1423 = vpack.c.b16 %v1373, %v1371
    %v1424 = vpack.c.b16 %v1374, %v1372
    %v1425 = vpack.c.b16 %v1377, %v1375
    %v1426 = vpack.c.b16 %v1378, %v1376
    %v1427 = vpack.c.b16 %v1381, %v1379
    %v1428 = vpack.c.b16 %v1382, %v1380
    %v1429 = vpack.c.b16 %v1385, %v1383
    %v1430 = vpack.c.b16 %v1386, %v1384
    %v1431 = vpack.c.b16 %v1389, %v1387
    %v1432 = vpack.c.b16 %v1390, %v1388
    %v1433 = vpack.c.b16 %v1393, %v1391
    %v1434 = vpack.c.b16 %v1394, %v1392
    %v1435 = vpack.c.b16 %v1397, %v1395
    %v1436 = vpack.c.b16 %v1398, %v1396
    %v1437 = vpack.c.b16 %v1401, %v1399
    %v1438 = vpack.c.b16 %v1402, %v1400
    %v1439 = vpack.c.b16 %v1405, %v1403
    %v1440 = vpack.c.b16 %v1406, %v1404
    %v1441 = vpack.c.b16 %v1409, %v1407
    %v1442 = vpack.c.b16 %v1410, %v1408
    %v1476 = vlaneseq
    %v1477 = vshrl.u32 %v1476, 7
    %v1478 = vsub.s32 0, %v1477
    %v1479 = vrot.slane %v1312, %v1478
    %v1480 = vlaneseq
    %v1481 = vshrl.u32 %v1480, 7
    %v1482 = vsub.s32 1, %v1481
    %v1483 = vrot.slane %v1312, %v1482
    %1486 = vmatprep.subr.bf16.mxu0 %v1426
    %1487 = vmatpush1.bf16.msra.mxu0 %v1425
    %1488 = vmatprep.subr.bf16.mxu0 %v1424
    %1489 = vmatpush1.bf16.msra.mxu0 %v1423
    %1490 = vmatprep.subr.bf16.mxu0 %v1422
    %1491 = vmatpush1.bf16.msra.mxu0 %v1421
    %1492 = vmatprep.subr.bf16.mxu0 %v1420
    %1493 = vmatpush1.bf16.msra.mxu0 %v1419
    %1494 = vmatprep.subr.bf16.mxu0 %v1418
    %1495 = vmatpush1.bf16.msra.mxu0 %v1417
    %1496 = vmatprep.subr.bf16.mxu0 %v1416
    %1497 = vmatpush1.bf16.msra.mxu0 %v1415
    %1498 = vmatprep.subr.bf16.mxu0 %v1414
    %1499 = vmatpush1.bf16.msra.mxu0 %v1413
    %1500 = vmatprep.subr.bf16.mxu0 %v1412
    %1501 = vmatpush1.bf16.msra.mxu0 %v1411
    %1502 = vmatprep.subr.bf16.mxu0 %v1442
    %1503 = vmatpush2.bf16.msra.mxu0 %v1441
    %1504 = vmatprep.subr.bf16.mxu0 %v1440
    %1505 = vmatpush2.bf16.msra.mxu0 %v1439
    %1506 = vmatprep.subr.bf16.mxu0 %v1438
    %1507 = vmatpush2.bf16.msra.mxu0 %v1437
    %1508 = vmatprep.subr.bf16.mxu0 %v1436
    %1509 = vmatpush2.bf16.msra.mxu0 %v1435
    %1510 = vmatprep.subr.bf16.mxu0 %v1434
    %1511 = vmatpush2.bf16.msra.mxu0 %v1433
    %1512 = vmatprep.subr.bf16.mxu0 %v1432
    %1513 = vmatpush2.bf16.msra.mxu0 %v1431
    %1514 = vmatprep.subr.bf16.mxu0 %v1430
    %1515 = vmatpush2.bf16.msra.mxu0 %v1429
    %1516 = vmatprep.subr.bf16.mxu0 %v1428
    %1517 = vmatpush2.bf16.msra.mxu0 %v1427
    %1518 = vmatprep.mubr.bf16.mxu0 %v1314
    %1519 = vmatmul.mubr.bf16.gmra.mxu0 %v1313
    %v1520 = vpop.f32.mrf.mxu0
    %v1521 = vadd.f32 %v1479, %v1520
    %v1522 = vpop.f32.mrf.mxu0
    %v1523 = vadd.f32 %v1483, %v1522
    %v1524 = vpop.f32.mrf.mxu0
    %v1525 = vpop.f32.mrf.mxu0
    %1526 = vdwg.mxu0
    %v1527 = vmax.f32 %v1521, 0.0
    %v1528 = vmax.f32 %v1523, 0.0
    %v1529 = vld [vmem:[%s1] sm:$0x1]
    %v1530 = vld [vmem:[%s1 + $0x1] sm:$0x1]
    %v1531 = vld [vmem:[%s1 + $0x2] sm:$0x1]
    %v1532 = vld [vmem:[%s1 + $0x3] sm:$0x1]
    %v1533 = vld [vmem:[%s1 + $0x4] sm:$0x1]
    %v1534 = vld [vmem:[%s1 + $0x5] sm:$0x1]
    %v1535 = vld [vmem:[%s1 + $0x6] sm:$0x1]
    %v1536 = vld [vmem:[%s1 + $0x7] sm:$0x1]
    %v1537 = vld [vmem:[%s1 + $0x8] sm:$0x1]
    %v1538 = vld [vmem:[%s1 + $0x9] sm:$0x1]
    %v1539 = vld [vmem:[#allocation9] sm:$0xff]
    %v1540 = vld [vmem:[#allocation9 + $0x8] sm:$0xff]
    %v1541 = vld [vmem:[#allocation9 + $0x10] sm:$0xff]
    %v1542 = vld [vmem:[#allocation9 + $0x18] sm:$0xff]
    %v1543 = vld [vmem:[#allocation9 + $0x20] sm:$0xff]
    %v1544 = vld [vmem:[#allocation9 + $0x28] sm:$0xff]
    %v1545 = vld [vmem:[#allocation9 + $0x30] sm:$0xff]
    %v1546 = vld [vmem:[#allocation9 + $0x38] sm:$0xff]
    %v1547 = vld [vmem:[#allocation9 + $0x40] sm:$0xff]
    %v1548 = vld [vmem:[#allocation9 + $0x48] sm:$0xff]
    %v1549 = vld [vmem:[#allocation9 + $0x50] sm:$0xff]
    %v1550 = vld [vmem:[#allocation9 + $0x58] sm:$0xff]
    %v1551 = vld [vmem:[#allocation9 + $0x60] sm:$0xff]
    %v1552 = vld [vmem:[#allocation9 + $0x68] sm:$0xff]
    %v1553 = vld [vmem:[#allocation9 + $0x70] sm:$0xff]
    %v1554 = vld [vmem:[#allocation9 + $0x78] sm:$0xff]
    %v1555 = vld [vmem:[#allocation9 + $0x80] sm:$0xff]
    %v1556 = vld [vmem:[#allocation9 + $0x88] sm:$0xff]
    %v1557 = vld [vmem:[#allocation9 + $0x90] sm:$0xff]
    %v1558 = vld [vmem:[#allocation9 + $0x98] sm:$0xff]
    %v1559 = vld [vmem:[#allocation9 + $0xa0] sm:$0xff]
    %v1560 = vld [vmem:[#allocation9 + $0xa8] sm:$0xff]
    %v1561 = vld [vmem:[#allocation9 + $0xb0] sm:$0xff]
    %v1562 = vld [vmem:[#allocation9 + $0xb8] sm:$0xff]
    %v1563 = vld [vmem:[#allocation9 + $0xc0] sm:$0xff]
    %v1564 = vld [vmem:[#allocation9 + $0xc8] sm:$0xff]
    %v1565 = vld [vmem:[#allocation9 + $0xd0] sm:$0xff]
    %v1566 = vld [vmem:[#allocation9 + $0xd8] sm:$0xff]
    %v1567 = vld [vmem:[#allocation9 + $0xe0] sm:$0xff]
    %v1568 = vld [vmem:[#allocation9 + $0xe8] sm:$0xff]
    %v1569 = vld [vmem:[#allocation9 + $0xf0] sm:$0xff]
    %v1570 = vld [vmem:[#allocation9 + $0xf8] sm:$0xff]
    %v1571 = vpack.c.bf16 %v1529, %v1529
    %v1572 = vld [vmem:[#allocation10] sm:$0xf]
    %v1605 = vunpack.c.l.b16 %v1539
    %v1606 = vunpack.c.h.b16 %v1539
    %v1607 = vunpack.c.l.b16 %v1540
    %v1608 = vunpack.c.h.b16 %v1540
    %v1609 = vunpack.c.l.b16 %v1541
    %v1610 = vunpack.c.h.b16 %v1541
    %v1611 = vunpack.c.l.b16 %v1542
    %v1612 = vunpack.c.h.b16 %v1542
    %v1613 = vunpack.c.l.b16 %v1543
    %v1614 = vunpack.c.h.b16 %v1543
    %v1615 = vunpack.c.l.b16 %v1544
    %v1616 = vunpack.c.h.b16 %v1544
    %v1617 = vunpack.c.l.b16 %v1545
    %v1618 = vunpack.c.h.b16 %v1545
    %v1619 = vunpack.c.l.b16 %v1546
    %v1620 = vunpack.c.h.b16 %v1546
    %v1621 = vunpack.c.l.b16 %v1547
    %v1622 = vunpack.c.h.b16 %v1547
    %v1623 = vunpack.c.l.b16 %v1548
    %v1624 = vunpack.c.h.b16 %v1548
    %v1625 = vunpack.c.l.b16 %v1549
    %v1626 = vunpack.c.h.b16 %v1549
    %v1627 = vunpack.c.l.b16 %v1550
    %v1628 = vunpack.c.h.b16 %v1550
    %v1629 = vunpack.c.l.b16 %v1551
    %v1630 = vunpack.c.h.b16 %v1551
    %v1631 = vunpack.c.l.b16 %v1552
    %v1632 = vunpack.c.h.b16 %v1552
    %v1633 = vunpack.c.l.b16 %v1553
    %v1634 = vunpack.c.h.b16 %v1553
    %v1635 = vunpack.c.l.b16 %v1554
    %v1636 = vunpack.c.h.b16 %v1554
    %v1637 = vunpack.c.l.b16 %v1555
    %v1638 = vunpack.c.h.b16 %v1555
    %v1639 = vunpack.c.l.b16 %v1556
    %v1640 = vunpack.c.h.b16 %v1556
    %v1641 = vunpack.c.l.b16 %v1557
    %v1642 = vunpack.c.h.b16 %v1557
    %v1643 = vunpack.c.l.b16 %v1558
    %v1644 = vunpack.c.h.b16 %v1558
    %v1645 = vunpack.c.l.b16 %v1559
    %v1646 = vunpack.c.h.b16 %v1559
    %v1647 = vunpack.c.l.b16 %v1560
    %v1648 = vunpack.c.h.b16 %v1560
    %v1649 = vunpack.c.l.b16 %v1561
    %v1650 = vunpack.c.h.b16 %v1561
    %v1651 = vunpack.c.l.b16 %v1562
    %v1652 = vunpack.c.h.b16 %v1562
    %v1653 = vunpack.c.l.b16 %v1563
    %v1654 = vunpack.c.h.b16 %v1563
    %v1655 = vunpack.c.l.b16 %v1564
    %v1656 = vunpack.c.h.b16 %v1564
    %v1657 = vunpack.c.l.b16 %v1565
    %v1658 = vunpack.c.h.b16 %v1565
    %v1659 = vunpack.c.l.b16 %v1566
    %v1660 = vunpack.c.h.b16 %v1566
    %v1661 = vunpack.c.l.b16 %v1567
    %v1662 = vunpack.c.h.b16 %v1567
    %v1663 = vunpack.c.l.b16 %v1568
    %v1664 = vunpack.c.h.b16 %v1568
    %v1665 = vunpack.c.l.b16 %v1569
    %v1666 = vunpack.c.h.b16 %v1569
    %v1667 = vunpack.c.l.b16 %v1570
    %v1668 = vunpack.c.h.b16 %v1570
    %v1669 = vpack.c.b16 %v1609, %v1605
    %v1670 = vpack.c.b16 %v1610, %v1606
    %v1671 = vpack.c.b16 %v1611, %v1607
    %v1672 = vpack.c.b16 %v1612, %v1608
    %v1673 = vpack.c.b16 %v1617, %v1613
    %v1674 = vpack.c.b16 %v1618, %v1614
    %v1675 = vpack.c.b16 %v1619, %v1615
    %v1676 = vpack.c.b16 %v1620, %v1616
    %v1677 = vpack.c.b16 %v1625, %v1621
    %v1678 = vpack.c.b16 %v1626, %v1622
    %v1679 = vpack.c.b16 %v1627, %v1623
    %v1680 = vpack.c.b16 %v1628, %v1624
    %v1681 = vpack.c.b16 %v1633, %v1629
    %v1682 = vpack.c.b16 %v1634, %v1630
    %v1683 = vpack.c.b16 %v1635, %v1631
    %v1684 = vpack.c.b16 %v1636, %v1632
    %v1685 = vpack.c.b16 %v1641, %v1637
    %v1686 = vpack.c.b16 %v1642, %v1638
    %v1687 = vpack.c.b16 %v1643, %v1639
    %v1688 = vpack.c.b16 %v1644, %v1640
    %v1689 = vpack.c.b16 %v1649, %v1645
    %v1690 = vpack.c.b16 %v1650, %v1646
    %v1691 = vpack.c.b16 %v1651, %v1647
    %v1692 = vpack.c.b16 %v1652, %v1648
    %v1693 = vpack.c.b16 %v1657, %v1653
    %v1694 = vpack.c.b16 %v1658, %v1654
    %v1695 = vpack.c.b16 %v1659, %v1655
    %v1696 = vpack.c.b16 %v1660, %v1656
    %v1697 = vpack.c.b16 %v1665, %v1661
    %v1698 = vpack.c.b16 %v1666, %v1662
    %v1699 = vpack.c.b16 %v1667, %v1663
    %v1700 = vpack.c.b16 %v1668, %v1664
    %v1734 = vlaneseq
    %v1735 = vshrl.u32 %v1734, 7
    %v1736 = vsub.s32 0, %v1735
    %v1737 = vrot.slane %v1572, %v1736
    %v1738 = vlaneseq
    %v1739 = vshrl.u32 %v1738, 7
    %v1740 = vsub.s32 1, %v1739
    %v1741 = vrot.slane %v1572, %v1740
    %v1742 = vlaneseq
    %v1743 = vshrl.u32 %v1742, 7
    %v1744 = vsub.s32 2, %v1743
    %v1745 = vrot.slane %v1572, %v1744
    %v1746 = vlaneseq
    %v1747 = vshrl.u32 %v1746, 7
    %v1748 = vsub.s32 3, %v1747
    %v1749 = vrot.slane %v1572, %v1748
    %1754 = vmatprep.subr.bf16.mxu0 %v1698
    %1755 = vmatpush1.bf16.msra.mxu0 %v1697
    %1756 = vmatprep.subr.bf16.mxu0 %v1694
    %1757 = vmatpush1.bf16.msra.mxu0 %v1693
    %1758 = vmatprep.subr.bf16.mxu0 %v1690
    %1759 = vmatpush1.bf16.msra.mxu0 %v1689
    %1760 = vmatprep.subr.bf16.mxu0 %v1686
    %1761 = vmatpush1.bf16.msra.mxu0 %v1685
    %1762 = vmatprep.subr.bf16.mxu0 %v1682
    %1763 = vmatpush1.bf16.msra.mxu0 %v1681
    %1764 = vmatprep.subr.bf16.mxu0 %v1678
    %1765 = vmatpush1.bf16.msra.mxu0 %v1677
    %1766 = vmatprep.subr.bf16.mxu0 %v1674
    %1767 = vmatpush1.bf16.msra.mxu0 %v1673
    %1768 = vmatprep.subr.bf16.mxu0 %v1670
    %1769 = vmatpush1.bf16.msra.mxu0 %v1669
    %1770 = vmatprep.subr.bf16.mxu0 0
    %1771 = vmatpush2.bf16.msra.mxu0 0
    %1772 = vmatprep.subr.bf16.mxu0 0
    %1773 = vmatpush2.bf16.msra.mxu0 0
    %1774 = vmatprep.subr.bf16.mxu0 0
    %1775 = vmatpush2.bf16.msra.mxu0 0
    %1776 = vmatprep.subr.bf16.mxu0 0
    %1777 = vmatpush2.bf16.msra.mxu0 0
    %1778 = vmatprep.subr.bf16.mxu0 0
    %1779 = vmatpush2.bf16.msra.mxu0 0
    %1780 = vmatprep.subr.bf16.mxu0 0
    %1781 = vmatpush2.bf16.msra.mxu0 0
    %1782 = vmatprep.subr.bf16.mxu0 0
    %1783 = vmatpush2.bf16.msra.mxu0 0
    %1784 = vmatprep.subr.bf16.mxu0 0
    %1785 = vmatpush2.bf16.msra.mxu0 0
    %1786 = vmatprep.mubr.bf16.mxu0 0
    %1787 = vmatmul.mubr.bf16.gmra.mxu0 %v1571
    %v1788 = vpop.f32.mrf.mxu0
    %v1789 = vadd.f32 %v1737, %v1788
    %v1790 = vpop.f32.mrf.mxu0
    %v1791 = vadd.f32 %v1741, %v1790
    %v1792 = vpop.f32.mrf.mxu0
    %v1793 = vpop.f32.mrf.mxu0
    %1794 = vdwg.mxu0
    %1795 = vmatprep.subr.bf16.mxu0 %v1700
    %1796 = vmatpush1.bf16.msra.mxu0 %v1699
    %1797 = vmatprep.subr.bf16.mxu0 %v1696
    %1798 = vmatpush1.bf16.msra.mxu0 %v1695
    %1799 = vmatprep.subr.bf16.mxu0 %v1692
    %1800 = vmatpush1.bf16.msra.mxu0 %v1691
    %1801 = vmatprep.subr.bf16.mxu0 %v1688
    %1802 = vmatpush1.bf16.msra.mxu0 %v1687
    %1803 = vmatprep.subr.bf16.mxu0 %v1684
    %1804 = vmatpush1.bf16.msra.mxu0 %v1683
    %1805 = vmatprep.subr.bf16.mxu0 %v1680
    %1806 = vmatpush1.bf16.msra.mxu0 %v1679
    %1807 = vmatprep.subr.bf16.mxu0 %v1676
    %1808 = vmatpush1.bf16.msra.mxu0 %v1675
    %1809 = vmatprep.subr.bf16.mxu0 %v1672
    %1810 = vmatpush1.bf16.msra.mxu0 %v1671
    %1811 = vmatprep.subr.bf16.mxu0 0
    %1812 = vmatpush2.bf16.msra.mxu0 0
    %1813 = vmatprep.subr.bf16.mxu0 0
    %1814 = vmatpush2.bf16.msra.mxu0 0
    %1815 = vmatprep.subr.bf16.mxu0 0
    %1816 = vmatpush2.bf16.msra.mxu0 0
    %1817 = vmatprep.subr.bf16.mxu0 0
    %1818 = vmatpush2.bf16.msra.mxu0 0
    %1819 = vmatprep.subr.bf16.mxu0 0
    %1820 = vmatpush2.bf16.msra.mxu0 0
    %1821 = vmatprep.subr.bf16.mxu0 0
    %1822 = vmatpush2.bf16.msra.mxu0 0
    %1823 = vmatprep.subr.bf16.mxu0 0
    %1824 = vmatpush2.bf16.msra.mxu0 0
    %1825 = vmatprep.subr.bf16.mxu0 0
    %1826 = vmatpush2.bf16.msra.mxu0 0
    %1827 = vmatprep.mubr.bf16.mxu0 0
    %1828 = vmatmul.mubr.bf16.gmra.mxu0 %v1571
    %v1829 = vpop.f32.mrf.mxu0
    %v1830 = vadd.f32 %v1745, %v1829
    %v1831 = vpop.f32.mrf.mxu0
    %v1832 = vadd.f32 %v1749, %v1831
    %v1833 = vpop.f32.mrf.mxu0
    %v1834 = vpop.f32.mrf.mxu0
    %1835 = vdwg.mxu0
    %s1836 = scalar_lea.vmem [#allocation9], 256
    %v1837 = vld [vmem:[%s1836] sm:$0xff]
    %v1838 = vld [vmem:[%s1836 + $0x8] sm:$0xff]
    %v1839 = vld [vmem:[%s1836 + $0x10] sm:$0xff]
    %v1840 = vld [vmem:[%s1836 + $0x18] sm:$0xff]
    %v1841 = vld [vmem:[%s1836 + $0x20] sm:$0xff]
    %v1842 = vld [vmem:[%s1836 + $0x28] sm:$0xff]
    %v1843 = vld [vmem:[%s1836 + $0x30] sm:$0xff]
    %v1844 = vld [vmem:[%s1836 + $0x38] sm:$0xff]
    %v1845 = vld [vmem:[%s1836 + $0x40] sm:$0xff]
    %v1846 = vld [vmem:[%s1836 + $0x48] sm:$0xff]
    %v1847 = vld [vmem:[%s1836 + $0x50] sm:$0xff]
    %v1848 = vld [vmem:[%s1836 + $0x58] sm:$0xff]
    %v1849 = vld [vmem:[%s1836 + $0x60] sm:$0xff]
    %v1850 = vld [vmem:[%s1836 + $0x68] sm:$0xff]
    %v1851 = vld [vmem:[%s1836 + $0x70] sm:$0xff]
    %v1852 = vld [vmem:[%s1836 + $0x78] sm:$0xff]
    %v1853 = vld [vmem:[%s1836 + $0x80] sm:$0xff]
    %v1854 = vld [vmem:[%s1836 + $0x88] sm:$0xff]
    %v1855 = vld [vmem:[%s1836 + $0x90] sm:$0xff]
    %v1856 = vld [vmem:[%s1836 + $0x98] sm:$0xff]
    %v1857 = vld [vmem:[%s1836 + $0xa0] sm:$0xff]
    %v1858 = vld [vmem:[%s1836 + $0xa8] sm:$0xff]
    %v1859 = vld [vmem:[%s1836 + $0xb0] sm:$0xff]
    %v1860 = vld [vmem:[%s1836 + $0xb8] sm:$0xff]
    %v1861 = vld [vmem:[%s1836 + $0xc0] sm:$0xff]
    %v1862 = vld [vmem:[%s1836 + $0xc8] sm:$0xff]
    %v1863 = vld [vmem:[%s1836 + $0xd0] sm:$0xff]
    %v1864 = vld [vmem:[%s1836 + $0xd8] sm:$0xff]
    %v1865 = vld [vmem:[%s1836 + $0xe0] sm:$0xff]
    %v1866 = vld [vmem:[%s1836 + $0xe8] sm:$0xff]
    %v1867 = vld [vmem:[%s1836 + $0xf0] sm:$0xff]
    %v1868 = vld [vmem:[%s1836 + $0xf8] sm:$0xff]
    %v1869 = vpack.c.bf16 %v1530, %v1530
    %s1870 = scalar_lea.vmem [#allocation10], 4
    %v1871 = vld [vmem:[%s1870] sm:$0xf]
    %v1904 = vunpack.c.l.b16 %v1837
    %v1905 = vunpack.c.h.b16 %v1837
    %v1906 = vunpack.c.l.b16 %v1838
    %v1907 = vunpack.c.h.b16 %v1838
    %v1908 = vunpack.c.l.b16 %v1839
    %v1909 = vunpack.c.h.b16 %v1839
    %v1910 = vunpack.c.l.b16 %v1840
    %v1911 = vunpack.c.h.b16 %v1840
    %v1912 = vunpack.c.l.b16 %v1841
    %v1913 = vunpack.c.h.b16 %v1841
    %v1914 = vunpack.c.l.b16 %v1842
    %v1915 = vunpack.c.h.b16 %v1842
    %v1916 = vunpack.c.l.b16 %v1843
    %v1917 = vunpack.c.h.b16 %v1843
    %v1918 = vunpack.c.l.b16 %v1844
    %v1919 = vunpack.c.h.b16 %v1844
    %v1920 = vunpack.c.l.b16 %v1845
    %v1921 = vunpack.c.h.b16 %v1845
    %v1922 = vunpack.c.l.b16 %v1846
    %v1923 = vunpack.c.h.b16 %v1846
    %v1924 = vunpack.c.l.b16 %v1847
    %v1925 = vunpack.c.h.b16 %v1847
    %v1926 = vunpack.c.l.b16 %v1848
    %v1927 = vunpack.c.h.b16 %v1848
    %v1928 = vunpack.c.l.b16 %v1849
    %v1929 = vunpack.c.h.b16 %v1849
    %v1930 = vunpack.c.l.b16 %v1850
    %v1931 = vunpack.c.h.b16 %v1850
    %v1932 = vunpack.c.l.b16 %v1851
    %v1933 = vunpack.c.h.b16 %v1851
    %v1934 = vunpack.c.l.b16 %v1852
    %v1935 = vunpack.c.h.b16 %v1852
    %v1936 = vunpack.c.l.b16 %v1853
    %v1937 = vunpack.c.h.b16 %v1853
    %v1938 = vunpack.c.l.b16 %v1854
    %v1939 = vunpack.c.h.b16 %v1854
    %v1940 = vunpack.c.l.b16 %v1855
    %v1941 = vunpack.c.h.b16 %v1855
    %v1942 = vunpack.c.l.b16 %v1856
    %v1943 = vunpack.c.h.b16 %v1856
    %v1944 = vunpack.c.l.b16 %v1857
    %v1945 = vunpack.c.h.b16 %v1857
    %v1946 = vunpack.c.l.b16 %v1858
    %v1947 = vunpack.c.h.b16 %v1858
    %v1948 = vunpack.c.l.b16 %v1859
    %v1949 = vunpack.c.h.b16 %v1859
    %v1950 = vunpack.c.l.b16 %v1860
    %v1951 = vunpack.c.h.b16 %v1860
    %v1952 = vunpack.c.l.b16 %v1861
    %v1953 = vunpack.c.h.b16 %v1861
    %v1954 = vunpack.c.l.b16 %v1862
    %v1955 = vunpack.c.h.b16 %v1862
    %v1956 = vunpack.c.l.b16 %v1863
    %v1957 = vunpack.c.h.b16 %v1863
    %v1958 = vunpack.c.l.b16 %v1864
    %v1959 = vunpack.c.h.b16 %v1864
    %v1960 = vunpack.c.l.b16 %v1865
    %v1961 = vunpack.c.h.b16 %v1865
    %v1962 = vunpack.c.l.b16 %v1866
    %v1963 = vunpack.c.h.b16 %v1866
    %v1964 = vunpack.c.l.b16 %v1867
    %v1965 = vunpack.c.h.b16 %v1867
    %v1966 = vunpack.c.l.b16 %v1868
    %v1967 = vunpack.c.h.b16 %v1868
    %v1968 = vpack.c.b16 %v1908, %v1904
    %v1969 = vpack.c.b16 %v1909, %v1905
    %v1970 = vpack.c.b16 %v1910, %v1906
    %v1971 = vpack.c.b16 %v1911, %v1907
    %v1972 = vpack.c.b16 %v1916, %v1912
    %v1973 = vpack.c.b16 %v1917, %v1913
    %v1974 = vpack.c.b16 %v1918, %v1914
    %v1975 = vpack.c.b16 %v1919, %v1915
    %v1976 = vpack.c.b16 %v1924, %v1920
    %v1977 = vpack.c.b16 %v1925, %v1921
    %v1978 = vpack.c.b16 %v1926, %v1922
    %v1979 = vpack.c.b16 %v1927, %v1923
    %v1980 = vpack.c.b16 %v1932, %v1928
    %v1981 = vpack.c.b16 %v1933, %v1929
    %v1982 = vpack.c.b16 %v1934, %v1930
    %v1983 = vpack.c.b16 %v1935, %v1931
    %v1984 = vpack.c.b16 %v1940, %v1936
    %v1985 = vpack.c.b16 %v1941, %v1937
    %v1986 = vpack.c.b16 %v1942, %v1938
    %v1987 = vpack.c.b16 %v1943, %v1939
    %v1988 = vpack.c.b16 %v1948, %v1944
    %v1989 = vpack.c.b16 %v1949, %v1945
    %v1990 = vpack.c.b16 %v1950, %v1946
    %v1991 = vpack.c.b16 %v1951, %v1947
    %v1992 = vpack.c.b16 %v1956, %v1952
    %v1993 = vpack.c.b16 %v1957, %v1953
    %v1994 = vpack.c.b16 %v1958, %v1954
    %v1995 = vpack.c.b16 %v1959, %v1955
    %v1996 = vpack.c.b16 %v1964, %v1960
    %v1997 = vpack.c.b16 %v1965, %v1961
    %v1998 = vpack.c.b16 %v1966, %v1962
    %v1999 = vpack.c.b16 %v1967, %v1963
    %v2033 = vlaneseq
    %v2034 = vshrl.u32 %v2033, 7
    %v2035 = vsub.s32 0, %v2034
    %v2036 = vrot.slane %v1871, %v2035
    %v2037 = vlaneseq
    %v2038 = vshrl.u32 %v2037, 7
    %v2039 = vsub.s32 1, %v2038
    %v2040 = vrot.slane %v1871, %v2039
    %v2041 = vlaneseq
    %v2042 = vshrl.u32 %v2041, 7
    %v2043 = vsub.s32 2, %v2042
    %v2044 = vrot.slane %v1871, %v2043
    %v2045 = vlaneseq
    %v2046 = vshrl.u32 %v2045, 7
    %v2047 = vsub.s32 3, %v2046
    %v2048 = vrot.slane %v1871, %v2047
    %2053 = vmatprep.subr.bf16.mxu0 %v1997
    %2054 = vmatpush1.bf16.msra.mxu0 %v1996
    %2055 = vmatprep.subr.bf16.mxu0 %v1993
    %2056 = vmatpush1.bf16.msra.mxu0 %v1992
    %2057 = vmatprep.subr.bf16.mxu0 %v1989
    %2058 = vmatpush1.bf16.msra.mxu0 %v1988
    %2059 = vmatprep.subr.bf16.mxu0 %v1985
    %2060 = vmatpush1.bf16.msra.mxu0 %v1984
    %2061 = vmatprep.subr.bf16.mxu0 %v1981
    %2062 = vmatpush1.bf16.msra.mxu0 %v1980
    %2063 = vmatprep.subr.bf16.mxu0 %v1977
    %2064 = vmatpush1.bf16.msra.mxu0 %v1976
    %2065 = vmatprep.subr.bf16.mxu0 %v1973
    %2066 = vmatpush1.bf16.msra.mxu0 %v1972
    %2067 = vmatprep.subr.bf16.mxu0 %v1969
    %2068 = vmatpush1.bf16.msra.mxu0 %v1968
    %2069 = vmatprep.subr.bf16.mxu0 0
    %2070 = vmatpush2.bf16.msra.mxu0 0
    %2071 = vmatprep.subr.bf16.mxu0 0
    %2072 = vmatpush2.bf16.msra.mxu0 0
    %2073 = vmatprep.subr.bf16.mxu0 0
    %2074 = vmatpush2.bf16.msra.mxu0 0
    %2075 = vmatprep.subr.bf16.mxu0 0
    %2076 = vmatpush2.bf16.msra.mxu0 0
    %2077 = vmatprep.subr.bf16.mxu0 0
    %2078 = vmatpush2.bf16.msra.mxu0 0
    %2079 = vmatprep.subr.bf16.mxu0 0
    %2080 = vmatpush2.bf16.msra.mxu0 0
    %2081 = vmatprep.subr.bf16.mxu0 0
    %2082 = vmatpush2.bf16.msra.mxu0 0
    %2083 = vmatprep.subr.bf16.mxu0 0
    %2084 = vmatpush2.bf16.msra.mxu0 0
    %2085 = vmatprep.mubr.bf16.mxu0 0
    %2086 = vmatmul.mubr.bf16.gmra.mxu0 %v1869
    %v2087 = vpop.f32.mrf.mxu0
    %v2088 = vadd.f32 %v2036, %v2087
    %v2089 = vpop.f32.mrf.mxu0
    %v2090 = vadd.f32 %v2040, %v2089
    %v2091 = vpop.f32.mrf.mxu0
    %v2092 = vpop.f32.mrf.mxu0
    %2093 = vdwg.mxu0
    %2094 = vmatprep.subr.bf16.mxu0 %v1999
    %2095 = vmatpush1.bf16.msra.mxu0 %v1998
    %2096 = vmatprep.subr.bf16.mxu0 %v1995
    %2097 = vmatpush1.bf16.msra.mxu0 %v1994
    %2098 = vmatprep.subr.bf16.mxu0 %v1991
    %2099 = vmatpush1.bf16.msra.mxu0 %v1990
    %2100 = vmatprep.subr.bf16.mxu0 %v1987
    %2101 = vmatpush1.bf16.msra.mxu0 %v1986
    %2102 = vmatprep.subr.bf16.mxu0 %v1983
    %2103 = vmatpush1.bf16.msra.mxu0 %v1982
    %2104 = vmatprep.subr.bf16.mxu0 %v1979
    %2105 = vmatpush1.bf16.msra.mxu0 %v1978
    %2106 = vmatprep.subr.bf16.mxu0 %v1975
    %2107 = vmatpush1.bf16.msra.mxu0 %v1974
    %2108 = vmatprep.subr.bf16.mxu0 %v1971
    %2109 = vmatpush1.bf16.msra.mxu0 %v1970
    %2110 = vmatprep.subr.bf16.mxu0 0
    %2111 = vmatpush2.bf16.msra.mxu0 0
    %2112 = vmatprep.subr.bf16.mxu0 0
    %2113 = vmatpush2.bf16.msra.mxu0 0
    %2114 = vmatprep.subr.bf16.mxu0 0
    %2115 = vmatpush2.bf16.msra.mxu0 0
    %2116 = vmatprep.subr.bf16.mxu0 0
    %2117 = vmatpush2.bf16.msra.mxu0 0
    %2118 = vmatprep.subr.bf16.mxu0 0
    %2119 = vmatpush2.bf16.msra.mxu0 0
    %2120 = vmatprep.subr.bf16.mxu0 0
    %2121 = vmatpush2.bf16.msra.mxu0 0
    %2122 = vmatprep.subr.bf16.mxu0 0
    %2123 = vmatpush2.bf16.msra.mxu0 0
    %2124 = vmatprep.subr.bf16.mxu0 0
    %2125 = vmatpush2.bf16.msra.mxu0 0
    %2126 = vmatprep.mubr.bf16.mxu0 0
    %2127 = vmatmul.mubr.bf16.gmra.mxu0 %v1869
    %v2128 = vpop.f32.mrf.mxu0
    %v2129 = vadd.f32 %v2044, %v2128
    %v2130 = vpop.f32.mrf.mxu0
    %v2131 = vadd.f32 %v2048, %v2130
    %v2132 = vpop.f32.mrf.mxu0
    %v2133 = vpop.f32.mrf.mxu0
    %2134 = vdwg.mxu0
    %s2135 = scalar_lea.vmem [#allocation9], 512
    %v2136 = vld [vmem:[%s2135] sm:$0xff]
    %v2137 = vld [vmem:[%s2135 + $0x8] sm:$0xff]
    %v2138 = vld [vmem:[%s2135 + $0x10] sm:$0xff]
    %v2139 = vld [vmem:[%s2135 + $0x18] sm:$0xff]
    %v2140 = vld [vmem:[%s2135 + $0x20] sm:$0xff]
    %v2141 = vld [vmem:[%s2135 + $0x28] sm:$0xff]
    %v2142 = vld [vmem:[%s2135 + $0x30] sm:$0xff]
    %v2143 = vld [vmem:[%s2135 + $0x38] sm:$0xff]
    %v2144 = vld [vmem:[%s2135 + $0x40] sm:$0xff]
    %v2145 = vld [vmem:[%s2135 + $0x48] sm:$0xff]
    %v2146 = vld [vmem:[%s2135 + $0x50] sm:$0xff]
    %v2147 = vld [vmem:[%s2135 + $0x58] sm:$0xff]
    %v2148 = vld [vmem:[%s2135 + $0x60] sm:$0xff]
    %v2149 = vld [vmem:[%s2135 + $0x68] sm:$0xff]
    %v2150 = vld [vmem:[%s2135 + $0x70] sm:$0xff]
    %v2151 = vld [vmem:[%s2135 + $0x78] sm:$0xff]
    %v2152 = vld [vmem:[%s2135 + $0x80] sm:$0xff]
    %v2153 = vld [vmem:[%s2135 + $0x88] sm:$0xff]
    %v2154 = vld [vmem:[%s2135 + $0x90] sm:$0xff]
    %v2155 = vld [vmem:[%s2135 + $0x98] sm:$0xff]
    %v2156 = vld [vmem:[%s2135 + $0xa0] sm:$0xff]
    %v2157 = vld [vmem:[%s2135 + $0xa8] sm:$0xff]
    %v2158 = vld [vmem:[%s2135 + $0xb0] sm:$0xff]
    %v2159 = vld [vmem:[%s2135 + $0xb8] sm:$0xff]
    %v2160 = vld [vmem:[%s2135 + $0xc0] sm:$0xff]
    %v2161 = vld [vmem:[%s2135 + $0xc8] sm:$0xff]
    %v2162 = vld [vmem:[%s2135 + $0xd0] sm:$0xff]
    %v2163 = vld [vmem:[%s2135 + $0xd8] sm:$0xff]
    %v2164 = vld [vmem:[%s2135 + $0xe0] sm:$0xff]
    %v2165 = vld [vmem:[%s2135 + $0xe8] sm:$0xff]
    %v2166 = vld [vmem:[%s2135 + $0xf0] sm:$0xff]
    %v2167 = vld [vmem:[%s2135 + $0xf8] sm:$0xff]
    %v2168 = vpack.c.bf16 %v1531, %v1531
    %s2169 = scalar_lea.vmem [#allocation10], 8
    %v2170 = vld [vmem:[%s2169] sm:$0xf]
    %v2203 = vunpack.c.l.b16 %v2136
    %v2204 = vunpack.c.h.b16 %v2136
    %v2205 = vunpack.c.l.b16 %v2137
    %v2206 = vunpack.c.h.b16 %v2137
    %v2207 = vunpack.c.l.b16 %v2138
    %v2208 = vunpack.c.h.b16 %v2138
    %v2209 = vunpack.c.l.b16 %v2139
    %v2210 = vunpack.c.h.b16 %v2139
    %v2211 = vunpack.c.l.b16 %v2140
    %v2212 = vunpack.c.h.b16 %v2140
    %v2213 = vunpack.c.l.b16 %v2141
    %v2214 = vunpack.c.h.b16 %v2141
    %v2215 = vunpack.c.l.b16 %v2142
    %v2216 = vunpack.c.h.b16 %v2142
    %v2217 = vunpack.c.l.b16 %v2143
    %v2218 = vunpack.c.h.b16 %v2143
    %v2219 = vunpack.c.l.b16 %v2144
    %v2220 = vunpack.c.h.b16 %v2144
    %v2221 = vunpack.c.l.b16 %v2145
    %v2222 = vunpack.c.h.b16 %v2145
    %v2223 = vunpack.c.l.b16 %v2146
    %v2224 = vunpack.c.h.b16 %v2146
    %v2225 = vunpack.c.l.b16 %v2147
    %v2226 = vunpack.c.h.b16 %v2147
    %v2227 = vunpack.c.l.b16 %v2148
    %v2228 = vunpack.c.h.b16 %v2148
    %v2229 = vunpack.c.l.b16 %v2149
    %v2230 = vunpack.c.h.b16 %v2149
    %v2231 = vunpack.c.l.b16 %v2150
    %v2232 = vunpack.c.h.b16 %v2150
    %v2233 = vunpack.c.l.b16 %v2151
    %v2234 = vunpack.c.h.b16 %v2151
    %v2235 = vunpack.c.l.b16 %v2152
    %v2236 = vunpack.c.h.b16 %v2152
    %v2237 = vunpack.c.l.b16 %v2153
    %v2238 = vunpack.c.h.b16 %v2153
    %v2239 = vunpack.c.l.b16 %v2154
    %v2240 = vunpack.c.h.b16 %v2154
    %v2241 = vunpack.c.l.b16 %v2155
    %v2242 = vunpack.c.h.b16 %v2155
    %v2243 = vunpack.c.l.b16 %v2156
    %v2244 = vunpack.c.h.b16 %v2156
    %v2245 = vunpack.c.l.b16 %v2157
    %v2246 = vunpack.c.h.b16 %v2157
    %v2247 = vunpack.c.l.b16 %v2158
    %v2248 = vunpack.c.h.b16 %v2158
    %v2249 = vunpack.c.l.b16 %v2159
    %v2250 = vunpack.c.h.b16 %v2159
    %v2251 = vunpack.c.l.b16 %v2160
    %v2252 = vunpack.c.h.b16 %v2160
    %v2253 = vunpack.c.l.b16 %v2161
    %v2254 = vunpack.c.h.b16 %v2161
    %v2255 = vunpack.c.l.b16 %v2162
    %v2256 = vunpack.c.h.b16 %v2162
    %v2257 = vunpack.c.l.b16 %v2163
    %v2258 = vunpack.c.h.b16 %v2163
    %v2259 = vunpack.c.l.b16 %v2164
    %v2260 = vunpack.c.h.b16 %v2164
    %v2261 = vunpack.c.l.b16 %v2165
    %v2262 = vunpack.c.h.b16 %v2165
    %v2263 = vunpack.c.l.b16 %v2166
    %v2264 = vunpack.c.h.b16 %v2166
    %v2265 = vunpack.c.l.b16 %v2167
    %v2266 = vunpack.c.h.b16 %v2167
    %v2267 = vpack.c.b16 %v2207, %v2203
    %v2268 = vpack.c.b16 %v2208, %v2204
    %v2269 = vpack.c.b16 %v2209, %v2205
    %v2270 = vpack.c.b16 %v2210, %v2206
    %v2271 = vpack.c.b16 %v2215, %v2211
    %v2272 = vpack.c.b16 %v2216, %v2212
    %v2273 = vpack.c.b16 %v2217, %v2213
    %v2274 = vpack.c.b16 %v2218, %v2214
    %v2275 = vpack.c.b16 %v2223, %v2219
    %v2276 = vpack.c.b16 %v2224, %v2220
    %v2277 = vpack.c.b16 %v2225, %v2221
    %v2278 = vpack.c.b16 %v2226, %v2222
    %v2279 = vpack.c.b16 %v2231, %v2227
    %v2280 = vpack.c.b16 %v2232, %v2228
    %v2281 = vpack.c.b16 %v2233, %v2229
    %v2282 = vpack.c.b16 %v2234, %v2230
    %v2283 = vpack.c.b16 %v2239, %v2235
    %v2284 = vpack.c.b16 %v2240, %v2236
    %v2285 = vpack.c.b16 %v2241, %v2237
    %v2286 = vpack.c.b16 %v2242, %v2238
    %v2287 = vpack.c.b16 %v2247, %v2243
    %v2288 = vpack.c.b16 %v2248, %v2244
    %v2289 = vpack.c.b16 %v2249, %v2245
    %v2290 = vpack.c.b16 %v2250, %v2246
    %v2291 = vpack.c.b16 %v2255, %v2251
    %v2292 = vpack.c.b16 %v2256, %v2252
    %v2293 = vpack.c.b16 %v2257, %v2253
    %v2294 = vpack.c.b16 %v2258, %v2254
    %v2295 = vpack.c.b16 %v2263, %v2259
    %v2296 = vpack.c.b16 %v2264, %v2260
    %v2297 = vpack.c.b16 %v2265, %v2261
    %v2298 = vpack.c.b16 %v2266, %v2262
    %v2332 = vlaneseq
    %v2333 = vshrl.u32 %v2332, 7
    %v2334 = vsub.s32 0, %v2333
    %v2335 = vrot.slane %v2170, %v2334
    %v2336 = vlaneseq
    %v2337 = vshrl.u32 %v2336, 7
    %v2338 = vsub.s32 1, %v2337
    %v2339 = vrot.slane %v2170, %v2338
    %v2340 = vlaneseq
    %v2341 = vshrl.u32 %v2340, 7
    %v2342 = vsub.s32 2, %v2341
    %v2343 = vrot.slane %v2170, %v2342
    %v2344 = vlaneseq
    %v2345 = vshrl.u32 %v2344, 7
    %v2346 = vsub.s32 3, %v2345
    %v2347 = vrot.slane %v2170, %v2346
    %2352 = vmatprep.subr.bf16.mxu0 %v2296
    %2353 = vmatpush1.bf16.msra.mxu0 %v2295
    %2354 = vmatprep.subr.bf16.mxu0 %v2292
    %2355 = vmatpush1.bf16.msra.mxu0 %v2291
    %2356 = vmatprep.subr.bf16.mxu0 %v2288
    %2357 = vmatpush1.bf16.msra.mxu0 %v2287
    %2358 = vmatprep.subr.bf16.mxu0 %v2284
    %2359 = vmatpush1.bf16.msra.mxu0 %v2283
    %2360 = vmatprep.subr.bf16.mxu0 %v2280
    %2361 = vmatpush1.bf16.msra.mxu0 %v2279
    %2362 = vmatprep.subr.bf16.mxu0 %v2276
    %2363 = vmatpush1.bf16.msra.mxu0 %v2275
    %2364 = vmatprep.subr.bf16.mxu0 %v2272
    %2365 = vmatpush1.bf16.msra.mxu0 %v2271
    %2366 = vmatprep.subr.bf16.mxu0 %v2268
    %2367 = vmatpush1.bf16.msra.mxu0 %v2267
    %2368 = vmatprep.subr.bf16.mxu0 0
    %2369 = vmatpush2.bf16.msra.mxu0 0
    %2370 = vmatprep.subr.bf16.mxu0 0
    %2371 = vmatpush2.bf16.msra.mxu0 0
    %2372 = vmatprep.subr.bf16.mxu0 0
    %2373 = vmatpush2.bf16.msra.mxu0 0
    %2374 = vmatprep.subr.bf16.mxu0 0
    %2375 = vmatpush2.bf16.msra.mxu0 0
    %2376 = vmatprep.subr.bf16.mxu0 0
    %2377 = vmatpush2.bf16.msra.mxu0 0
    %2378 = vmatprep.subr.bf16.mxu0 0
    %2379 = vmatpush2.bf16.msra.mxu0 0
    %2380 = vmatprep.subr.bf16.mxu0 0
    %2381 = vmatpush2.bf16.msra.mxu0 0
    %2382 = vmatprep.subr.bf16.mxu0 0
    %2383 = vmatpush2.bf16.msra.mxu0 0
    %2384 = vmatprep.mubr.bf16.mxu0 0
    %2385 = vmatmul.mubr.bf16.gmra.mxu0 %v2168
    %v2386 = vpop.f32.mrf.mxu0
    %v2387 = vadd.f32 %v2335, %v2386
    %v2388 = vpop.f32.mrf.mxu0
    %v2389 = vadd.f32 %v2339, %v2388
    %v2390 = vpop.f32.mrf.mxu0
    %v2391 = vpop.f32.mrf.mxu0
    %2392 = vdwg.mxu0
    %2393 = vmatprep.subr.bf16.mxu0 %v2298
    %2394 = vmatpush1.bf16.msra.mxu0 %v2297
    %2395 = vmatprep.subr.bf16.mxu0 %v2294
    %2396 = vmatpush1.bf16.msra.mxu0 %v2293
    %2397 = vmatprep.subr.bf16.mxu0 %v2290
    %2398 = vmatpush1.bf16.msra.mxu0 %v2289
    %2399 = vmatprep.subr.bf16.mxu0 %v2286
    %2400 = vmatpush1.bf16.msra.mxu0 %v2285
    %2401 = vmatprep.subr.bf16.mxu0 %v2282
    %2402 = vmatpush1.bf16.msra.mxu0 %v2281
    %2403 = vmatprep.subr.bf16.mxu0 %v2278
    %2404 = vmatpush1.bf16.msra.mxu0 %v2277
    %2405 = vmatprep.subr.bf16.mxu0 %v2274
    %2406 = vmatpush1.bf16.msra.mxu0 %v2273
    %2407 = vmatprep.subr.bf16.mxu0 %v2270
    %2408 = vmatpush1.bf16.msra.mxu0 %v2269
    %2409 = vmatprep.subr.bf16.mxu0 0
    %2410 = vmatpush2.bf16.msra.mxu0 0
    %2411 = vmatprep.subr.bf16.mxu0 0
    %2412 = vmatpush2.bf16.msra.mxu0 0
    %2413 = vmatprep.subr.bf16.mxu0 0
    %2414 = vmatpush2.bf16.msra.mxu0 0
    %2415 = vmatprep.subr.bf16.mxu0 0
    %2416 = vmatpush2.bf16.msra.mxu0 0
    %2417 = vmatprep.subr.bf16.mxu0 0
    %2418 = vmatpush2.bf16.msra.mxu0 0
    %2419 = vmatprep.subr.bf16.mxu0 0
    %2420 = vmatpush2.bf16.msra.mxu0 0
    %2421 = vmatprep.subr.bf16.mxu0 0
    %2422 = vmatpush2.bf16.msra.mxu0 0
    %2423 = vmatprep.subr.bf16.mxu0 0
    %2424 = vmatpush2.bf16.msra.mxu0 0
    %2425 = vmatprep.mubr.bf16.mxu0 0
    %2426 = vmatmul.mubr.bf16.gmra.mxu0 %v2168
    %v2427 = vpop.f32.mrf.mxu0
    %v2428 = vadd.f32 %v2343, %v2427
    %v2429 = vpop.f32.mrf.mxu0
    %v2430 = vadd.f32 %v2347, %v2429
    %v2431 = vpop.f32.mrf.mxu0
    %v2432 = vpop.f32.mrf.mxu0
    %2433 = vdwg.mxu0
    %s2434 = scalar_lea.vmem [#allocation9], 768
    %v2435 = vld [vmem:[%s2434] sm:$0xff]
    %v2436 = vld [vmem:[%s2434 + $0x8] sm:$0xff]
    %v2437 = vld [vmem:[%s2434 + $0x10] sm:$0xff]
    %v2438 = vld [vmem:[%s2434 + $0x18] sm:$0xff]
    %v2439 = vld [vmem:[%s2434 + $0x20] sm:$0xff]
    %v2440 = vld [vmem:[%s2434 + $0x28] sm:$0xff]
    %v2441 = vld [vmem:[%s2434 + $0x30] sm:$0xff]
    %v2442 = vld [vmem:[%s2434 + $0x38] sm:$0xff]
    %v2443 = vld [vmem:[%s2434 + $0x40] sm:$0xff]
    %v2444 = vld [vmem:[%s2434 + $0x48] sm:$0xff]
    %v2445 = vld [vmem:[%s2434 + $0x50] sm:$0xff]
    %v2446 = vld [vmem:[%s2434 + $0x58] sm:$0xff]
    %v2447 = vld [vmem:[%s2434 + $0x60] sm:$0xff]
    %v2448 = vld [vmem:[%s2434 + $0x68] sm:$0xff]
    %v2449 = vld [vmem:[%s2434 + $0x70] sm:$0xff]
    %v2450 = vld [vmem:[%s2434 + $0x78] sm:$0xff]
    %v2451 = vld [vmem:[%s2434 + $0x80] sm:$0xff]
    %v2452 = vld [vmem:[%s2434 + $0x88] sm:$0xff]
    %v2453 = vld [vmem:[%s2434 + $0x90] sm:$0xff]
    %v2454 = vld [vmem:[%s2434 + $0x98] sm:$0xff]
    %v2455 = vld [vmem:[%s2434 + $0xa0] sm:$0xff]
    %v2456 = vld [vmem:[%s2434 + $0xa8] sm:$0xff]
    %v2457 = vld [vmem:[%s2434 + $0xb0] sm:$0xff]
    %v2458 = vld [vmem:[%s2434 + $0xb8] sm:$0xff]
    %v2459 = vld [vmem:[%s2434 + $0xc0] sm:$0xff]
    %v2460 = vld [vmem:[%s2434 + $0xc8] sm:$0xff]
    %v2461 = vld [vmem:[%s2434 + $0xd0] sm:$0xff]
    %v2462 = vld [vmem:[%s2434 + $0xd8] sm:$0xff]
    %v2463 = vld [vmem:[%s2434 + $0xe0] sm:$0xff]
    %v2464 = vld [vmem:[%s2434 + $0xe8] sm:$0xff]
    %v2465 = vld [vmem:[%s2434 + $0xf0] sm:$0xff]
    %v2466 = vld [vmem:[%s2434 + $0xf8] sm:$0xff]
    %v2467 = vpack.c.bf16 %v1532, %v1532
    %s2468 = scalar_lea.vmem [#allocation10], 12
    %v2469 = vld [vmem:[%s2468] sm:$0xf]
    %v2502 = vunpack.c.l.b16 %v2435
    %v2503 = vunpack.c.h.b16 %v2435
    %v2504 = vunpack.c.l.b16 %v2436
    %v2505 = vunpack.c.h.b16 %v2436
    %v2506 = vunpack.c.l.b16 %v2437
    %v2507 = vunpack.c.h.b16 %v2437
    %v2508 = vunpack.c.l.b16 %v2438
    %v2509 = vunpack.c.h.b16 %v2438
    %v2510 = vunpack.c.l.b16 %v2439
    %v2511 = vunpack.c.h.b16 %v2439
    %v2512 = vunpack.c.l.b16 %v2440
    %v2513 = vunpack.c.h.b16 %v2440
    %v2514 = vunpack.c.l.b16 %v2441
    %v2515 = vunpack.c.h.b16 %v2441
    %v2516 = vunpack.c.l.b16 %v2442
    %v2517 = vunpack.c.h.b16 %v2442
    %v2518 = vunpack.c.l.b16 %v2443
    %v2519 = vunpack.c.h.b16 %v2443
    %v2520 = vunpack.c.l.b16 %v2444
    %v2521 = vunpack.c.h.b16 %v2444
    %v2522 = vunpack.c.l.b16 %v2445
    %v2523 = vunpack.c.h.b16 %v2445
    %v2524 = vunpack.c.l.b16 %v2446
    %v2525 = vunpack.c.h.b16 %v2446
    %v2526 = vunpack.c.l.b16 %v2447
    %v2527 = vunpack.c.h.b16 %v2447
    %v2528 = vunpack.c.l.b16 %v2448
    %v2529 = vunpack.c.h.b16 %v2448
    %v2530 = vunpack.c.l.b16 %v2449
    %v2531 = vunpack.c.h.b16 %v2449
    %v2532 = vunpack.c.l.b16 %v2450
    %v2533 = vunpack.c.h.b16 %v2450
    %v2534 = vunpack.c.l.b16 %v2451
    %v2535 = vunpack.c.h.b16 %v2451
    %v2536 = vunpack.c.l.b16 %v2452
    %v2537 = vunpack.c.h.b16 %v2452
    %v2538 = vunpack.c.l.b16 %v2453
    %v2539 = vunpack.c.h.b16 %v2453
    %v2540 = vunpack.c.l.b16 %v2454
    %v2541 = vunpack.c.h.b16 %v2454
    %v2542 = vunpack.c.l.b16 %v2455
    %v2543 = vunpack.c.h.b16 %v2455
    %v2544 = vunpack.c.l.b16 %v2456
    %v2545 = vunpack.c.h.b16 %v2456
    %v2546 = vunpack.c.l.b16 %v2457
    %v2547 = vunpack.c.h.b16 %v2457
    %v2548 = vunpack.c.l.b16 %v2458
    %v2549 = vunpack.c.h.b16 %v2458
    %v2550 = vunpack.c.l.b16 %v2459
    %v2551 = vunpack.c.h.b16 %v2459
    %v2552 = vunpack.c.l.b16 %v2460
    %v2553 = vunpack.c.h.b16 %v2460
    %v2554 = vunpack.c.l.b16 %v2461
    %v2555 = vunpack.c.h.b16 %v2461
    %v2556 = vunpack.c.l.b16 %v2462
    %v2557 = vunpack.c.h.b16 %v2462
    %v2558 = vunpack.c.l.b16 %v2463
    %v2559 = vunpack.c.h.b16 %v2463
    %v2560 = vunpack.c.l.b16 %v2464
    %v2561 = vunpack.c.h.b16 %v2464
    %v2562 = vunpack.c.l.b16 %v2465
    %v2563 = vunpack.c.h.b16 %v2465
    %v2564 = vunpack.c.l.b16 %v2466
    %v2565 = vunpack.c.h.b16 %v2466
    %v2566 = vpack.c.b16 %v2506, %v2502
    %v2567 = vpack.c.b16 %v2507, %v2503
    %v2568 = vpack.c.b16 %v2508, %v2504
    %v2569 = vpack.c.b16 %v2509, %v2505
    %v2570 = vpack.c.b16 %v2514, %v2510
    %v2571 = vpack.c.b16 %v2515, %v2511
    %v2572 = vpack.c.b16 %v2516, %v2512
    %v2573 = vpack.c.b16 %v2517, %v2513
    %v2574 = vpack.c.b16 %v2522, %v2518
    %v2575 = vpack.c.b16 %v2523, %v2519
    %v2576 = vpack.c.b16 %v2524, %v2520
    %v2577 = vpack.c.b16 %v2525, %v2521
    %v2578 = vpack.c.b16 %v2530, %v2526
    %v2579 = vpack.c.b16 %v2531, %v2527
    %v2580 = vpack.c.b16 %v2532, %v2528
    %v2581 = vpack.c.b16 %v2533, %v2529
    %v2582 = vpack.c.b16 %v2538, %v2534
    %v2583 = vpack.c.b16 %v2539, %v2535
    %v2584 = vpack.c.b16 %v2540, %v2536
    %v2585 = vpack.c.b16 %v2541, %v2537
    %v2586 = vpack.c.b16 %v2546, %v2542
    %v2587 = vpack.c.b16 %v2547, %v2543
    %v2588 = vpack.c.b16 %v2548, %v2544
    %v2589 = vpack.c.b16 %v2549, %v2545
    %v2590 = vpack.c.b16 %v2554, %v2550
    %v2591 = vpack.c.b16 %v2555, %v2551
    %v2592 = vpack.c.b16 %v2556, %v2552
    %v2593 = vpack.c.b16 %v2557, %v2553
    %v2594 = vpack.c.b16 %v2562, %v2558
    %v2595 = vpack.c.b16 %v2563, %v2559
    %v2596 = vpack.c.b16 %v2564, %v2560
    %v2597 = vpack.c.b16 %v2565, %v2561
    %v2631 = vlaneseq
    %v2632 = vshrl.u32 %v2631, 7
    %v2633 = vsub.s32 0, %v2632
    %v2634 = vrot.slane %v2469, %v2633
    %v2635 = vlaneseq
    %v2636 = vshrl.u32 %v2635, 7
    %v2637 = vsub.s32 1, %v2636
    %v2638 = vrot.slane %v2469, %v2637
    %v2639 = vlaneseq
    %v2640 = vshrl.u32 %v2639, 7
    %v2641 = vsub.s32 2, %v2640
    %v2642 = vrot.slane %v2469, %v2641
    %v2643 = vlaneseq
    %v2644 = vshrl.u32 %v2643, 7
    %v2645 = vsub.s32 3, %v2644
    %v2646 = vrot.slane %v2469, %v2645
    %2651 = vmatprep.subr.bf16.mxu0 %v2595
    %2652 = vmatpush1.bf16.msra.mxu0 %v2594
    %2653 = vmatprep.subr.bf16.mxu0 %v2591
    %2654 = vmatpush1.bf16.msra.mxu0 %v2590
    %2655 = vmatprep.subr.bf16.mxu0 %v2587
    %2656 = vmatpush1.bf16.msra.mxu0 %v2586
    %2657 = vmatprep.subr.bf16.mxu0 %v2583
    %2658 = vmatpush1.bf16.msra.mxu0 %v2582
    %2659 = vmatprep.subr.bf16.mxu0 %v2579
    %2660 = vmatpush1.bf16.msra.mxu0 %v2578
    %2661 = vmatprep.subr.bf16.mxu0 %v2575
    %2662 = vmatpush1.bf16.msra.mxu0 %v2574
    %2663 = vmatprep.subr.bf16.mxu0 %v2571
    %2664 = vmatpush1.bf16.msra.mxu0 %v2570
    %2665 = vmatprep.subr.bf16.mxu0 %v2567
    %2666 = vmatpush1.bf16.msra.mxu0 %v2566
    %2667 = vmatprep.subr.bf16.mxu0 0
    %2668 = vmatpush2.bf16.msra.mxu0 0
    %2669 = vmatprep.subr.bf16.mxu0 0
    %2670 = vmatpush2.bf16.msra.mxu0 0
    %2671 = vmatprep.subr.bf16.mxu0 0
    %2672 = vmatpush2.bf16.msra.mxu0 0
    %2673 = vmatprep.subr.bf16.mxu0 0
    %2674 = vmatpush2.bf16.msra.mxu0 0
    %2675 = vmatprep.subr.bf16.mxu0 0
    %2676 = vmatpush2.bf16.msra.mxu0 0
    %2677 = vmatprep.subr.bf16.mxu0 0
    %2678 = vmatpush2.bf16.msra.mxu0 0
    %2679 = vmatprep.subr.bf16.mxu0 0
    %2680 = vmatpush2.bf16.msra.mxu0 0
    %2681 = vmatprep.subr.bf16.mxu0 0
    %2682 = vmatpush2.bf16.msra.mxu0 0
    %2683 = vmatprep.mubr.bf16.mxu0 0
    %2684 = vmatmul.mubr.bf16.gmra.mxu0 %v2467
    %v2685 = vpop.f32.mrf.mxu0
    %v2686 = vadd.f32 %v2634, %v2685
    %v2687 = vpop.f32.mrf.mxu0
    %v2688 = vadd.f32 %v2638, %v2687
    %v2689 = vpop.f32.mrf.mxu0
    %v2690 = vpop.f32.mrf.mxu0
    %2691 = vdwg.mxu0
    %2692 = vmatprep.subr.bf16.mxu0 %v2597
    %2693 = vmatpush1.bf16.msra.mxu0 %v2596
    %2694 = vmatprep.subr.bf16.mxu0 %v2593
    %2695 = vmatpush1.bf16.msra.mxu0 %v2592
    %2696 = vmatprep.subr.bf16.mxu0 %v2589
    %2697 = vmatpush1.bf16.msra.mxu0 %v2588
    %2698 = vmatprep.subr.bf16.mxu0 %v2585
    %2699 = vmatpush1.bf16.msra.mxu0 %v2584
    %2700 = vmatprep.subr.bf16.mxu0 %v2581
    %2701 = vmatpush1.bf16.msra.mxu0 %v2580
    %2702 = vmatprep.subr.bf16.mxu0 %v2577
    %2703 = vmatpush1.bf16.msra.mxu0 %v2576
    %2704 = vmatprep.subr.bf16.mxu0 %v2573
    %2705 = vmatpush1.bf16.msra.mxu0 %v2572
    %2706 = vmatprep.subr.bf16.mxu0 %v2569
    %2707 = vmatpush1.bf16.msra.mxu0 %v2568
    %2708 = vmatprep.subr.bf16.mxu0 0
    %2709 = vmatpush2.bf16.msra.mxu0 0
    %2710 = vmatprep.subr.bf16.mxu0 0
    %2711 = vmatpush2.bf16.msra.mxu0 0
    %2712 = vmatprep.subr.bf16.mxu0 0
    %2713 = vmatpush2.bf16.msra.mxu0 0
    %2714 = vmatprep.subr.bf16.mxu0 0
    %2715 = vmatpush2.bf16.msra.mxu0 0
    %2716 = vmatprep.subr.bf16.mxu0 0
    %2717 = vmatpush2.bf16.msra.mxu0 0
    %2718 = vmatprep.subr.bf16.mxu0 0
    %2719 = vmatpush2.bf16.msra.mxu0 0
    %2720 = vmatprep.subr.bf16.mxu0 0
    %2721 = vmatpush2.bf16.msra.mxu0 0
    %2722 = vmatprep.subr.bf16.mxu0 0
    %2723 = vmatpush2.bf16.msra.mxu0 0
    %2724 = vmatprep.mubr.bf16.mxu0 0
    %2725 = vmatmul.mubr.bf16.gmra.mxu0 %v2467
    %v2726 = vpop.f32.mrf.mxu0
    %v2727 = vadd.f32 %v2642, %v2726
    %v2728 = vpop.f32.mrf.mxu0
    %v2729 = vadd.f32 %v2646, %v2728
    %v2730 = vpop.f32.mrf.mxu0
    %v2731 = vpop.f32.mrf.mxu0
    %2732 = vdwg.mxu0
    %s2733 = scalar_lea.vmem [#allocation9], 1024
    %v2734 = vld [vmem:[%s2733] sm:$0xff]
    %v2735 = vld [vmem:[%s2733 + $0x8] sm:$0xff]
    %v2736 = vld [vmem:[%s2733 + $0x10] sm:$0xff]
    %v2737 = vld [vmem:[%s2733 + $0x18] sm:$0xff]
    %v2738 = vld [vmem:[%s2733 + $0x20] sm:$0xff]
    %v2739 = vld [vmem:[%s2733 + $0x28] sm:$0xff]
    %v2740 = vld [vmem:[%s2733 + $0x30] sm:$0xff]
    %v2741 = vld [vmem:[%s2733 + $0x38] sm:$0xff]
    %v2742 = vld [vmem:[%s2733 + $0x40] sm:$0xff]
    %v2743 = vld [vmem:[%s2733 + $0x48] sm:$0xff]
    %v2744 = vld [vmem:[%s2733 + $0x50] sm:$0xff]
    %v2745 = vld [vmem:[%s2733 + $0x58] sm:$0xff]
    %v2746 = vld [vmem:[%s2733 + $0x60] sm:$0xff]
    %v2747 = vld [vmem:[%s2733 + $0x68] sm:$0xff]
    %v2748 = vld [vmem:[%s2733 + $0x70] sm:$0xff]
    %v2749 = vld [vmem:[%s2733 + $0x78] sm:$0xff]
    %v2750 = vld [vmem:[%s2733 + $0x80] sm:$0xff]
    %v2751 = vld [vmem:[%s2733 + $0x88] sm:$0xff]
    %v2752 = vld [vmem:[%s2733 + $0x90] sm:$0xff]
    %v2753 = vld [vmem:[%s2733 + $0x98] sm:$0xff]
    %v2754 = vld [vmem:[%s2733 + $0xa0] sm:$0xff]
    %v2755 = vld [vmem:[%s2733 + $0xa8] sm:$0xff]
    %v2756 = vld [vmem:[%s2733 + $0xb0] sm:$0xff]
    %v2757 = vld [vmem:[%s2733 + $0xb8] sm:$0xff]
    %v2758 = vld [vmem:[%s2733 + $0xc0] sm:$0xff]
    %v2759 = vld [vmem:[%s2733 + $0xc8] sm:$0xff]
    %v2760 = vld [vmem:[%s2733 + $0xd0] sm:$0xff]
    %v2761 = vld [vmem:[%s2733 + $0xd8] sm:$0xff]
    %v2762 = vld [vmem:[%s2733 + $0xe0] sm:$0xff]
    %v2763 = vld [vmem:[%s2733 + $0xe8] sm:$0xff]
    %v2764 = vld [vmem:[%s2733 + $0xf0] sm:$0xff]
    %v2765 = vld [vmem:[%s2733 + $0xf8] sm:$0xff]
    %v2766 = vpack.c.bf16 %v1533, %v1533
    %s2767 = scalar_lea.vmem [#allocation10], 16
    %v2768 = vld [vmem:[%s2767] sm:$0xf]
    %v2801 = vunpack.c.l.b16 %v2734
    %v2802 = vunpack.c.h.b16 %v2734
    %v2803 = vunpack.c.l.b16 %v2735
    %v2804 = vunpack.c.h.b16 %v2735
    %v2805 = vunpack.c.l.b16 %v2736
    %v2806 = vunpack.c.h.b16 %v2736
    %v2807 = vunpack.c.l.b16 %v2737
    %v2808 = vunpack.c.h.b16 %v2737
    %v2809 = vunpack.c.l.b16 %v2738
    %v2810 = vunpack.c.h.b16 %v2738
    %v2811 = vunpack.c.l.b16 %v2739
    %v2812 = vunpack.c.h.b16 %v2739
    %v2813 = vunpack.c.l.b16 %v2740
    %v2814 = vunpack.c.h.b16 %v2740
    %v2815 = vunpack.c.l.b16 %v2741
    %v2816 = vunpack.c.h.b16 %v2741
    %v2817 = vunpack.c.l.b16 %v2742
    %v2818 = vunpack.c.h.b16 %v2742
    %v2819 = vunpack.c.l.b16 %v2743
    %v2820 = vunpack.c.h.b16 %v2743
    %v2821 = vunpack.c.l.b16 %v2744
    %v2822 = vunpack.c.h.b16 %v2744
    %v2823 = vunpack.c.l.b16 %v2745
    %v2824 = vunpack.c.h.b16 %v2745
    %v2825 = vunpack.c.l.b16 %v2746
    %v2826 = vunpack.c.h.b16 %v2746
    %v2827 = vunpack.c.l.b16 %v2747
    %v2828 = vunpack.c.h.b16 %v2747
    %v2829 = vunpack.c.l.b16 %v2748
    %v2830 = vunpack.c.h.b16 %v2748
    %v2831 = vunpack.c.l.b16 %v2749
    %v2832 = vunpack.c.h.b16 %v2749
    %v2833 = vunpack.c.l.b16 %v2750
    %v2834 = vunpack.c.h.b16 %v2750
    %v2835 = vunpack.c.l.b16 %v2751
    %v2836 = vunpack.c.h.b16 %v2751
    %v2837 = vunpack.c.l.b16 %v2752
    %v2838 = vunpack.c.h.b16 %v2752
    %v2839 = vunpack.c.l.b16 %v2753
    %v2840 = vunpack.c.h.b16 %v2753
    %v2841 = vunpack.c.l.b16 %v2754
    %v2842 = vunpack.c.h.b16 %v2754
    %v2843 = vunpack.c.l.b16 %v2755
    %v2844 = vunpack.c.h.b16 %v2755
    %v2845 = vunpack.c.l.b16 %v2756
    %v2846 = vunpack.c.h.b16 %v2756
    %v2847 = vunpack.c.l.b16 %v2757
    %v2848 = vunpack.c.h.b16 %v2757
    %v2849 = vunpack.c.l.b16 %v2758
    %v2850 = vunpack.c.h.b16 %v2758
    %v2851 = vunpack.c.l.b16 %v2759
    %v2852 = vunpack.c.h.b16 %v2759
    %v2853 = vunpack.c.l.b16 %v2760
    %v2854 = vunpack.c.h.b16 %v2760
    %v2855 = vunpack.c.l.b16 %v2761
    %v2856 = vunpack.c.h.b16 %v2761
    %v2857 = vunpack.c.l.b16 %v2762
    %v2858 = vunpack.c.h.b16 %v2762
    %v2859 = vunpack.c.l.b16 %v2763
    %v2860 = vunpack.c.h.b16 %v2763
    %v2861 = vunpack.c.l.b16 %v2764
    %v2862 = vunpack.c.h.b16 %v2764
    %v2863 = vunpack.c.l.b16 %v2765
    %v2864 = vunpack.c.h.b16 %v2765
    %v2865 = vpack.c.b16 %v2805, %v2801
    %v2866 = vpack.c.b16 %v2806, %v2802
    %v2867 = vpack.c.b16 %v2807, %v2803
    %v2868 = vpack.c.b16 %v2808, %v2804
    %v2869 = vpack.c.b16 %v2813, %v2809
    %v2870 = vpack.c.b16 %v2814, %v2810
    %v2871 = vpack.c.b16 %v2815, %v2811
    %v2872 = vpack.c.b16 %v2816, %v2812
    %v2873 = vpack.c.b16 %v2821, %v2817
    %v2874 = vpack.c.b16 %v2822, %v2818
    %v2875 = vpack.c.b16 %v2823, %v2819
    %v2876 = vpack.c.b16 %v2824, %v2820
    %v2877 = vpack.c.b16 %v2829, %v2825
    %v2878 = vpack.c.b16 %v2830, %v2826
    %v2879 = vpack.c.b16 %v2831, %v2827
    %v2880 = vpack.c.b16 %v2832, %v2828
    %v2881 = vpack.c.b16 %v2837, %v2833
    %v2882 = vpack.c.b16 %v2838, %v2834
    %v2883 = vpack.c.b16 %v2839, %v2835
    %v2884 = vpack.c.b16 %v2840, %v2836
    %v2885 = vpack.c.b16 %v2845, %v2841
    %v2886 = vpack.c.b16 %v2846, %v2842
    %v2887 = vpack.c.b16 %v2847, %v2843
    %v2888 = vpack.c.b16 %v2848, %v2844
    %v2889 = vpack.c.b16 %v2853, %v2849
    %v2890 = vpack.c.b16 %v2854, %v2850
    %v2891 = vpack.c.b16 %v2855, %v2851
    %v2892 = vpack.c.b16 %v2856, %v2852
    %v2893 = vpack.c.b16 %v2861, %v2857
    %v2894 = vpack.c.b16 %v2862, %v2858
    %v2895 = vpack.c.b16 %v2863, %v2859
    %v2896 = vpack.c.b16 %v2864, %v2860
    %v2930 = vlaneseq
    %v2931 = vshrl.u32 %v2930, 7
    %v2932 = vsub.s32 0, %v2931
    %v2933 = vrot.slane %v2768, %v2932
    %v2934 = vlaneseq
    %v2935 = vshrl.u32 %v2934, 7
    %v2936 = vsub.s32 1, %v2935
    %v2937 = vrot.slane %v2768, %v2936
    %v2938 = vlaneseq
    %v2939 = vshrl.u32 %v2938, 7
    %v2940 = vsub.s32 2, %v2939
    %v2941 = vrot.slane %v2768, %v2940
    %v2942 = vlaneseq
    %v2943 = vshrl.u32 %v2942, 7
    %v2944 = vsub.s32 3, %v2943
    %v2945 = vrot.slane %v2768, %v2944
    %2950 = vmatprep.subr.bf16.mxu0 %v2894
    %2951 = vmatpush1.bf16.msra.mxu0 %v2893
    %2952 = vmatprep.subr.bf16.mxu0 %v2890
    %2953 = vmatpush1.bf16.msra.mxu0 %v2889
    %2954 = vmatprep.subr.bf16.mxu0 %v2886
    %2955 = vmatpush1.bf16.msra.mxu0 %v2885
    %2956 = vmatprep.subr.bf16.mxu0 %v2882
    %2957 = vmatpush1.bf16.msra.mxu0 %v2881
    %2958 = vmatprep.subr.bf16.mxu0 %v2878
    %2959 = vmatpush1.bf16.msra.mxu0 %v2877
    %2960 = vmatprep.subr.bf16.mxu0 %v2874
    %2961 = vmatpush1.bf16.msra.mxu0 %v2873
    %2962 = vmatprep.subr.bf16.mxu0 %v2870
    %2963 = vmatpush1.bf16.msra.mxu0 %v2869
    %2964 = vmatprep.subr.bf16.mxu0 %v2866
    %2965 = vmatpush1.bf16.msra.mxu0 %v2865
    %2966 = vmatprep.subr.bf16.mxu0 0
    %2967 = vmatpush2.bf16.msra.mxu0 0
    %2968 = vmatprep.subr.bf16.mxu0 0
    %2969 = vmatpush2.bf16.msra.mxu0 0
    %2970 = vmatprep.subr.bf16.mxu0 0
    %2971 = vmatpush2.bf16.msra.mxu0 0
    %2972 = vmatprep.subr.bf16.mxu0 0
    %2973 = vmatpush2.bf16.msra.mxu0 0
    %2974 = vmatprep.subr.bf16.mxu0 0
    %2975 = vmatpush2.bf16.msra.mxu0 0
    %2976 = vmatprep.subr.bf16.mxu0 0
    %2977 = vmatpush2.bf16.msra.mxu0 0
    %2978 = vmatprep.subr.bf16.mxu0 0
    %2979 = vmatpush2.bf16.msra.mxu0 0
    %2980 = vmatprep.subr.bf16.mxu0 0
    %2981 = vmatpush2.bf16.msra.mxu0 0
    %2982 = vmatprep.mubr.bf16.mxu0 0
    %2983 = vmatmul.mubr.bf16.gmra.mxu0 %v2766
    %v2984 = vpop.f32.mrf.mxu0
    %v2985 = vadd.f32 %v2933, %v2984
    %v2986 = vpop.f32.mrf.mxu0
    %v2987 = vadd.f32 %v2937, %v2986
    %v2988 = vpop.f32.mrf.mxu0
    %v2989 = vpop.f32.mrf.mxu0
    %2990 = vdwg.mxu0
    %2991 = vmatprep.subr.bf16.mxu0 %v2896
    %2992 = vmatpush1.bf16.msra.mxu0 %v2895
    %2993 = vmatprep.subr.bf16.mxu0 %v2892
    %2994 = vmatpush1.bf16.msra.mxu0 %v2891
    %2995 = vmatprep.subr.bf16.mxu0 %v2888
    %2996 = vmatpush1.bf16.msra.mxu0 %v2887
    %2997 = vmatprep.subr.bf16.mxu0 %v2884
    %2998 = vmatpush1.bf16.msra.mxu0 %v2883
    %2999 = vmatprep.subr.bf16.mxu0 %v2880
    %3000 = vmatpush1.bf16.msra.mxu0 %v2879
    %3001 = vmatprep.subr.bf16.mxu0 %v2876
    %3002 = vmatpush1.bf16.msra.mxu0 %v2875
    %3003 = vmatprep.subr.bf16.mxu0 %v2872
    %3004 = vmatpush1.bf16.msra.mxu0 %v2871
    %3005 = vmatprep.subr.bf16.mxu0 %v2868
    %3006 = vmatpush1.bf16.msra.mxu0 %v2867
    %3007 = vmatprep.subr.bf16.mxu0 0
    %3008 = vmatpush2.bf16.msra.mxu0 0
    %3009 = vmatprep.subr.bf16.mxu0 0
    %3010 = vmatpush2.bf16.msra.mxu0 0
    %3011 = vmatprep.subr.bf16.mxu0 0
    %3012 = vmatpush2.bf16.msra.mxu0 0
    %3013 = vmatprep.subr.bf16.mxu0 0
    %3014 = vmatpush2.bf16.msra.mxu0 0
    %3015 = vmatprep.subr.bf16.mxu0 0
    %3016 = vmatpush2.bf16.msra.mxu0 0
    %3017 = vmatprep.subr.bf16.mxu0 0
    %3018 = vmatpush2.bf16.msra.mxu0 0
    %3019 = vmatprep.subr.bf16.mxu0 0
    %3020 = vmatpush2.bf16.msra.mxu0 0
    %3021 = vmatprep.subr.bf16.mxu0 0
    %3022 = vmatpush2.bf16.msra.mxu0 0
    %3023 = vmatprep.mubr.bf16.mxu0 0
    %3024 = vmatmul.mubr.bf16.gmra.mxu0 %v2766
    %v3025 = vpop.f32.mrf.mxu0
    %v3026 = vadd.f32 %v2941, %v3025
    %v3027 = vpop.f32.mrf.mxu0
    %v3028 = vadd.f32 %v2945, %v3027
    %v3029 = vpop.f32.mrf.mxu0
    %v3030 = vpop.f32.mrf.mxu0
    %3031 = vdwg.mxu0
    %v3032 = vld [vmem:[#allocation7] sm:$0xff]
    %v3033 = vld [vmem:[#allocation7 + $0x8] sm:$0xff]
    %v3034 = vld [vmem:[#allocation7 + $0x10] sm:$0xff]
    %v3035 = vld [vmem:[#allocation7 + $0x18] sm:$0xff]
    %v3036 = vld [vmem:[#allocation7 + $0x20] sm:$0xff]
    %v3037 = vld [vmem:[#allocation7 + $0x28] sm:$0xff]
    %v3038 = vld [vmem:[#allocation7 + $0x30] sm:$0xff]
    %v3039 = vld [vmem:[#allocation7 + $0x38] sm:$0xff]
    %v3040 = vld [vmem:[#allocation7 + $0x40] sm:$0xff]
    %v3041 = vld [vmem:[#allocation7 + $0x48] sm:$0xff]
    %v3042 = vld [vmem:[#allocation7 + $0x50] sm:$0xff]
    %v3043 = vld [vmem:[#allocation7 + $0x58] sm:$0xff]
    %v3044 = vld [vmem:[#allocation7 + $0x60] sm:$0xff]
    %v3045 = vld [vmem:[#allocation7 + $0x68] sm:$0xff]
    %v3046 = vld [vmem:[#allocation7 + $0x70] sm:$0xff]
    %v3047 = vld [vmem:[#allocation7 + $0x78] sm:$0xff]
    %v3048 = vld [vmem:[#allocation7 + $0x80] sm:$0xff]
    %v3049 = vld [vmem:[#allocation7 + $0x88] sm:$0xff]
    %v3050 = vld [vmem:[#allocation7 + $0x90] sm:$0xff]
    %v3051 = vld [vmem:[#allocation7 + $0x98] sm:$0xff]
    %v3052 = vld [vmem:[#allocation7 + $0xa0] sm:$0xff]
    %v3053 = vld [vmem:[#allocation7 + $0xa8] sm:$0xff]
    %v3054 = vld [vmem:[#allocation7 + $0xb0] sm:$0xff]
    %v3055 = vld [vmem:[#allocation7 + $0xb8] sm:$0xff]
    %v3056 = vld [vmem:[#allocation7 + $0xc0] sm:$0xff]
    %v3057 = vld [vmem:[#allocation7 + $0xc8] sm:$0xff]
    %v3058 = vld [vmem:[#allocation7 + $0xd0] sm:$0xff]
    %v3059 = vld [vmem:[#allocation7 + $0xd8] sm:$0xff]
    %v3060 = vld [vmem:[#allocation7 + $0xe0] sm:$0xff]
    %v3061 = vld [vmem:[#allocation7 + $0xe8] sm:$0xff]
    %v3062 = vld [vmem:[#allocation7 + $0xf0] sm:$0xff]
    %v3063 = vld [vmem:[#allocation7 + $0xf8] sm:$0xff]
    %v3064 = vld [vmem:[#allocation7 + $0x100] sm:$0xff]
    %v3065 = vld [vmem:[#allocation7 + $0x108] sm:$0xff]
    %v3066 = vld [vmem:[#allocation7 + $0x110] sm:$0xff]
    %v3067 = vld [vmem:[#allocation7 + $0x118] sm:$0xff]
    %v3068 = vld [vmem:[#allocation7 + $0x120] sm:$0xff]
    %v3069 = vld [vmem:[#allocation7 + $0x128] sm:$0xff]
    %v3070 = vld [vmem:[#allocation7 + $0x130] sm:$0xff]
    %v3071 = vld [vmem:[#allocation7 + $0x138] sm:$0xff]
    %v3072 = vld [vmem:[#allocation7 + $0x140] sm:$0xff]
    %v3073 = vld [vmem:[#allocation7 + $0x148] sm:$0xff]
    %v3074 = vld [vmem:[#allocation7 + $0x150] sm:$0xff]
    %v3075 = vld [vmem:[#allocation7 + $0x158] sm:$0xff]
    %v3076 = vld [vmem:[#allocation7 + $0x160] sm:$0xff]
    %v3077 = vld [vmem:[#allocation7 + $0x168] sm:$0xff]
    %v3078 = vld [vmem:[#allocation7 + $0x170] sm:$0xff]
    %v3079 = vld [vmem:[#allocation7 + $0x178] sm:$0xff]
    %v3080 = vld [vmem:[#allocation7 + $0x180] sm:$0xff]
    %v3081 = vld [vmem:[#allocation7 + $0x188] sm:$0xff]
    %v3082 = vld [vmem:[#allocation7 + $0x190] sm:$0xff]
    %v3083 = vld [vmem:[#allocation7 + $0x198] sm:$0xff]
    %v3084 = vld [vmem:[#allocation7 + $0x1a0] sm:$0xff]
    %v3085 = vld [vmem:[#allocation7 + $0x1a8] sm:$0xff]
    %v3086 = vld [vmem:[#allocation7 + $0x1b0] sm:$0xff]
    %v3087 = vld [vmem:[#allocation7 + $0x1b8] sm:$0xff]
    %v3088 = vld [vmem:[#allocation7 + $0x1c0] sm:$0xff]
    %v3089 = vld [vmem:[#allocation7 + $0x1c8] sm:$0xff]
    %v3090 = vld [vmem:[#allocation7 + $0x1d0] sm:$0xff]
    %v3091 = vld [vmem:[#allocation7 + $0x1d8] sm:$0xff]
    %v3092 = vld [vmem:[#allocation7 + $0x1e0] sm:$0xff]
    %v3093 = vld [vmem:[#allocation7 + $0x1e8] sm:$0xff]
    %v3094 = vld [vmem:[#allocation7 + $0x1f0] sm:$0xff]
    %v3095 = vld [vmem:[#allocation7 + $0x1f8] sm:$0xff]
    %v3096 = vpack.c.bf16 %v1015, %v1015
    %v3097 = vpack.c.bf16 %v1016, %v1016
    %s3098 = scalar_lea.vmem [#allocation7], 512
    %v3099 = vld [vmem:[%s3098] sm:$0xff]
    %v3100 = vld [vmem:[%s3098 + $0x8] sm:$0xff]
    %v3101 = vld [vmem:[%s3098 + $0x10] sm:$0xff]
    %v3102 = vld [vmem:[%s3098 + $0x18] sm:$0xff]
    %v3103 = vld [vmem:[%s3098 + $0x20] sm:$0xff]
    %v3104 = vld [vmem:[%s3098 + $0x28] sm:$0xff]
    %v3105 = vld [vmem:[%s3098 + $0x30] sm:$0xff]
    %v3106 = vld [vmem:[%s3098 + $0x38] sm:$0xff]
    %v3107 = vld [vmem:[%s3098 + $0x40] sm:$0xff]
    %v3108 = vld [vmem:[%s3098 + $0x48] sm:$0xff]
    %v3109 = vld [vmem:[%s3098 + $0x50] sm:$0xff]
    %v3110 = vld [vmem:[%s3098 + $0x58] sm:$0xff]
    %v3111 = vld [vmem:[%s3098 + $0x60] sm:$0xff]
    %v3112 = vld [vmem:[%s3098 + $0x68] sm:$0xff]
    %v3113 = vld [vmem:[%s3098 + $0x70] sm:$0xff]
    %v3114 = vld [vmem:[%s3098 + $0x78] sm:$0xff]
    %v3115 = vld [vmem:[%s3098 + $0x80] sm:$0xff]
    %v3116 = vld [vmem:[%s3098 + $0x88] sm:$0xff]
    %v3117 = vld [vmem:[%s3098 + $0x90] sm:$0xff]
    %v3118 = vld [vmem:[%s3098 + $0x98] sm:$0xff]
    %v3119 = vld [vmem:[%s3098 + $0xa0] sm:$0xff]
    %v3120 = vld [vmem:[%s3098 + $0xa8] sm:$0xff]
    %v3121 = vld [vmem:[%s3098 + $0xb0] sm:$0xff]
    %v3122 = vld [vmem:[%s3098 + $0xb8] sm:$0xff]
    %v3123 = vld [vmem:[%s3098 + $0xc0] sm:$0xff]
    %v3124 = vld [vmem:[%s3098 + $0xc8] sm:$0xff]
    %v3125 = vld [vmem:[%s3098 + $0xd0] sm:$0xff]
    %v3126 = vld [vmem:[%s3098 + $0xd8] sm:$0xff]
    %v3127 = vld [vmem:[%s3098 + $0xe0] sm:$0xff]
    %v3128 = vld [vmem:[%s3098 + $0xe8] sm:$0xff]
    %v3129 = vld [vmem:[%s3098 + $0xf0] sm:$0xff]
    %v3130 = vld [vmem:[%s3098 + $0xf8] sm:$0xff]
    %v3131 = vld [vmem:[%s3098 + $0x100] sm:$0xff]
    %v3132 = vld [vmem:[%s3098 + $0x108] sm:$0xff]
    %v3133 = vld [vmem:[%s3098 + $0x110] sm:$0xff]
    %v3134 = vld [vmem:[%s3098 + $0x118] sm:$0xff]
    %v3135 = vld [vmem:[%s3098 + $0x120] sm:$0xff]
    %v3136 = vld [vmem:[%s3098 + $0x128] sm:$0xff]
    %v3137 = vld [vmem:[%s3098 + $0x130] sm:$0xff]
    %v3138 = vld [vmem:[%s3098 + $0x138] sm:$0xff]
    %v3139 = vld [vmem:[%s3098 + $0x140] sm:$0xff]
    %v3140 = vld [vmem:[%s3098 + $0x148] sm:$0xff]
    %v3141 = vld [vmem:[%s3098 + $0x150] sm:$0xff]
    %v3142 = vld [vmem:[%s3098 + $0x158] sm:$0xff]
    %v3143 = vld [vmem:[%s3098 + $0x160] sm:$0xff]
    %v3144 = vld [vmem:[%s3098 + $0x168] sm:$0xff]
    %v3145 = vld [vmem:[%s3098 + $0x170] sm:$0xff]
    %v3146 = vld [vmem:[%s3098 + $0x178] sm:$0xff]
    %v3147 = vld [vmem:[%s3098 + $0x180] sm:$0xff]
    %v3148 = vld [vmem:[%s3098 + $0x188] sm:$0xff]
    %v3149 = vld [vmem:[%s3098 + $0x190] sm:$0xff]
    %v3150 = vld [vmem:[%s3098 + $0x198] sm:$0xff]
    %v3151 = vld [vmem:[%s3098 + $0x1a0] sm:$0xff]
    %v3152 = vld [vmem:[%s3098 + $0x1a8] sm:$0xff]
    %v3153 = vld [vmem:[%s3098 + $0x1b0] sm:$0xff]
    %v3154 = vld [vmem:[%s3098 + $0x1b8] sm:$0xff]
    %v3155 = vld [vmem:[%s3098 + $0x1c0] sm:$0xff]
    %v3156 = vld [vmem:[%s3098 + $0x1c8] sm:$0xff]
    %v3157 = vld [vmem:[%s3098 + $0x1d0] sm:$0xff]
    %v3158 = vld [vmem:[%s3098 + $0x1d8] sm:$0xff]
    %v3159 = vld [vmem:[%s3098 + $0x1e0] sm:$0xff]
    %v3160 = vld [vmem:[%s3098 + $0x1e8] sm:$0xff]
    %v3161 = vld [vmem:[%s3098 + $0x1f0] sm:$0xff]
    %v3162 = vld [vmem:[%s3098 + $0x1f8] sm:$0xff]
    %v3163 = vpack.c.bf16 %v1527, %v1527
    %v3164 = vpack.c.bf16 %v1528, %v1528
    %v3229 = vunpack.c.l.b16 %v3099
    %v3230 = vunpack.c.h.b16 %v3099
    %v3231 = vunpack.c.l.b16 %v3100
    %v3232 = vunpack.c.h.b16 %v3100
    %v3233 = vunpack.c.l.b16 %v3101
    %v3234 = vunpack.c.h.b16 %v3101
    %v3235 = vunpack.c.l.b16 %v3102
    %v3236 = vunpack.c.h.b16 %v3102
    %v3237 = vunpack.c.l.b16 %v3103
    %v3238 = vunpack.c.h.b16 %v3103
    %v3239 = vunpack.c.l.b16 %v3104
    %v3240 = vunpack.c.h.b16 %v3104
    %v3241 = vunpack.c.l.b16 %v3105
    %v3242 = vunpack.c.h.b16 %v3105
    %v3243 = vunpack.c.l.b16 %v3106
    %v3244 = vunpack.c.h.b16 %v3106
    %v3245 = vunpack.c.l.b16 %v3107
    %v3246 = vunpack.c.h.b16 %v3107
    %v3247 = vunpack.c.l.b16 %v3108
    %v3248 = vunpack.c.h.b16 %v3108
    %v3249 = vunpack.c.l.b16 %v3109
    %v3250 = vunpack.c.h.b16 %v3109
    %v3251 = vunpack.c.l.b16 %v3110
    %v3252 = vunpack.c.h.b16 %v3110
    %v3253 = vunpack.c.l.b16 %v3111
    %v3254 = vunpack.c.h.b16 %v3111
    %v3255 = vunpack.c.l.b16 %v3112
    %v3256 = vunpack.c.h.b16 %v3112
    %v3257 = vunpack.c.l.b16 %v3113
    %v3258 = vunpack.c.h.b16 %v3113
    %v3259 = vunpack.c.l.b16 %v3114
    %v3260 = vunpack.c.h.b16 %v3114
    %v3261 = vunpack.c.l.b16 %v3115
    %v3262 = vunpack.c.h.b16 %v3115
    %v3263 = vunpack.c.l.b16 %v3116
    %v3264 = vunpack.c.h.b16 %v3116
    %v3265 = vunpack.c.l.b16 %v3117
    %v3266 = vunpack.c.h.b16 %v3117
    %v3267 = vunpack.c.l.b16 %v3118
    %v3268 = vunpack.c.h.b16 %v3118
    %v3269 = vunpack.c.l.b16 %v3119
    %v3270 = vunpack.c.h.b16 %v3119
    %v3271 = vunpack.c.l.b16 %v3120
    %v3272 = vunpack.c.h.b16 %v3120
    %v3273 = vunpack.c.l.b16 %v3121
    %v3274 = vunpack.c.h.b16 %v3121
    %v3275 = vunpack.c.l.b16 %v3122
    %v3276 = vunpack.c.h.b16 %v3122
    %v3277 = vunpack.c.l.b16 %v3123
    %v3278 = vunpack.c.h.b16 %v3123
    %v3279 = vunpack.c.l.b16 %v3124
    %v3280 = vunpack.c.h.b16 %v3124
    %v3281 = vunpack.c.l.b16 %v3125
    %v3282 = vunpack.c.h.b16 %v3125
    %v3283 = vunpack.c.l.b16 %v3126
    %v3284 = vunpack.c.h.b16 %v3126
    %v3285 = vunpack.c.l.b16 %v3127
    %v3286 = vunpack.c.h.b16 %v3127
    %v3287 = vunpack.c.l.b16 %v3128
    %v3288 = vunpack.c.h.b16 %v3128
    %v3289 = vunpack.c.l.b16 %v3129
    %v3290 = vunpack.c.h.b16 %v3129
    %v3291 = vunpack.c.l.b16 %v3130
    %v3292 = vunpack.c.h.b16 %v3130
    %v3293 = vunpack.c.l.b16 %v3131
    %v3294 = vunpack.c.h.b16 %v3131
    %v3295 = vunpack.c.l.b16 %v3132
    %v3296 = vunpack.c.h.b16 %v3132
    %v3297 = vunpack.c.l.b16 %v3133
    %v3298 = vunpack.c.h.b16 %v3133
    %v3299 = vunpack.c.l.b16 %v3134
    %v3300 = vunpack.c.h.b16 %v3134
    %v3301 = vunpack.c.l.b16 %v3135
    %v3302 = vunpack.c.h.b16 %v3135
    %v3303 = vunpack.c.l.b16 %v3136
    %v3304 = vunpack.c.h.b16 %v3136
    %v3305 = vunpack.c.l.b16 %v3137
    %v3306 = vunpack.c.h.b16 %v3137
    %v3307 = vunpack.c.l.b16 %v3138
    %v3308 = vunpack.c.h.b16 %v3138
    %v3309 = vunpack.c.l.b16 %v3139
    %v3310 = vunpack.c.h.b16 %v3139
    %v3311 = vunpack.c.l.b16 %v3140
    %v3312 = vunpack.c.h.b16 %v3140
    %v3313 = vunpack.c.l.b16 %v3141
    %v3314 = vunpack.c.h.b16 %v3141
    %v3315 = vunpack.c.l.b16 %v3142
    %v3316 = vunpack.c.h.b16 %v3142
    %v3317 = vunpack.c.l.b16 %v3143
    %v3318 = vunpack.c.h.b16 %v3143
    %v3319 = vunpack.c.l.b16 %v3144
    %v3320 = vunpack.c.h.b16 %v3144
    %v3321 = vunpack.c.l.b16 %v3145
    %v3322 = vunpack.c.h.b16 %v3145
    %v3323 = vunpack.c.l.b16 %v3146
    %v3324 = vunpack.c.h.b16 %v3146
    %v3325 = vunpack.c.l.b16 %v3147
    %v3326 = vunpack.c.h.b16 %v3147
    %v3327 = vunpack.c.l.b16 %v3148
    %v3328 = vunpack.c.h.b16 %v3148
    %v3329 = vunpack.c.l.b16 %v3149
    %v3330 = vunpack.c.h.b16 %v3149
    %v3331 = vunpack.c.l.b16 %v3150
    %v3332 = vunpack.c.h.b16 %v3150
    %v3333 = vunpack.c.l.b16 %v3151
    %v3334 = vunpack.c.h.b16 %v3151
    %v3335 = vunpack.c.l.b16 %v3152
    %v3336 = vunpack.c.h.b16 %v3152
    %v3337 = vunpack.c.l.b16 %v3153
    %v3338 = vunpack.c.h.b16 %v3153
    %v3339 = vunpack.c.l.b16 %v3154
    %v3340 = vunpack.c.h.b16 %v3154
    %v3341 = vunpack.c.l.b16 %v3155
    %v3342 = vunpack.c.h.b16 %v3155
    %v3343 = vunpack.c.l.b16 %v3156
    %v3344 = vunpack.c.h.b16 %v3156
    %v3345 = vunpack.c.l.b16 %v3157
    %v3346 = vunpack.c.h.b16 %v3157
    %v3347 = vunpack.c.l.b16 %v3158
    %v3348 = vunpack.c.h.b16 %v3158
    %v3349 = vunpack.c.l.b16 %v3159
    %v3350 = vunpack.c.h.b16 %v3159
    %v3351 = vunpack.c.l.b16 %v3160
    %v3352 = vunpack.c.h.b16 %v3160
    %v3353 = vunpack.c.l.b16 %v3161
    %v3354 = vunpack.c.h.b16 %v3161
    %v3355 = vunpack.c.l.b16 %v3162
    %v3356 = vunpack.c.h.b16 %v3162
    %v3357 = vpack.c.b16 %v3233, %v3229
    %v3358 = vpack.c.b16 %v3234, %v3230
    %v3359 = vpack.c.b16 %v3235, %v3231
    %v3360 = vpack.c.b16 %v3236, %v3232
    %v3361 = vpack.c.b16 %v3241, %v3237
    %v3362 = vpack.c.b16 %v3242, %v3238
    %v3363 = vpack.c.b16 %v3243, %v3239
    %v3364 = vpack.c.b16 %v3244, %v3240
    %v3365 = vpack.c.b16 %v3249, %v3245
    %v3366 = vpack.c.b16 %v3250, %v3246
    %v3367 = vpack.c.b16 %v3251, %v3247
    %v3368 = vpack.c.b16 %v3252, %v3248
    %v3369 = vpack.c.b16 %v3257, %v3253
    %v3370 = vpack.c.b16 %v3258, %v3254
    %v3371 = vpack.c.b16 %v3259, %v3255
    %v3372 = vpack.c.b16 %v3260, %v3256
    %v3373 = vpack.c.b16 %v3265, %v3261
    %v3374 = vpack.c.b16 %v3266, %v3262
    %v3375 = vpack.c.b16 %v3267, %v3263
    %v3376 = vpack.c.b16 %v3268, %v3264
    %v3377 = vpack.c.b16 %v3273, %v3269
    %v3378 = vpack.c.b16 %v3274, %v3270
    %v3379 = vpack.c.b16 %v3275, %v3271
    %v3380 = vpack.c.b16 %v3276, %v3272
    %v3381 = vpack.c.b16 %v3281, %v3277
    %v3382 = vpack.c.b16 %v3282, %v3278
    %v3383 = vpack.c.b16 %v3283, %v3279
    %v3384 = vpack.c.b16 %v3284, %v3280
    %v3385 = vpack.c.b16 %v3289, %v3285
    %v3386 = vpack.c.b16 %v3290, %v3286
    %v3387 = vpack.c.b16 %v3291, %v3287
    %v3388 = vpack.c.b16 %v3292, %v3288
    %v3389 = vpack.c.b16 %v3297, %v3293
    %v3390 = vpack.c.b16 %v3298, %v3294
    %v3391 = vpack.c.b16 %v3299, %v3295
    %v3392 = vpack.c.b16 %v3300, %v3296
    %v3393 = vpack.c.b16 %v3305, %v3301
    %v3394 = vpack.c.b16 %v3306, %v3302
    %v3395 = vpack.c.b16 %v3307, %v3303
    %v3396 = vpack.c.b16 %v3308, %v3304
    %v3397 = vpack.c.b16 %v3313, %v3309
    %v3398 = vpack.c.b16 %v3314, %v3310
    %v3399 = vpack.c.b16 %v3315, %v3311
    %v3400 = vpack.c.b16 %v3316, %v3312
    %v3401 = vpack.c.b16 %v3321, %v3317
    %v3402 = vpack.c.b16 %v3322, %v3318
    %v3403 = vpack.c.b16 %v3323, %v3319
    %v3404 = vpack.c.b16 %v3324, %v3320
    %v3405 = vpack.c.b16 %v3329, %v3325
    %v3406 = vpack.c.b16 %v3330, %v3326
    %v3407 = vpack.c.b16 %v3331, %v3327
    %v3408 = vpack.c.b16 %v3332, %v3328
    %v3409 = vpack.c.b16 %v3337, %v3333
    %v3410 = vpack.c.b16 %v3338, %v3334
    %v3411 = vpack.c.b16 %v3339, %v3335
    %v3412 = vpack.c.b16 %v3340, %v3336
    %v3413 = vpack.c.b16 %v3345, %v3341
    %v3414 = vpack.c.b16 %v3346, %v3342
    %v3415 = vpack.c.b16 %v3347, %v3343
    %v3416 = vpack.c.b16 %v3348, %v3344
    %v3417 = vpack.c.b16 %v3353, %v3349
    %v3418 = vpack.c.b16 %v3354, %v3350
    %v3419 = vpack.c.b16 %v3355, %v3351
    %v3420 = vpack.c.b16 %v3356, %v3352
    %3485 = vmatprep.subr.bf16.mxu0 %v3386
    %3486 = vmatpush1.bf16.msra.mxu0 %v3385
    %3487 = vmatprep.subr.bf16.mxu0 %v3382
    %3488 = vmatpush1.bf16.msra.mxu0 %v3381
    %3489 = vmatprep.subr.bf16.mxu0 %v3378
    %3490 = vmatpush1.bf16.msra.mxu0 %v3377
    %3491 = vmatprep.subr.bf16.mxu0 %v3374
    %3492 = vmatpush1.bf16.msra.mxu0 %v3373
    %3493 = vmatprep.subr.bf16.mxu0 %v3370
    %3494 = vmatpush1.bf16.msra.mxu0 %v3369
    %3495 = vmatprep.subr.bf16.mxu0 %v3366
    %3496 = vmatpush1.bf16.msra.mxu0 %v3365
    %3497 = vmatprep.subr.bf16.mxu0 %v3362
    %3498 = vmatpush1.bf16.msra.mxu0 %v3361
    %3499 = vmatprep.subr.bf16.mxu0 %v3358
    %3500 = vmatpush1.bf16.msra.mxu0 %v3357
    %3501 = vmatprep.subr.bf16.mxu0 %v3418
    %3502 = vmatpush2.bf16.msra.mxu0 %v3417
    %3503 = vmatprep.subr.bf16.mxu0 %v3414
    %3504 = vmatpush2.bf16.msra.mxu0 %v3413
    %3505 = vmatprep.subr.bf16.mxu0 %v3410
    %3506 = vmatpush2.bf16.msra.mxu0 %v3409
    %3507 = vmatprep.subr.bf16.mxu0 %v3406
    %3508 = vmatpush2.bf16.msra.mxu0 %v3405
    %3509 = vmatprep.subr.bf16.mxu0 %v3402
    %3510 = vmatpush2.bf16.msra.mxu0 %v3401
    %3511 = vmatprep.subr.bf16.mxu0 %v3398
    %3512 = vmatpush2.bf16.msra.mxu0 %v3397
    %3513 = vmatprep.subr.bf16.mxu0 %v3394
    %3514 = vmatpush2.bf16.msra.mxu0 %v3393
    %3515 = vmatprep.subr.bf16.mxu0 %v3390
    %3516 = vmatpush2.bf16.msra.mxu0 %v3389
    %3517 = vmatprep.mubr.bf16.mxu0 %v3164
    %3518 = vmatmul.mubr.bf16.gmra.mxu0 %v3163
    %v3519 = vpop.f32.mrf.mxu0
    %v3520 = vadd.f32 0.0, %v3519
    %v3521 = vpop.f32.mrf.mxu0
    %v3522 = vadd.f32 0.0, %v3521
    %v3523 = vpop.f32.mrf.mxu0
    %v3524 = vpop.f32.mrf.mxu0
    %3525 = vdwg.mxu0
    %3526 = vmatprep.subr.bf16.mxu0 %v3388
    %3527 = vmatpush1.bf16.msra.mxu0 %v3387
    %3528 = vmatprep.subr.bf16.mxu0 %v3384
    %3529 = vmatpush1.bf16.msra.mxu0 %v3383
    %3530 = vmatprep.subr.bf16.mxu0 %v3380
    %3531 = vmatpush1.bf16.msra.mxu0 %v3379
    %3532 = vmatprep.subr.bf16.mxu0 %v3376
    %3533 = vmatpush1.bf16.msra.mxu0 %v3375
    %3534 = vmatprep.subr.bf16.mxu0 %v3372
    %3535 = vmatpush1.bf16.msra.mxu0 %v3371
    %3536 = vmatprep.subr.bf16.mxu0 %v3368
    %3537 = vmatpush1.bf16.msra.mxu0 %v3367
    %3538 = vmatprep.subr.bf16.mxu0 %v3364
    %3539 = vmatpush1.bf16.msra.mxu0 %v3363
    %3540 = vmatprep.subr.bf16.mxu0 %v3360
    %3541 = vmatpush1.bf16.msra.mxu0 %v3359
    %3542 = vmatprep.subr.bf16.mxu0 %v3420
    %3543 = vmatpush2.bf16.msra.mxu0 %v3419
    %3544 = vmatprep.subr.bf16.mxu0 %v3416
    %3545 = vmatpush2.bf16.msra.mxu0 %v3415
    %3546 = vmatprep.subr.bf16.mxu0 %v3412
    %3547 = vmatpush2.bf16.msra.mxu0 %v3411
    %3548 = vmatprep.subr.bf16.mxu0 %v3408
    %3549 = vmatpush2.bf16.msra.mxu0 %v3407
    %3550 = vmatprep.subr.bf16.mxu0 %v3404
    %3551 = vmatpush2.bf16.msra.mxu0 %v3403
    %3552 = vmatprep.subr.bf16.mxu0 %v3400
    %3553 = vmatpush2.bf16.msra.mxu0 %v3399
    %3554 = vmatprep.subr.bf16.mxu0 %v3396
    %3555 = vmatpush2.bf16.msra.mxu0 %v3395
    %3556 = vmatprep.subr.bf16.mxu0 %v3392
    %3557 = vmatpush2.bf16.msra.mxu0 %v3391
    %3558 = vmatprep.mubr.bf16.mxu0 %v3164
    %3559 = vmatmul.mubr.bf16.gmra.mxu0 %v3163
    %v3560 = vpop.f32.mrf.mxu0
    %v3561 = vadd.f32 0.0, %v3560
    %v3562 = vpop.f32.mrf.mxu0
    %v3563 = vadd.f32 0.0, %v3562
    %v3564 = vpop.f32.mrf.mxu0
    %v3565 = vpop.f32.mrf.mxu0
    %3566 = vdwg.mxu0
    %v3631 = vunpack.c.l.b16 %v3032
    %v3632 = vunpack.c.h.b16 %v3032
    %v3633 = vunpack.c.l.b16 %v3033
    %v3634 = vunpack.c.h.b16 %v3033
    %v3635 = vunpack.c.l.b16 %v3034
    %v3636 = vunpack.c.h.b16 %v3034
    %v3637 = vunpack.c.l.b16 %v3035
    %v3638 = vunpack.c.h.b16 %v3035
    %v3639 = vunpack.c.l.b16 %v3036
    %v3640 = vunpack.c.h.b16 %v3036
    %v3641 = vunpack.c.l.b16 %v3037
    %v3642 = vunpack.c.h.b16 %v3037
    %v3643 = vunpack.c.l.b16 %v3038
    %v3644 = vunpack.c.h.b16 %v3038
    %v3645 = vunpack.c.l.b16 %v3039
    %v3646 = vunpack.c.h.b16 %v3039
    %v3647 = vunpack.c.l.b16 %v3040
    %v3648 = vunpack.c.h.b16 %v3040
    %v3649 = vunpack.c.l.b16 %v3041
    %v3650 = vunpack.c.h.b16 %v3041
    %v3651 = vunpack.c.l.b16 %v3042
    %v3652 = vunpack.c.h.b16 %v3042
    %v3653 = vunpack.c.l.b16 %v3043
    %v3654 = vunpack.c.h.b16 %v3043
    %v3655 = vunpack.c.l.b16 %v3044
    %v3656 = vunpack.c.h.b16 %v3044
    %v3657 = vunpack.c.l.b16 %v3045
    %v3658 = vunpack.c.h.b16 %v3045
    %v3659 = vunpack.c.l.b16 %v3046
    %v3660 = vunpack.c.h.b16 %v3046
    %v3661 = vunpack.c.l.b16 %v3047
    %v3662 = vunpack.c.h.b16 %v3047
    %v3663 = vunpack.c.l.b16 %v3048
    %v3664 = vunpack.c.h.b16 %v3048
    %v3665 = vunpack.c.l.b16 %v3049
    %v3666 = vunpack.c.h.b16 %v3049
    %v3667 = vunpack.c.l.b16 %v3050
    %v3668 = vunpack.c.h.b16 %v3050
    %v3669 = vunpack.c.l.b16 %v3051
    %v3670 = vunpack.c.h.b16 %v3051
    %v3671 = vunpack.c.l.b16 %v3052
    %v3672 = vunpack.c.h.b16 %v3052
    %v3673 = vunpack.c.l.b16 %v3053
    %v3674 = vunpack.c.h.b16 %v3053
    %v3675 = vunpack.c.l.b16 %v3054
    %v3676 = vunpack.c.h.b16 %v3054
    %v3677 = vunpack.c.l.b16 %v3055
    %v3678 = vunpack.c.h.b16 %v3055
    %v3679 = vunpack.c.l.b16 %v3056
    %v3680 = vunpack.c.h.b16 %v3056
    %v3681 = vunpack.c.l.b16 %v3057
    %v3682 = vunpack.c.h.b16 %v3057
    %v3683 = vunpack.c.l.b16 %v3058
    %v3684 = vunpack.c.h.b16 %v3058
    %v3685 = vunpack.c.l.b16 %v3059
    %v3686 = vunpack.c.h.b16 %v3059
    %v3687 = vunpack.c.l.b16 %v3060
    %v3688 = vunpack.c.h.b16 %v3060
    %v3689 = vunpack.c.l.b16 %v3061
    %v3690 = vunpack.c.h.b16 %v3061
    %v3691 = vunpack.c.l.b16 %v3062
    %v3692 = vunpack.c.h.b16 %v3062
    %v3693 = vunpack.c.l.b16 %v3063
    %v3694 = vunpack.c.h.b16 %v3063
    %v3695 = vunpack.c.l.b16 %v3064
    %v3696 = vunpack.c.h.b16 %v3064
    %v3697 = vunpack.c.l.b16 %v3065
    %v3698 = vunpack.c.h.b16 %v3065
    %v3699 = vunpack.c.l.b16 %v3066
    %v3700 = vunpack.c.h.b16 %v3066
    %v3701 = vunpack.c.l.b16 %v3067
    %v3702 = vunpack.c.h.b16 %v3067
    %v3703 = vunpack.c.l.b16 %v3068
    %v3704 = vunpack.c.h.b16 %v3068
    %v3705 = vunpack.c.l.b16 %v3069
    %v3706 = vunpack.c.h.b16 %v3069
    %v3707 = vunpack.c.l.b16 %v3070
    %v3708 = vunpack.c.h.b16 %v3070
    %v3709 = vunpack.c.l.b16 %v3071
    %v3710 = vunpack.c.h.b16 %v3071
    %v3711 = vunpack.c.l.b16 %v3072
    %v3712 = vunpack.c.h.b16 %v3072
    %v3713 = vunpack.c.l.b16 %v3073
    %v3714 = vunpack.c.h.b16 %v3073
    %v3715 = vunpack.c.l.b16 %v3074
    %v3716 = vunpack.c.h.b16 %v3074
    %v3717 = vunpack.c.l.b16 %v3075
    %v3718 = vunpack.c.h.b16 %v3075
    %v3719 = vunpack.c.l.b16 %v3076
    %v3720 = vunpack.c.h.b16 %v3076
    %v3721 = vunpack.c.l.b16 %v3077
    %v3722 = vunpack.c.h.b16 %v3077
    %v3723 = vunpack.c.l.b16 %v3078
    %v3724 = vunpack.c.h.b16 %v3078
    %v3725 = vunpack.c.l.b16 %v3079
    %v3726 = vunpack.c.h.b16 %v3079
    %v3727 = vunpack.c.l.b16 %v3080
    %v3728 = vunpack.c.h.b16 %v3080
    %v3729 = vunpack.c.l.b16 %v3081
    %v3730 = vunpack.c.h.b16 %v3081
    %v3731 = vunpack.c.l.b16 %v3082
    %v3732 = vunpack.c.h.b16 %v3082
    %v3733 = vunpack.c.l.b16 %v3083
    %v3734 = vunpack.c.h.b16 %v3083
    %v3735 = vunpack.c.l.b16 %v3084
    %v3736 = vunpack.c.h.b16 %v3084
    %v3737 = vunpack.c.l.b16 %v3085
    %v3738 = vunpack.c.h.b16 %v3085
    %v3739 = vunpack.c.l.b16 %v3086
    %v3740 = vunpack.c.h.b16 %v3086
    %v3741 = vunpack.c.l.b16 %v3087
    %v3742 = vunpack.c.h.b16 %v3087
    %v3743 = vunpack.c.l.b16 %v3088
    %v3744 = vunpack.c.h.b16 %v3088
    %v3745 = vunpack.c.l.b16 %v3089
    %v3746 = vunpack.c.h.b16 %v3089
    %v3747 = vunpack.c.l.b16 %v3090
    %v3748 = vunpack.c.h.b16 %v3090
    %v3749 = vunpack.c.l.b16 %v3091
    %v3750 = vunpack.c.h.b16 %v3091
    %v3751 = vunpack.c.l.b16 %v3092
    %v3752 = vunpack.c.h.b16 %v3092
    %v3753 = vunpack.c.l.b16 %v3093
    %v3754 = vunpack.c.h.b16 %v3093
    %v3755 = vunpack.c.l.b16 %v3094
    %v3756 = vunpack.c.h.b16 %v3094
    %v3757 = vunpack.c.l.b16 %v3095
    %v3758 = vunpack.c.h.b16 %v3095
    %v3759 = vpack.c.b16 %v3635, %v3631
    %v3760 = vpack.c.b16 %v3636, %v3632
    %v3761 = vpack.c.b16 %v3637, %v3633
    %v3762 = vpack.c.b16 %v3638, %v3634
    %v3763 = vpack.c.b16 %v3643, %v3639
    %v3764 = vpack.c.b16 %v3644, %v3640
    %v3765 = vpack.c.b16 %v3645, %v3641
    %v3766 = vpack.c.b16 %v3646, %v3642
    %v3767 = vpack.c.b16 %v3651, %v3647
    %v3768 = vpack.c.b16 %v3652, %v3648
    %v3769 = vpack.c.b16 %v3653, %v3649
    %v3770 = vpack.c.b16 %v3654, %v3650
    %v3771 = vpack.c.b16 %v3659, %v3655
    %v3772 = vpack.c.b16 %v3660, %v3656
    %v3773 = vpack.c.b16 %v3661, %v3657
    %v3774 = vpack.c.b16 %v3662, %v3658
    %v3775 = vpack.c.b16 %v3667, %v3663
    %v3776 = vpack.c.b16 %v3668, %v3664
    %v3777 = vpack.c.b16 %v3669, %v3665
    %v3778 = vpack.c.b16 %v3670, %v3666
    %v3779 = vpack.c.b16 %v3675, %v3671
    %v3780 = vpack.c.b16 %v3676, %v3672
    %v3781 = vpack.c.b16 %v3677, %v3673
    %v3782 = vpack.c.b16 %v3678, %v3674
    %v3783 = vpack.c.b16 %v3683, %v3679
    %v3784 = vpack.c.b16 %v3684, %v3680
    %v3785 = vpack.c.b16 %v3685, %v3681
    %v3786 = vpack.c.b16 %v3686, %v3682
    %v3787 = vpack.c.b16 %v3691, %v3687
    %v3788 = vpack.c.b16 %v3692, %v3688
    %v3789 = vpack.c.b16 %v3693, %v3689
    %v3790 = vpack.c.b16 %v3694, %v3690
    %v3791 = vpack.c.b16 %v3699, %v3695
    %v3792 = vpack.c.b16 %v3700, %v3696
    %v3793 = vpack.c.b16 %v3701, %v3697
    %v3794 = vpack.c.b16 %v3702, %v3698
    %v3795 = vpack.c.b16 %v3707, %v3703
    %v3796 = vpack.c.b16 %v3708, %v3704
    %v3797 = vpack.c.b16 %v3709, %v3705
    %v3798 = vpack.c.b16 %v3710, %v3706
    %v3799 = vpack.c.b16 %v3715, %v3711
    %v3800 = vpack.c.b16 %v3716, %v3712
    %v3801 = vpack.c.b16 %v3717, %v3713
    %v3802 = vpack.c.b16 %v3718, %v3714
    %v3803 = vpack.c.b16 %v3723, %v3719
    %v3804 = vpack.c.b16 %v3724, %v3720
    %v3805 = vpack.c.b16 %v3725, %v3721
    %v3806 = vpack.c.b16 %v3726, %v3722
    %v3807 = vpack.c.b16 %v3731, %v3727
    %v3808 = vpack.c.b16 %v3732, %v3728
    %v3809 = vpack.c.b16 %v3733, %v3729
    %v3810 = vpack.c.b16 %v3734, %v3730
    %v3811 = vpack.c.b16 %v3739, %v3735
    %v3812 = vpack.c.b16 %v3740, %v3736
    %v3813 = vpack.c.b16 %v3741, %v3737
    %v3814 = vpack.c.b16 %v3742, %v3738
    %v3815 = vpack.c.b16 %v3747, %v3743
    %v3816 = vpack.c.b16 %v3748, %v3744
    %v3817 = vpack.c.b16 %v3749, %v3745
    %v3818 = vpack.c.b16 %v3750, %v3746
    %v3819 = vpack.c.b16 %v3755, %v3751
    %v3820 = vpack.c.b16 %v3756, %v3752
    %v3821 = vpack.c.b16 %v3757, %v3753
    %v3822 = vpack.c.b16 %v3758, %v3754
    %3887 = vmatprep.subr.bf16.mxu0 %v3788
    %3888 = vmatpush1.bf16.msra.mxu0 %v3787
    %3889 = vmatprep.subr.bf16.mxu0 %v3784
    %3890 = vmatpush1.bf16.msra.mxu0 %v3783
    %3891 = vmatprep.subr.bf16.mxu0 %v3780
    %3892 = vmatpush1.bf16.msra.mxu0 %v3779
    %3893 = vmatprep.subr.bf16.mxu0 %v3776
    %3894 = vmatpush1.bf16.msra.mxu0 %v3775
    %3895 = vmatprep.subr.bf16.mxu0 %v3772
    %3896 = vmatpush1.bf16.msra.mxu0 %v3771
    %3897 = vmatprep.subr.bf16.mxu0 %v3768
    %3898 = vmatpush1.bf16.msra.mxu0 %v3767
    %3899 = vmatprep.subr.bf16.mxu0 %v3764
    %3900 = vmatpush1.bf16.msra.mxu0 %v3763
    %3901 = vmatprep.subr.bf16.mxu0 %v3760
    %3902 = vmatpush1.bf16.msra.mxu0 %v3759
    %3903 = vmatprep.subr.bf16.mxu0 %v3820
    %3904 = vmatpush2.bf16.msra.mxu0 %v3819
    %3905 = vmatprep.subr.bf16.mxu0 %v3816
    %3906 = vmatpush2.bf16.msra.mxu0 %v3815
    %3907 = vmatprep.subr.bf16.mxu0 %v3812
    %3908 = vmatpush2.bf16.msra.mxu0 %v3811
    %3909 = vmatprep.subr.bf16.mxu0 %v3808
    %3910 = vmatpush2.bf16.msra.mxu0 %v3807
    %3911 = vmatprep.subr.bf16.mxu0 %v3804
    %3912 = vmatpush2.bf16.msra.mxu0 %v3803
    %3913 = vmatprep.subr.bf16.mxu0 %v3800
    %3914 = vmatpush2.bf16.msra.mxu0 %v3799
    %3915 = vmatprep.subr.bf16.mxu0 %v3796
    %3916 = vmatpush2.bf16.msra.mxu0 %v3795
    %3917 = vmatprep.subr.bf16.mxu0 %v3792
    %3918 = vmatpush2.bf16.msra.mxu0 %v3791
    %3919 = vmatprep.mubr.bf16.mxu0 %v3097
    %3920 = vmatmul.mubr.bf16.gmra.mxu0 %v3096
    %v3921 = vpop.f32.mrf.mxu0
    %v3922 = vadd.f32 %v3520, %v3921
    %v3923 = vpop.f32.mrf.mxu0
    %v3924 = vadd.f32 %v3522, %v3923
    %v3925 = vpop.f32.mrf.mxu0
    %v3926 = vpop.f32.mrf.mxu0
    %3927 = vdwg.mxu0
    %3928 = vmatprep.subr.bf16.mxu0 %v3790
    %3929 = vmatpush1.bf16.msra.mxu0 %v3789
    %3930 = vmatprep.subr.bf16.mxu0 %v3786
    %3931 = vmatpush1.bf16.msra.mxu0 %v3785
    %3932 = vmatprep.subr.bf16.mxu0 %v3782
    %3933 = vmatpush1.bf16.msra.mxu0 %v3781
    %3934 = vmatprep.subr.bf16.mxu0 %v3778
    %3935 = vmatpush1.bf16.msra.mxu0 %v3777
    %3936 = vmatprep.subr.bf16.mxu0 %v3774
    %3937 = vmatpush1.bf16.msra.mxu0 %v3773
    %3938 = vmatprep.subr.bf16.mxu0 %v3770
    %3939 = vmatpush1.bf16.msra.mxu0 %v3769
    %3940 = vmatprep.subr.bf16.mxu0 %v3766
    %3941 = vmatpush1.bf16.msra.mxu0 %v3765
    %3942 = vmatprep.subr.bf16.mxu0 %v3762
    %3943 = vmatpush1.bf16.msra.mxu0 %v3761
    %3944 = vmatprep.subr.bf16.mxu0 %v3822
    %3945 = vmatpush2.bf16.msra.mxu0 %v3821
    %3946 = vmatprep.subr.bf16.mxu0 %v3818
    %3947 = vmatpush2.bf16.msra.mxu0 %v3817
    %3948 = vmatprep.subr.bf16.mxu0 %v3814
    %3949 = vmatpush2.bf16.msra.mxu0 %v3813
    %3950 = vmatprep.subr.bf16.mxu0 %v3810
    %3951 = vmatpush2.bf16.msra.mxu0 %v3809
    %3952 = vmatprep.subr.bf16.mxu0 %v3806
    %3953 = vmatpush2.bf16.msra.mxu0 %v3805
    %3954 = vmatprep.subr.bf16.mxu0 %v3802
    %3955 = vmatpush2.bf16.msra.mxu0 %v3801
    %3956 = vmatprep.subr.bf16.mxu0 %v3798
    %3957 = vmatpush2.bf16.msra.mxu0 %v3797
    %3958 = vmatprep.subr.bf16.mxu0 %v3794
    %3959 = vmatpush2.bf16.msra.mxu0 %v3793
    %3960 = vmatprep.mubr.bf16.mxu0 %v3097
    %3961 = vmatmul.mubr.bf16.gmra.mxu0 %v3096
    %v3962 = vpop.f32.mrf.mxu0
    %v3963 = vadd.f32 %v3561, %v3962
    %v3964 = vpop.f32.mrf.mxu0
    %v3965 = vadd.f32 %v3563, %v3964
    %v3966 = vpop.f32.mrf.mxu0
    %v3967 = vpop.f32.mrf.mxu0
    %3968 = vdwg.mxu0
    %v3969 = vadd.f32 %v3922, %v1789
    %v3970 = vadd.f32 %v3924, %v1791
    %v3971 = vadd.f32 %v3963, %v1830
    %v3972 = vadd.f32 %v3965, %v1832
    %v3973 = vxor.u32 %v3969, 2147483648
    %v3974 = vmul.f32 %v3973, 1.442695
    %v3975 = vpow.pop %v3974
    %v3976 = vadd.f32 %v3975, 1.0
    %v3977 = vrcp.pop %v3976
    %v3978 = vmul.f32 1.0, %v3977
    %v3979 = vxor.u32 %v3970, 2147483648
    %v3980 = vmul.f32 %v3979, 1.442695
    %v3981 = vpow.pop %v3980
    %v3982 = vadd.f32 %v3981, 1.0
    %v3983 = vrcp.pop %v3982
    %v3984 = vmul.f32 1.0, %v3983
    %v3985 = vtanh.pop %v3971
    %v3986 = vxor.u32 %v3972, 2147483648
    %v3987 = vmul.f32 %v3986, 1.442695
    %v3988 = vpow.pop %v3987
    %v3989 = vadd.f32 %v3988, 1.0
    %v3990 = vrcp.pop %v3989
    %v3991 = vmul.f32 1.0, %v3990
    %v3992 = vmul.f32 %v3984, %v1534
    %v3993 = vmul.f32 %v3978, %v3985
    %v3994 = vadd.f32 %v3992, %v3993
    %v3995 = vtanh.pop %v3994
    %v3996 = vmul.f32 %v3991, %v3995
    %3997 = vst [vmem:[%s8] sm:$0x1] %v3996
    %s3998 = scalar_lea.vmem %s8, 5
    %3999 = vst [vmem:[%s3998] sm:$0x1] %v3994
    %s4000 = scalar_lea.vmem [#allocation9], 1280
    %v4001 = vld [vmem:[%s4000] sm:$0xff]
    %v4002 = vld [vmem:[%s4000 + $0x8] sm:$0xff]
    %v4003 = vld [vmem:[%s4000 + $0x10] sm:$0xff]
    %v4004 = vld [vmem:[%s4000 + $0x18] sm:$0xff]
    %v4005 = vld [vmem:[%s4000 + $0x20] sm:$0xff]
    %v4006 = vld [vmem:[%s4000 + $0x28] sm:$0xff]
    %v4007 = vld [vmem:[%s4000 + $0x30] sm:$0xff]
    %v4008 = vld [vmem:[%s4000 + $0x38] sm:$0xff]
    %v4009 = vld [vmem:[%s4000 + $0x40] sm:$0xff]
    %v4010 = vld [vmem:[%s4000 + $0x48] sm:$0xff]
    %v4011 = vld [vmem:[%s4000 + $0x50] sm:$0xff]
    %v4012 = vld [vmem:[%s4000 + $0x58] sm:$0xff]
    %v4013 = vld [vmem:[%s4000 + $0x60] sm:$0xff]
    %v4014 = vld [vmem:[%s4000 + $0x68] sm:$0xff]
    %v4015 = vld [vmem:[%s4000 + $0x70] sm:$0xff]
    %v4016 = vld [vmem:[%s4000 + $0x78] sm:$0xff]
    %v4017 = vld [vmem:[%s4000 + $0x80] sm:$0xff]
    %v4018 = vld [vmem:[%s4000 + $0x88] sm:$0xff]
    %v4019 = vld [vmem:[%s4000 + $0x90] sm:$0xff]
    %v4020 = vld [vmem:[%s4000 + $0x98] sm:$0xff]
    %v4021 = vld [vmem:[%s4000 + $0xa0] sm:$0xff]
    %v4022 = vld [vmem:[%s4000 + $0xa8] sm:$0xff]
    %v4023 = vld [vmem:[%s4000 + $0xb0] sm:$0xff]
    %v4024 = vld [vmem:[%s4000 + $0xb8] sm:$0xff]
    %v4025 = vld [vmem:[%s4000 + $0xc0] sm:$0xff]
    %v4026 = vld [vmem:[%s4000 + $0xc8] sm:$0xff]
    %v4027 = vld [vmem:[%s4000 + $0xd0] sm:$0xff]
    %v4028 = vld [vmem:[%s4000 + $0xd8] sm:$0xff]
    %v4029 = vld [vmem:[%s4000 + $0xe0] sm:$0xff]
    %v4030 = vld [vmem:[%s4000 + $0xe8] sm:$0xff]
    %v4031 = vld [vmem:[%s4000 + $0xf0] sm:$0xff]
    %v4032 = vld [vmem:[%s4000 + $0xf8] sm:$0xff]
    %v4033 = vpack.c.bf16 %v3996, %v3996
    %v4066 = vunpack.c.l.b16 %v4001
    %v4067 = vunpack.c.h.b16 %v4001
    %v4068 = vunpack.c.l.b16 %v4002
    %v4069 = vunpack.c.h.b16 %v4002
    %v4070 = vunpack.c.l.b16 %v4003
    %v4071 = vunpack.c.h.b16 %v4003
    %v4072 = vunpack.c.l.b16 %v4004
    %v4073 = vunpack.c.h.b16 %v4004
    %v4074 = vunpack.c.l.b16 %v4005
    %v4075 = vunpack.c.h.b16 %v4005
    %v4076 = vunpack.c.l.b16 %v4006
    %v4077 = vunpack.c.h.b16 %v4006
    %v4078 = vunpack.c.l.b16 %v4007
    %v4079 = vunpack.c.h.b16 %v4007
    %v4080 = vunpack.c.l.b16 %v4008
    %v4081 = vunpack.c.h.b16 %v4008
    %v4082 = vunpack.c.l.b16 %v4009
    %v4083 = vunpack.c.h.b16 %v4009
    %v4084 = vunpack.c.l.b16 %v4010
    %v4085 = vunpack.c.h.b16 %v4010
    %v4086 = vunpack.c.l.b16 %v4011
    %v4087 = vunpack.c.h.b16 %v4011
    %v4088 = vunpack.c.l.b16 %v4012
    %v4089 = vunpack.c.h.b16 %v4012
    %v4090 = vunpack.c.l.b16 %v4013
    %v4091 = vunpack.c.h.b16 %v4013
    %v4092 = vunpack.c.l.b16 %v4014
    %v4093 = vunpack.c.h.b16 %v4014
    %v4094 = vunpack.c.l.b16 %v4015
    %v4095 = vunpack.c.h.b16 %v4015
    %v4096 = vunpack.c.l.b16 %v4016
    %v4097 = vunpack.c.h.b16 %v4016
    %v4098 = vunpack.c.l.b16 %v4017
    %v4099 = vunpack.c.h.b16 %v4017
    %v4100 = vunpack.c.l.b16 %v4018
    %v4101 = vunpack.c.h.b16 %v4018
    %v4102 = vunpack.c.l.b16 %v4019
    %v4103 = vunpack.c.h.b16 %v4019
    %v4104 = vunpack.c.l.b16 %v4020
    %v4105 = vunpack.c.h.b16 %v4020
    %v4106 = vunpack.c.l.b16 %v4021
    %v4107 = vunpack.c.h.b16 %v4021
    %v4108 = vunpack.c.l.b16 %v4022
    %v4109 = vunpack.c.h.b16 %v4022
    %v4110 = vunpack.c.l.b16 %v4023
    %v4111 = vunpack.c.h.b16 %v4023
    %v4112 = vunpack.c.l.b16 %v4024
    %v4113 = vunpack.c.h.b16 %v4024
    %v4114 = vunpack.c.l.b16 %v4025
    %v4115 = vunpack.c.h.b16 %v4025
    %v4116 = vunpack.c.l.b16 %v4026
    %v4117 = vunpack.c.h.b16 %v4026
    %v4118 = vunpack.c.l.b16 %v4027
    %v4119 = vunpack.c.h.b16 %v4027
    %v4120 = vunpack.c.l.b16 %v4028
    %v4121 = vunpack.c.h.b16 %v4028
    %v4122 = vunpack.c.l.b16 %v4029
    %v4123 = vunpack.c.h.b16 %v4029
    %v4124 = vunpack.c.l.b16 %v4030
    %v4125 = vunpack.c.h.b16 %v4030
    %v4126 = vunpack.c.l.b16 %v4031
    %v4127 = vunpack.c.h.b16 %v4031
    %v4128 = vunpack.c.l.b16 %v4032
    %v4129 = vunpack.c.h.b16 %v4032
    %v4130 = vpack.c.b16 %v4070, %v4066
    %v4131 = vpack.c.b16 %v4071, %v4067
    %v4132 = vpack.c.b16 %v4072, %v4068
    %v4133 = vpack.c.b16 %v4073, %v4069
    %v4134 = vpack.c.b16 %v4078, %v4074
    %v4135 = vpack.c.b16 %v4079, %v4075
    %v4136 = vpack.c.b16 %v4080, %v4076
    %v4137 = vpack.c.b16 %v4081, %v4077
    %v4138 = vpack.c.b16 %v4086, %v4082
    %v4139 = vpack.c.b16 %v4087, %v4083
    %v4140 = vpack.c.b16 %v4088, %v4084
    %v4141 = vpack.c.b16 %v4089, %v4085
    %v4142 = vpack.c.b16 %v4094, %v4090
    %v4143 = vpack.c.b16 %v4095, %v4091
    %v4144 = vpack.c.b16 %v4096, %v4092
    %v4145 = vpack.c.b16 %v4097, %v4093
    %v4146 = vpack.c.b16 %v4102, %v4098
    %v4147 = vpack.c.b16 %v4103, %v4099
    %v4148 = vpack.c.b16 %v4104, %v4100
    %v4149 = vpack.c.b16 %v4105, %v4101
    %v4150 = vpack.c.b16 %v4110, %v4106
    %v4151 = vpack.c.b16 %v4111, %v4107
    %v4152 = vpack.c.b16 %v4112, %v4108
    %v4153 = vpack.c.b16 %v4113, %v4109
    %v4154 = vpack.c.b16 %v4118, %v4114
    %v4155 = vpack.c.b16 %v4119, %v4115
    %v4156 = vpack.c.b16 %v4120, %v4116
    %v4157 = vpack.c.b16 %v4121, %v4117
    %v4158 = vpack.c.b16 %v4126, %v4122
    %v4159 = vpack.c.b16 %v4127, %v4123
    %v4160 = vpack.c.b16 %v4128, %v4124
    %v4161 = vpack.c.b16 %v4129, %v4125
    %4194 = vmatprep.subr.bf16.mxu0 %v4159
    %4195 = vmatpush1.bf16.msra.mxu0 %v4158
    %4196 = vmatprep.subr.bf16.mxu0 %v4155
    %4197 = vmatpush1.bf16.msra.mxu0 %v4154
    %4198 = vmatprep.subr.bf16.mxu0 %v4151
    %4199 = vmatpush1.bf16.msra.mxu0 %v4150
    %4200 = vmatprep.subr.bf16.mxu0 %v4147
    %4201 = vmatpush1.bf16.msra.mxu0 %v4146
    %4202 = vmatprep.subr.bf16.mxu0 %v4143
    %4203 = vmatpush1.bf16.msra.mxu0 %v4142
    %4204 = vmatprep.subr.bf16.mxu0 %v4139
    %4205 = vmatpush1.bf16.msra.mxu0 %v4138
    %4206 = vmatprep.subr.bf16.mxu0 %v4135
    %4207 = vmatpush1.bf16.msra.mxu0 %v4134
    %4208 = vmatprep.subr.bf16.mxu0 %v4131
    %4209 = vmatpush1.bf16.msra.mxu0 %v4130
    %4210 = vmatprep.subr.bf16.mxu0 0
    %4211 = vmatpush2.bf16.msra.mxu0 0
    %4212 = vmatprep.subr.bf16.mxu0 0
    %4213 = vmatpush2.bf16.msra.mxu0 0
    %4214 = vmatprep.subr.bf16.mxu0 0
    %4215 = vmatpush2.bf16.msra.mxu0 0
    %4216 = vmatprep.subr.bf16.mxu0 0
    %4217 = vmatpush2.bf16.msra.mxu0 0
    %4218 = vmatprep.subr.bf16.mxu0 0
    %4219 = vmatpush2.bf16.msra.mxu0 0
    %4220 = vmatprep.subr.bf16.mxu0 0
    %4221 = vmatpush2.bf16.msra.mxu0 0
    %4222 = vmatprep.subr.bf16.mxu0 0
    %4223 = vmatpush2.bf16.msra.mxu0 0
    %4224 = vmatprep.subr.bf16.mxu0 0
    %4225 = vmatpush2.bf16.msra.mxu0 0
    %4226 = vmatprep.mubr.bf16.mxu0 0
    %4227 = vmatmul.mubr.bf16.gmra.mxu0 %v4033
    %v4228 = vpop.f32.mrf.mxu0
    %v4229 = vadd.f32 %v2088, %v4228
    %v4230 = vpop.f32.mrf.mxu0
    %v4231 = vadd.f32 %v2090, %v4230
    %v4232 = vpop.f32.mrf.mxu0
    %v4233 = vpop.f32.mrf.mxu0
    %4234 = vdwg.mxu0
    %4235 = vmatprep.subr.bf16.mxu0 %v4161
    %4236 = vmatpush1.bf16.msra.mxu0 %v4160
    %4237 = vmatprep.subr.bf16.mxu0 %v4157
    %4238 = vmatpush1.bf16.msra.mxu0 %v4156
    %4239 = vmatprep.subr.bf16.mxu0 %v4153
    %4240 = vmatpush1.bf16.msra.mxu0 %v4152
    %4241 = vmatprep.subr.bf16.mxu0 %v4149
    %4242 = vmatpush1.bf16.msra.mxu0 %v4148
    %4243 = vmatprep.subr.bf16.mxu0 %v4145
    %4244 = vmatpush1.bf16.msra.mxu0 %v4144
    %4245 = vmatprep.subr.bf16.mxu0 %v4141
    %4246 = vmatpush1.bf16.msra.mxu0 %v4140
    %4247 = vmatprep.subr.bf16.mxu0 %v4137
    %4248 = vmatpush1.bf16.msra.mxu0 %v4136
    %4249 = vmatprep.subr.bf16.mxu0 %v4133
    %4250 = vmatpush1.bf16.msra.mxu0 %v4132
    %4251 = vmatprep.subr.bf16.mxu0 0
    %4252 = vmatpush2.bf16.msra.mxu0 0
    %4253 = vmatprep.subr.bf16.mxu0 0
    %4254 = vmatpush2.bf16.msra.mxu0 0
    %4255 = vmatprep.subr.bf16.mxu0 0
    %4256 = vmatpush2.bf16.msra.mxu0 0
    %4257 = vmatprep.subr.bf16.mxu0 0
    %4258 = vmatpush2.bf16.msra.mxu0 0
    %4259 = vmatprep.subr.bf16.mxu0 0
    %4260 = vmatpush2.bf16.msra.mxu0 0
    %4261 = vmatprep.subr.bf16.mxu0 0
    %4262 = vmatpush2.bf16.msra.mxu0 0
    %4263 = vmatprep.subr.bf16.mxu0 0
    %4264 = vmatpush2.bf16.msra.mxu0 0
    %4265 = vmatprep.subr.bf16.mxu0 0
    %4266 = vmatpush2.bf16.msra.mxu0 0
    %4267 = vmatprep.mubr.bf16.mxu0 0
    %4268 = vmatmul.mubr.bf16.gmra.mxu0 %v4033
    %v4269 = vpop.f32.mrf.mxu0
    %v4270 = vadd.f32 %v2129, %v4269
    %v4271 = vpop.f32.mrf.mxu0
    %v4272 = vadd.f32 %v2131, %v4271
    %v4273 = vpop.f32.mrf.mxu0
    %v4274 = vpop.f32.mrf.mxu0
    %4275 = vdwg.mxu0
    %v4276 = vxor.u32 %v4229, 2147483648
    %v4277 = vmul.f32 %v4276, 1.442695
    %v4278 = vpow.pop %v4277
    %v4279 = vadd.f32 %v4278, 1.0
    %v4280 = vrcp.pop %v4279
    %v4281 = vmul.f32 1.0, %v4280
    %v4282 = vxor.u32 %v4231, 2147483648
    %v4283 = vmul.f32 %v4282, 1.442695
    %v4284 = vpow.pop %v4283
    %v4285 = vadd.f32 %v4284, 1.0
    %v4286 = vrcp.pop %v4285
    %v4287 = vmul.f32 1.0, %v4286
    %v4288 = vtanh.pop %v4270
    %v4289 = vxor.u32 %v4272, 2147483648
    %v4290 = vmul.f32 %v4289, 1.442695
    %v4291 = vpow.pop %v4290
    %v4292 = vadd.f32 %v4291, 1.0
    %v4293 = vrcp.pop %v4292
    %v4294 = vmul.f32 1.0, %v4293
    %v4295 = vmul.f32 %v4287, %v1535
    %v4296 = vmul.f32 %v4281, %v4288
    %v4297 = vadd.f32 %v4295, %v4296
    %v4298 = vtanh.pop %v4297
    %v4299 = vmul.f32 %v4294, %v4298
    %s4300 = scalar_lea.vmem %s8, 1
    %4301 = vst [vmem:[%s4300] sm:$0x1] %v4299
    %s4302 = scalar_lea.vmem %s8, 6
    %4303 = vst [vmem:[%s4302] sm:$0x1] %v4297
    %s4304 = scalar_lea.vmem [#allocation9], 1536
    %v4305 = vld [vmem:[%s4304] sm:$0xff]
    %v4306 = vld [vmem:[%s4304 + $0x8] sm:$0xff]
    %v4307 = vld [vmem:[%s4304 + $0x10] sm:$0xff]
    %v4308 = vld [vmem:[%s4304 + $0x18] sm:$0xff]
    %v4309 = vld [vmem:[%s4304 + $0x20] sm:$0xff]
    %v4310 = vld [vmem:[%s4304 + $0x28] sm:$0xff]
    %v4311 = vld [vmem:[%s4304 + $0x30] sm:$0xff]
    %v4312 = vld [vmem:[%s4304 + $0x38] sm:$0xff]
    %v4313 = vld [vmem:[%s4304 + $0x40] sm:$0xff]
    %v4314 = vld [vmem:[%s4304 + $0x48] sm:$0xff]
    %v4315 = vld [vmem:[%s4304 + $0x50] sm:$0xff]
    %v4316 = vld [vmem:[%s4304 + $0x58] sm:$0xff]
    %v4317 = vld [vmem:[%s4304 + $0x60] sm:$0xff]
    %v4318 = vld [vmem:[%s4304 + $0x68] sm:$0xff]
    %v4319 = vld [vmem:[%s4304 + $0x70] sm:$0xff]
    %v4320 = vld [vmem:[%s4304 + $0x78] sm:$0xff]
    %v4321 = vld [vmem:[%s4304 + $0x80] sm:$0xff]
    %v4322 = vld [vmem:[%s4304 + $0x88] sm:$0xff]
    %v4323 = vld [vmem:[%s4304 + $0x90] sm:$0xff]
    %v4324 = vld [vmem:[%s4304 + $0x98] sm:$0xff]
    %v4325 = vld [vmem:[%s4304 + $0xa0] sm:$0xff]
    %v4326 = vld [vmem:[%s4304 + $0xa8] sm:$0xff]
    %v4327 = vld [vmem:[%s4304 + $0xb0] sm:$0xff]
    %v4328 = vld [vmem:[%s4304 + $0xb8] sm:$0xff]
    %v4329 = vld [vmem:[%s4304 + $0xc0] sm:$0xff]
    %v4330 = vld [vmem:[%s4304 + $0xc8] sm:$0xff]
    %v4331 = vld [vmem:[%s4304 + $0xd0] sm:$0xff]
    %v4332 = vld [vmem:[%s4304 + $0xd8] sm:$0xff]
    %v4333 = vld [vmem:[%s4304 + $0xe0] sm:$0xff]
    %v4334 = vld [vmem:[%s4304 + $0xe8] sm:$0xff]
    %v4335 = vld [vmem:[%s4304 + $0xf0] sm:$0xff]
    %v4336 = vld [vmem:[%s4304 + $0xf8] sm:$0xff]
    %v4337 = vpack.c.bf16 %v4299, %v4299
    %v4370 = vunpack.c.l.b16 %v4305
    %v4371 = vunpack.c.h.b16 %v4305
    %v4372 = vunpack.c.l.b16 %v4306
    %v4373 = vunpack.c.h.b16 %v4306
    %v4374 = vunpack.c.l.b16 %v4307
    %v4375 = vunpack.c.h.b16 %v4307
    %v4376 = vunpack.c.l.b16 %v4308
    %v4377 = vunpack.c.h.b16 %v4308
    %v4378 = vunpack.c.l.b16 %v4309
    %v4379 = vunpack.c.h.b16 %v4309
    %v4380 = vunpack.c.l.b16 %v4310
    %v4381 = vunpack.c.h.b16 %v4310
    %v4382 = vunpack.c.l.b16 %v4311
    %v4383 = vunpack.c.h.b16 %v4311
    %v4384 = vunpack.c.l.b16 %v4312
    %v4385 = vunpack.c.h.b16 %v4312
    %v4386 = vunpack.c.l.b16 %v4313
    %v4387 = vunpack.c.h.b16 %v4313
    %v4388 = vunpack.c.l.b16 %v4314
    %v4389 = vunpack.c.h.b16 %v4314
    %v4390 = vunpack.c.l.b16 %v4315
    %v4391 = vunpack.c.h.b16 %v4315
    %v4392 = vunpack.c.l.b16 %v4316
    %v4393 = vunpack.c.h.b16 %v4316
    %v4394 = vunpack.c.l.b16 %v4317
    %v4395 = vunpack.c.h.b16 %v4317
    %v4396 = vunpack.c.l.b16 %v4318
    %v4397 = vunpack.c.h.b16 %v4318
    %v4398 = vunpack.c.l.b16 %v4319
    %v4399 = vunpack.c.h.b16 %v4319
    %v4400 = vunpack.c.l.b16 %v4320
    %v4401 = vunpack.c.h.b16 %v4320
    %v4402 = vunpack.c.l.b16 %v4321
    %v4403 = vunpack.c.h.b16 %v4321
    %v4404 = vunpack.c.l.b16 %v4322
    %v4405 = vunpack.c.h.b16 %v4322
    %v4406 = vunpack.c.l.b16 %v4323
    %v4407 = vunpack.c.h.b16 %v4323
    %v4408 = vunpack.c.l.b16 %v4324
    %v4409 = vunpack.c.h.b16 %v4324
    %v4410 = vunpack.c.l.b16 %v4325
    %v4411 = vunpack.c.h.b16 %v4325
    %v4412 = vunpack.c.l.b16 %v4326
    %v4413 = vunpack.c.h.b16 %v4326
    %v4414 = vunpack.c.l.b16 %v4327
    %v4415 = vunpack.c.h.b16 %v4327
    %v4416 = vunpack.c.l.b16 %v4328
    %v4417 = vunpack.c.h.b16 %v4328
    %v4418 = vunpack.c.l.b16 %v4329
    %v4419 = vunpack.c.h.b16 %v4329
    %v4420 = vunpack.c.l.b16 %v4330
    %v4421 = vunpack.c.h.b16 %v4330
    %v4422 = vunpack.c.l.b16 %v4331
    %v4423 = vunpack.c.h.b16 %v4331
    %v4424 = vunpack.c.l.b16 %v4332
    %v4425 = vunpack.c.h.b16 %v4332
    %v4426 = vunpack.c.l.b16 %v4333
    %v4427 = vunpack.c.h.b16 %v4333
    %v4428 = vunpack.c.l.b16 %v4334
    %v4429 = vunpack.c.h.b16 %v4334
    %v4430 = vunpack.c.l.b16 %v4335
    %v4431 = vunpack.c.h.b16 %v4335
    %v4432 = vunpack.c.l.b16 %v4336
    %v4433 = vunpack.c.h.b16 %v4336
    %v4434 = vpack.c.b16 %v4374, %v4370
    %v4435 = vpack.c.b16 %v4375, %v4371
    %v4436 = vpack.c.b16 %v4376, %v4372
    %v4437 = vpack.c.b16 %v4377, %v4373
    %v4438 = vpack.c.b16 %v4382, %v4378
    %v4439 = vpack.c.b16 %v4383, %v4379
    %v4440 = vpack.c.b16 %v4384, %v4380
    %v4441 = vpack.c.b16 %v4385, %v4381
    %v4442 = vpack.c.b16 %v4390, %v4386
    %v4443 = vpack.c.b16 %v4391, %v4387
    %v4444 = vpack.c.b16 %v4392, %v4388
    %v4445 = vpack.c.b16 %v4393, %v4389
    %v4446 = vpack.c.b16 %v4398, %v4394
    %v4447 = vpack.c.b16 %v4399, %v4395
    %v4448 = vpack.c.b16 %v4400, %v4396
    %v4449 = vpack.c.b16 %v4401, %v4397
    %v4450 = vpack.c.b16 %v4406, %v4402
    %v4451 = vpack.c.b16 %v4407, %v4403
    %v4452 = vpack.c.b16 %v4408, %v4404
    %v4453 = vpack.c.b16 %v4409, %v4405
    %v4454 = vpack.c.b16 %v4414, %v4410
    %v4455 = vpack.c.b16 %v4415, %v4411
    %v4456 = vpack.c.b16 %v4416, %v4412
    %v4457 = vpack.c.b16 %v4417, %v4413
    %v4458 = vpack.c.b16 %v4422, %v4418
    %v4459 = vpack.c.b16 %v4423, %v4419
    %v4460 = vpack.c.b16 %v4424, %v4420
    %v4461 = vpack.c.b16 %v4425, %v4421
    %v4462 = vpack.c.b16 %v4430, %v4426
    %v4463 = vpack.c.b16 %v4431, %v4427
    %v4464 = vpack.c.b16 %v4432, %v4428
    %v4465 = vpack.c.b16 %v4433, %v4429
    %4498 = vmatprep.subr.bf16.mxu0 %v4463
    %4499 = vmatpush1.bf16.msra.mxu0 %v4462
    %4500 = vmatprep.subr.bf16.mxu0 %v4459
    %4501 = vmatpush1.bf16.msra.mxu0 %v4458
    %4502 = vmatprep.subr.bf16.mxu0 %v4455
    %4503 = vmatpush1.bf16.msra.mxu0 %v4454
    %4504 = vmatprep.subr.bf16.mxu0 %v4451
    %4505 = vmatpush1.bf16.msra.mxu0 %v4450
    %4506 = vmatprep.subr.bf16.mxu0 %v4447
    %4507 = vmatpush1.bf16.msra.mxu0 %v4446
    %4508 = vmatprep.subr.bf16.mxu0 %v4443
    %4509 = vmatpush1.bf16.msra.mxu0 %v4442
    %4510 = vmatprep.subr.bf16.mxu0 %v4439
    %4511 = vmatpush1.bf16.msra.mxu0 %v4438
    %4512 = vmatprep.subr.bf16.mxu0 %v4435
    %4513 = vmatpush1.bf16.msra.mxu0 %v4434
    %4514 = vmatprep.subr.bf16.mxu0 0
    %4515 = vmatpush2.bf16.msra.mxu0 0
    %4516 = vmatprep.subr.bf16.mxu0 0
    %4517 = vmatpush2.bf16.msra.mxu0 0
    %4518 = vmatprep.subr.bf16.mxu0 0
    %4519 = vmatpush2.bf16.msra.mxu0 0
    %4520 = vmatprep.subr.bf16.mxu0 0
    %4521 = vmatpush2.bf16.msra.mxu0 0
    %4522 = vmatprep.subr.bf16.mxu0 0
    %4523 = vmatpush2.bf16.msra.mxu0 0
    %4524 = vmatprep.subr.bf16.mxu0 0
    %4525 = vmatpush2.bf16.msra.mxu0 0
    %4526 = vmatprep.subr.bf16.mxu0 0
    %4527 = vmatpush2.bf16.msra.mxu0 0
    %4528 = vmatprep.subr.bf16.mxu0 0
    %4529 = vmatpush2.bf16.msra.mxu0 0
    %4530 = vmatprep.mubr.bf16.mxu0 0
    %4531 = vmatmul.mubr.bf16.gmra.mxu0 %v4337
    %v4532 = vpop.f32.mrf.mxu0
    %v4533 = vadd.f32 %v2387, %v4532
    %v4534 = vpop.f32.mrf.mxu0
    %v4535 = vadd.f32 %v2389, %v4534
    %v4536 = vpop.f32.mrf.mxu0
    %v4537 = vpop.f32.mrf.mxu0
    %4538 = vdwg.mxu0
    %4539 = vmatprep.subr.bf16.mxu0 %v4465
    %4540 = vmatpush1.bf16.msra.mxu0 %v4464
    %4541 = vmatprep.subr.bf16.mxu0 %v4461
    %4542 = vmatpush1.bf16.msra.mxu0 %v4460
    %4543 = vmatprep.subr.bf16.mxu0 %v4457
    %4544 = vmatpush1.bf16.msra.mxu0 %v4456
    %4545 = vmatprep.subr.bf16.mxu0 %v4453
    %4546 = vmatpush1.bf16.msra.mxu0 %v4452
    %4547 = vmatprep.subr.bf16.mxu0 %v4449
    %4548 = vmatpush1.bf16.msra.mxu0 %v4448
    %4549 = vmatprep.subr.bf16.mxu0 %v4445
    %4550 = vmatpush1.bf16.msra.mxu0 %v4444
    %4551 = vmatprep.subr.bf16.mxu0 %v4441
    %4552 = vmatpush1.bf16.msra.mxu0 %v4440
    %4553 = vmatprep.subr.bf16.mxu0 %v4437
    %4554 = vmatpush1.bf16.msra.mxu0 %v4436
    %4555 = vmatprep.subr.bf16.mxu0 0
    %4556 = vmatpush2.bf16.msra.mxu0 0
    %4557 = vmatprep.subr.bf16.mxu0 0
    %4558 = vmatpush2.bf16.msra.mxu0 0
    %4559 = vmatprep.subr.bf16.mxu0 0
    %4560 = vmatpush2.bf16.msra.mxu0 0
    %4561 = vmatprep.subr.bf16.mxu0 0
    %4562 = vmatpush2.bf16.msra.mxu0 0
    %4563 = vmatprep.subr.bf16.mxu0 0
    %4564 = vmatpush2.bf16.msra.mxu0 0
    %4565 = vmatprep.subr.bf16.mxu0 0
    %4566 = vmatpush2.bf16.msra.mxu0 0
    %4567 = vmatprep.subr.bf16.mxu0 0
    %4568 = vmatpush2.bf16.msra.mxu0 0
    %4569 = vmatprep.subr.bf16.mxu0 0
    %4570 = vmatpush2.bf16.msra.mxu0 0
    %4571 = vmatprep.mubr.bf16.mxu0 0
    %4572 = vmatmul.mubr.bf16.gmra.mxu0 %v4337
    %v4573 = vpop.f32.mrf.mxu0
    %v4574 = vadd.f32 %v2428, %v4573
    %v4575 = vpop.f32.mrf.mxu0
    %v4576 = vadd.f32 %v2430, %v4575
    %v4577 = vpop.f32.mrf.mxu0
    %v4578 = vpop.f32.mrf.mxu0
    %4579 = vdwg.mxu0
    %v4580 = vxor.u32 %v4533, 2147483648
    %v4581 = vmul.f32 %v4580, 1.442695
    %v4582 = vpow.pop %v4581
    %v4583 = vadd.f32 %v4582, 1.0
    %v4584 = vrcp.pop %v4583
    %v4585 = vmul.f32 1.0, %v4584
    %v4586 = vxor.u32 %v4535, 2147483648
    %v4587 = vmul.f32 %v4586, 1.442695
    %v4588 = vpow.pop %v4587
    %v4589 = vadd.f32 %v4588, 1.0
    %v4590 = vrcp.pop %v4589
    %v4591 = vmul.f32 1.0, %v4590
    %v4592 = vtanh.pop %v4574
    %v4593 = vxor.u32 %v4576, 2147483648
    %v4594 = vmul.f32 %v4593, 1.442695
    %v4595 = vpow.pop %v4594
    %v4596 = vadd.f32 %v4595, 1.0
    %v4597 = vrcp.pop %v4596
    %v4598 = vmul.f32 1.0, %v4597
    %v4599 = vmul.f32 %v4591, %v1536
    %v4600 = vmul.f32 %v4585, %v4592
    %v4601 = vadd.f32 %v4599, %v4600
    %v4602 = vtanh.pop %v4601
    %v4603 = vmul.f32 %v4598, %v4602
    %s4604 = scalar_lea.vmem %s8, 2
    %4605 = vst [vmem:[%s4604] sm:$0x1] %v4603
    %s4606 = scalar_lea.vmem %s8, 7
    %4607 = vst [vmem:[%s4606] sm:$0x1] %v4601
    %s4608 = scalar_lea.vmem [#allocation9], 1792
    %v4609 = vld [vmem:[%s4608] sm:$0xff]
    %v4610 = vld [vmem:[%s4608 + $0x8] sm:$0xff]
    %v4611 = vld [vmem:[%s4608 + $0x10] sm:$0xff]
    %v4612 = vld [vmem:[%s4608 + $0x18] sm:$0xff]
    %v4613 = vld [vmem:[%s4608 + $0x20] sm:$0xff]
    %v4614 = vld [vmem:[%s4608 + $0x28] sm:$0xff]
    %v4615 = vld [vmem:[%s4608 + $0x30] sm:$0xff]
    %v4616 = vld [vmem:[%s4608 + $0x38] sm:$0xff]
    %v4617 = vld [vmem:[%s4608 + $0x40] sm:$0xff]
    %v4618 = vld [vmem:[%s4608 + $0x48] sm:$0xff]
    %v4619 = vld [vmem:[%s4608 + $0x50] sm:$0xff]
    %v4620 = vld [vmem:[%s4608 + $0x58] sm:$0xff]
    %v4621 = vld [vmem:[%s4608 + $0x60] sm:$0xff]
    %v4622 = vld [vmem:[%s4608 + $0x68] sm:$0xff]
    %v4623 = vld [vmem:[%s4608 + $0x70] sm:$0xff]
    %v4624 = vld [vmem:[%s4608 + $0x78] sm:$0xff]
    %v4625 = vld [vmem:[%s4608 + $0x80] sm:$0xff]
    %v4626 = vld [vmem:[%s4608 + $0x88] sm:$0xff]
    %v4627 = vld [vmem:[%s4608 + $0x90] sm:$0xff]
    %v4628 = vld [vmem:[%s4608 + $0x98] sm:$0xff]
    %v4629 = vld [vmem:[%s4608 + $0xa0] sm:$0xff]
    %v4630 = vld [vmem:[%s4608 + $0xa8] sm:$0xff]
    %v4631 = vld [vmem:[%s4608 + $0xb0] sm:$0xff]
    %v4632 = vld [vmem:[%s4608 + $0xb8] sm:$0xff]
    %v4633 = vld [vmem:[%s4608 + $0xc0] sm:$0xff]
    %v4634 = vld [vmem:[%s4608 + $0xc8] sm:$0xff]
    %v4635 = vld [vmem:[%s4608 + $0xd0] sm:$0xff]
    %v4636 = vld [vmem:[%s4608 + $0xd8] sm:$0xff]
    %v4637 = vld [vmem:[%s4608 + $0xe0] sm:$0xff]
    %v4638 = vld [vmem:[%s4608 + $0xe8] sm:$0xff]
    %v4639 = vld [vmem:[%s4608 + $0xf0] sm:$0xff]
    %v4640 = vld [vmem:[%s4608 + $0xf8] sm:$0xff]
    %v4641 = vpack.c.bf16 %v4603, %v4603
    %v4674 = vunpack.c.l.b16 %v4609
    %v4675 = vunpack.c.h.b16 %v4609
    %v4676 = vunpack.c.l.b16 %v4610
    %v4677 = vunpack.c.h.b16 %v4610
    %v4678 = vunpack.c.l.b16 %v4611
    %v4679 = vunpack.c.h.b16 %v4611
    %v4680 = vunpack.c.l.b16 %v4612
    %v4681 = vunpack.c.h.b16 %v4612
    %v4682 = vunpack.c.l.b16 %v4613
    %v4683 = vunpack.c.h.b16 %v4613
    %v4684 = vunpack.c.l.b16 %v4614
    %v4685 = vunpack.c.h.b16 %v4614
    %v4686 = vunpack.c.l.b16 %v4615
    %v4687 = vunpack.c.h.b16 %v4615
    %v4688 = vunpack.c.l.b16 %v4616
    %v4689 = vunpack.c.h.b16 %v4616
    %v4690 = vunpack.c.l.b16 %v4617
    %v4691 = vunpack.c.h.b16 %v4617
    %v4692 = vunpack.c.l.b16 %v4618
    %v4693 = vunpack.c.h.b16 %v4618
    %v4694 = vunpack.c.l.b16 %v4619
    %v4695 = vunpack.c.h.b16 %v4619
    %v4696 = vunpack.c.l.b16 %v4620
    %v4697 = vunpack.c.h.b16 %v4620
    %v4698 = vunpack.c.l.b16 %v4621
    %v4699 = vunpack.c.h.b16 %v4621
    %v4700 = vunpack.c.l.b16 %v4622
    %v4701 = vunpack.c.h.b16 %v4622
    %v4702 = vunpack.c.l.b16 %v4623
    %v4703 = vunpack.c.h.b16 %v4623
    %v4704 = vunpack.c.l.b16 %v4624
    %v4705 = vunpack.c.h.b16 %v4624
    %v4706 = vunpack.c.l.b16 %v4625
    %v4707 = vunpack.c.h.b16 %v4625
    %v4708 = vunpack.c.l.b16 %v4626
    %v4709 = vunpack.c.h.b16 %v4626
    %v4710 = vunpack.c.l.b16 %v4627
    %v4711 = vunpack.c.h.b16 %v4627
    %v4712 = vunpack.c.l.b16 %v4628
    %v4713 = vunpack.c.h.b16 %v4628
    %v4714 = vunpack.c.l.b16 %v4629
    %v4715 = vunpack.c.h.b16 %v4629
    %v4716 = vunpack.c.l.b16 %v4630
    %v4717 = vunpack.c.h.b16 %v4630
    %v4718 = vunpack.c.l.b16 %v4631
    %v4719 = vunpack.c.h.b16 %v4631
    %v4720 = vunpack.c.l.b16 %v4632
    %v4721 = vunpack.c.h.b16 %v4632
    %v4722 = vunpack.c.l.b16 %v4633
    %v4723 = vunpack.c.h.b16 %v4633
    %v4724 = vunpack.c.l.b16 %v4634
    %v4725 = vunpack.c.h.b16 %v4634
    %v4726 = vunpack.c.l.b16 %v4635
    %v4727 = vunpack.c.h.b16 %v4635
    %v4728 = vunpack.c.l.b16 %v4636
    %v4729 = vunpack.c.h.b16 %v4636
    %v4730 = vunpack.c.l.b16 %v4637
    %v4731 = vunpack.c.h.b16 %v4637
    %v4732 = vunpack.c.l.b16 %v4638
    %v4733 = vunpack.c.h.b16 %v4638
    %v4734 = vunpack.c.l.b16 %v4639
    %v4735 = vunpack.c.h.b16 %v4639
    %v4736 = vunpack.c.l.b16 %v4640
    %v4737 = vunpack.c.h.b16 %v4640
    %v4738 = vpack.c.b16 %v4678, %v4674
    %v4739 = vpack.c.b16 %v4679, %v4675
    %v4740 = vpack.c.b16 %v4680, %v4676
    %v4741 = vpack.c.b16 %v4681, %v4677
    %v4742 = vpack.c.b16 %v4686, %v4682
    %v4743 = vpack.c.b16 %v4687, %v4683
    %v4744 = vpack.c.b16 %v4688, %v4684
    %v4745 = vpack.c.b16 %v4689, %v4685
    %v4746 = vpack.c.b16 %v4694, %v4690
    %v4747 = vpack.c.b16 %v4695, %v4691
    %v4748 = vpack.c.b16 %v4696, %v4692
    %v4749 = vpack.c.b16 %v4697, %v4693
    %v4750 = vpack.c.b16 %v4702, %v4698
    %v4751 = vpack.c.b16 %v4703, %v4699
    %v4752 = vpack.c.b16 %v4704, %v4700
    %v4753 = vpack.c.b16 %v4705, %v4701
    %v4754 = vpack.c.b16 %v4710, %v4706
    %v4755 = vpack.c.b16 %v4711, %v4707
    %v4756 = vpack.c.b16 %v4712, %v4708
    %v4757 = vpack.c.b16 %v4713, %v4709
    %v4758 = vpack.c.b16 %v4718, %v4714
    %v4759 = vpack.c.b16 %v4719, %v4715
    %v4760 = vpack.c.b16 %v4720, %v4716
    %v4761 = vpack.c.b16 %v4721, %v4717
    %v4762 = vpack.c.b16 %v4726, %v4722
    %v4763 = vpack.c.b16 %v4727, %v4723
    %v4764 = vpack.c.b16 %v4728, %v4724
    %v4765 = vpack.c.b16 %v4729, %v4725
    %v4766 = vpack.c.b16 %v4734, %v4730
    %v4767 = vpack.c.b16 %v4735, %v4731
    %v4768 = vpack.c.b16 %v4736, %v4732
    %v4769 = vpack.c.b16 %v4737, %v4733
    %4802 = vmatprep.subr.bf16.mxu0 %v4767
    %4803 = vmatpush1.bf16.msra.mxu0 %v4766
    %4804 = vmatprep.subr.bf16.mxu0 %v4763
    %4805 = vmatpush1.bf16.msra.mxu0 %v4762
    %4806 = vmatprep.subr.bf16.mxu0 %v4759
    %4807 = vmatpush1.bf16.msra.mxu0 %v4758
    %4808 = vmatprep.subr.bf16.mxu0 %v4755
    %4809 = vmatpush1.bf16.msra.mxu0 %v4754
    %4810 = vmatprep.subr.bf16.mxu0 %v4751
    %4811 = vmatpush1.bf16.msra.mxu0 %v4750
    %4812 = vmatprep.subr.bf16.mxu0 %v4747
    %4813 = vmatpush1.bf16.msra.mxu0 %v4746
    %4814 = vmatprep.subr.bf16.mxu0 %v4743
    %4815 = vmatpush1.bf16.msra.mxu0 %v4742
    %4816 = vmatprep.subr.bf16.mxu0 %v4739
    %4817 = vmatpush1.bf16.msra.mxu0 %v4738
    %4818 = vmatprep.subr.bf16.mxu0 0
    %4819 = vmatpush2.bf16.msra.mxu0 0
    %4820 = vmatprep.subr.bf16.mxu0 0
    %4821 = vmatpush2.bf16.msra.mxu0 0
    %4822 = vmatprep.subr.bf16.mxu0 0
    %4823 = vmatpush2.bf16.msra.mxu0 0
    %4824 = vmatprep.subr.bf16.mxu0 0
    %4825 = vmatpush2.bf16.msra.mxu0 0
    %4826 = vmatprep.subr.bf16.mxu0 0
    %4827 = vmatpush2.bf16.msra.mxu0 0
    %4828 = vmatprep.subr.bf16.mxu0 0
    %4829 = vmatpush2.bf16.msra.mxu0 0
    %4830 = vmatprep.subr.bf16.mxu0 0
    %4831 = vmatpush2.bf16.msra.mxu0 0
    %4832 = vmatprep.subr.bf16.mxu0 0
    %4833 = vmatpush2.bf16.msra.mxu0 0
    %4834 = vmatprep.mubr.bf16.mxu0 0
    %4835 = vmatmul.mubr.bf16.gmra.mxu0 %v4641
    %v4836 = vpop.f32.mrf.mxu0
    %v4837 = vadd.f32 %v2686, %v4836
    %v4838 = vpop.f32.mrf.mxu0
    %v4839 = vadd.f32 %v2688, %v4838
    %v4840 = vpop.f32.mrf.mxu0
    %v4841 = vpop.f32.mrf.mxu0
    %4842 = vdwg.mxu0
    %4843 = vmatprep.subr.bf16.mxu0 %v4769
    %4844 = vmatpush1.bf16.msra.mxu0 %v4768
    %4845 = vmatprep.subr.bf16.mxu0 %v4765
    %4846 = vmatpush1.bf16.msra.mxu0 %v4764
    %4847 = vmatprep.subr.bf16.mxu0 %v4761
    %4848 = vmatpush1.bf16.msra.mxu0 %v4760
    %4849 = vmatprep.subr.bf16.mxu0 %v4757
    %4850 = vmatpush1.bf16.msra.mxu0 %v4756
    %4851 = vmatprep.subr.bf16.mxu0 %v4753
    %4852 = vmatpush1.bf16.msra.mxu0 %v4752
    %4853 = vmatprep.subr.bf16.mxu0 %v4749
    %4854 = vmatpush1.bf16.msra.mxu0 %v4748
    %4855 = vmatprep.subr.bf16.mxu0 %v4745
    %4856 = vmatpush1.bf16.msra.mxu0 %v4744
    %4857 = vmatprep.subr.bf16.mxu0 %v4741
    %4858 = vmatpush1.bf16.msra.mxu0 %v4740
    %4859 = vmatprep.subr.bf16.mxu0 0
    %4860 = vmatpush2.bf16.msra.mxu0 0
    %4861 = vmatprep.subr.bf16.mxu0 0
    %4862 = vmatpush2.bf16.msra.mxu0 0
    %4863 = vmatprep.subr.bf16.mxu0 0
    %4864 = vmatpush2.bf16.msra.mxu0 0
    %4865 = vmatprep.subr.bf16.mxu0 0
    %4866 = vmatpush2.bf16.msra.mxu0 0
    %4867 = vmatprep.subr.bf16.mxu0 0
    %4868 = vmatpush2.bf16.msra.mxu0 0
    %4869 = vmatprep.subr.bf16.mxu0 0
    %4870 = vmatpush2.bf16.msra.mxu0 0
    %4871 = vmatprep.subr.bf16.mxu0 0
    %4872 = vmatpush2.bf16.msra.mxu0 0
    %4873 = vmatprep.subr.bf16.mxu0 0
    %4874 = vmatpush2.bf16.msra.mxu0 0
    %4875 = vmatprep.mubr.bf16.mxu0 0
    %4876 = vmatmul.mubr.bf16.gmra.mxu0 %v4641
    %v4877 = vpop.f32.mrf.mxu0
    %v4878 = vadd.f32 %v2727, %v4877
    %v4879 = vpop.f32.mrf.mxu0
    %v4880 = vadd.f32 %v2729, %v4879
    %v4881 = vpop.f32.mrf.mxu0
    %v4882 = vpop.f32.mrf.mxu0
    %4883 = vdwg.mxu0
    %v4884 = vxor.u32 %v4837, 2147483648
    %v4885 = vmul.f32 %v4884, 1.442695
    %v4886 = vpow.pop %v4885
    %v4887 = vadd.f32 %v4886, 1.0
    %v4888 = vrcp.pop %v4887
    %v4889 = vmul.f32 1.0, %v4888
    %v4890 = vxor.u32 %v4839, 2147483648
    %v4891 = vmul.f32 %v4890, 1.442695
    %v4892 = vpow.pop %v4891
    %v4893 = vadd.f32 %v4892, 1.0
    %v4894 = vrcp.pop %v4893
    %v4895 = vmul.f32 1.0, %v4894
    %v4896 = vtanh.pop %v4878
    %v4897 = vxor.u32 %v4880, 2147483648
    %v4898 = vmul.f32 %v4897, 1.442695
    %v4899 = vpow.pop %v4898
    %v4900 = vadd.f32 %v4899, 1.0
    %v4901 = vrcp.pop %v4900
    %v4902 = vmul.f32 1.0, %v4901
    %v4903 = vmul.f32 %v4895, %v1537
    %v4904 = vmul.f32 %v4889, %v4896
    %v4905 = vadd.f32 %v4903, %v4904
    %v4906 = vtanh.pop %v4905
    %v4907 = vmul.f32 %v4902, %v4906
    %s4908 = scalar_lea.vmem %s8, 3
    %4909 = vst [vmem:[%s4908] sm:$0x1] %v4907
    %s4910 = scalar_lea.vmem %s8, 8
    %4911 = vst [vmem:[%s4910] sm:$0x1] %v4905
    %s4912 = scalar_lea.vmem [#allocation9], 2048
    %v4913 = vld [vmem:[%s4912] sm:$0xff]
    %v4914 = vld [vmem:[%s4912 + $0x8] sm:$0xff]
    %v4915 = vld [vmem:[%s4912 + $0x10] sm:$0xff]
    %v4916 = vld [vmem:[%s4912 + $0x18] sm:$0xff]
    %v4917 = vld [vmem:[%s4912 + $0x20] sm:$0xff]
    %v4918 = vld [vmem:[%s4912 + $0x28] sm:$0xff]
    %v4919 = vld [vmem:[%s4912 + $0x30] sm:$0xff]
    %v4920 = vld [vmem:[%s4912 + $0x38] sm:$0xff]
    %v4921 = vld [vmem:[%s4912 + $0x40] sm:$0xff]
    %v4922 = vld [vmem:[%s4912 + $0x48] sm:$0xff]
    %v4923 = vld [vmem:[%s4912 + $0x50] sm:$0xff]
    %v4924 = vld [vmem:[%s4912 + $0x58] sm:$0xff]
    %v4925 = vld [vmem:[%s4912 + $0x60] sm:$0xff]
    %v4926 = vld [vmem:[%s4912 + $0x68] sm:$0xff]
    %v4927 = vld [vmem:[%s4912 + $0x70] sm:$0xff]
    %v4928 = vld [vmem:[%s4912 + $0x78] sm:$0xff]
    %v4929 = vld [vmem:[%s4912 + $0x80] sm:$0xff]
    %v4930 = vld [vmem:[%s4912 + $0x88] sm:$0xff]
    %v4931 = vld [vmem:[%s4912 + $0x90] sm:$0xff]
    %v4932 = vld [vmem:[%s4912 + $0x98] sm:$0xff]
    %v4933 = vld [vmem:[%s4912 + $0xa0] sm:$0xff]
    %v4934 = vld [vmem:[%s4912 + $0xa8] sm:$0xff]
    %v4935 = vld [vmem:[%s4912 + $0xb0] sm:$0xff]
    %v4936 = vld [vmem:[%s4912 + $0xb8] sm:$0xff]
    %v4937 = vld [vmem:[%s4912 + $0xc0] sm:$0xff]
    %v4938 = vld [vmem:[%s4912 + $0xc8] sm:$0xff]
    %v4939 = vld [vmem:[%s4912 + $0xd0] sm:$0xff]
    %v4940 = vld [vmem:[%s4912 + $0xd8] sm:$0xff]
    %v4941 = vld [vmem:[%s4912 + $0xe0] sm:$0xff]
    %v4942 = vld [vmem:[%s4912 + $0xe8] sm:$0xff]
    %v4943 = vld [vmem:[%s4912 + $0xf0] sm:$0xff]
    %v4944 = vld [vmem:[%s4912 + $0xf8] sm:$0xff]
    %v4945 = vpack.c.bf16 %v4907, %v4907
    %v4978 = vunpack.c.l.b16 %v4913
    %v4979 = vunpack.c.h.b16 %v4913
    %v4980 = vunpack.c.l.b16 %v4914
    %v4981 = vunpack.c.h.b16 %v4914
    %v4982 = vunpack.c.l.b16 %v4915
    %v4983 = vunpack.c.h.b16 %v4915
    %v4984 = vunpack.c.l.b16 %v4916
    %v4985 = vunpack.c.h.b16 %v4916
    %v4986 = vunpack.c.l.b16 %v4917
    %v4987 = vunpack.c.h.b16 %v4917
    %v4988 = vunpack.c.l.b16 %v4918
    %v4989 = vunpack.c.h.b16 %v4918
    %v4990 = vunpack.c.l.b16 %v4919
    %v4991 = vunpack.c.h.b16 %v4919
    %v4992 = vunpack.c.l.b16 %v4920
    %v4993 = vunpack.c.h.b16 %v4920
    %v4994 = vunpack.c.l.b16 %v4921
    %v4995 = vunpack.c.h.b16 %v4921
    %v4996 = vunpack.c.l.b16 %v4922
    %v4997 = vunpack.c.h.b16 %v4922
    %v4998 = vunpack.c.l.b16 %v4923
    %v4999 = vunpack.c.h.b16 %v4923
    %v5000 = vunpack.c.l.b16 %v4924
    %v5001 = vunpack.c.h.b16 %v4924
    %v5002 = vunpack.c.l.b16 %v4925
    %v5003 = vunpack.c.h.b16 %v4925
    %v5004 = vunpack.c.l.b16 %v4926
    %v5005 = vunpack.c.h.b16 %v4926
    %v5006 = vunpack.c.l.b16 %v4927
    %v5007 = vunpack.c.h.b16 %v4927
    %v5008 = vunpack.c.l.b16 %v4928
    %v5009 = vunpack.c.h.b16 %v4928
    %v5010 = vunpack.c.l.b16 %v4929
    %v5011 = vunpack.c.h.b16 %v4929
    %v5012 = vunpack.c.l.b16 %v4930
    %v5013 = vunpack.c.h.b16 %v4930
    %v5014 = vunpack.c.l.b16 %v4931
    %v5015 = vunpack.c.h.b16 %v4931
    %v5016 = vunpack.c.l.b16 %v4932
    %v5017 = vunpack.c.h.b16 %v4932
    %v5018 = vunpack.c.l.b16 %v4933
    %v5019 = vunpack.c.h.b16 %v4933
    %v5020 = vunpack.c.l.b16 %v4934
    %v5021 = vunpack.c.h.b16 %v4934
    %v5022 = vunpack.c.l.b16 %v4935
    %v5023 = vunpack.c.h.b16 %v4935
    %v5024 = vunpack.c.l.b16 %v4936
    %v5025 = vunpack.c.h.b16 %v4936
    %v5026 = vunpack.c.l.b16 %v4937
    %v5027 = vunpack.c.h.b16 %v4937
    %v5028 = vunpack.c.l.b16 %v4938
    %v5029 = vunpack.c.h.b16 %v4938
    %v5030 = vunpack.c.l.b16 %v4939
    %v5031 = vunpack.c.h.b16 %v4939
    %v5032 = vunpack.c.l.b16 %v4940
    %v5033 = vunpack.c.h.b16 %v4940
    %v5034 = vunpack.c.l.b16 %v4941
    %v5035 = vunpack.c.h.b16 %v4941
    %v5036 = vunpack.c.l.b16 %v4942
    %v5037 = vunpack.c.h.b16 %v4942
    %v5038 = vunpack.c.l.b16 %v4943
    %v5039 = vunpack.c.h.b16 %v4943
    %v5040 = vunpack.c.l.b16 %v4944
    %v5041 = vunpack.c.h.b16 %v4944
    %v5042 = vpack.c.b16 %v4982, %v4978
    %v5043 = vpack.c.b16 %v4983, %v4979
    %v5044 = vpack.c.b16 %v4984, %v4980
    %v5045 = vpack.c.b16 %v4985, %v4981
    %v5046 = vpack.c.b16 %v4990, %v4986
    %v5047 = vpack.c.b16 %v4991, %v4987
    %v5048 = vpack.c.b16 %v4992, %v4988
    %v5049 = vpack.c.b16 %v4993, %v4989
    %v5050 = vpack.c.b16 %v4998, %v4994
    %v5051 = vpack.c.b16 %v4999, %v4995
    %v5052 = vpack.c.b16 %v5000, %v4996
    %v5053 = vpack.c.b16 %v5001, %v4997
    %v5054 = vpack.c.b16 %v5006, %v5002
    %v5055 = vpack.c.b16 %v5007, %v5003
    %v5056 = vpack.c.b16 %v5008, %v5004
    %v5057 = vpack.c.b16 %v5009, %v5005
    %v5058 = vpack.c.b16 %v5014, %v5010
    %v5059 = vpack.c.b16 %v5015, %v5011
    %v5060 = vpack.c.b16 %v5016, %v5012
    %v5061 = vpack.c.b16 %v5017, %v5013
    %v5062 = vpack.c.b16 %v5022, %v5018
    %v5063 = vpack.c.b16 %v5023, %v5019
    %v5064 = vpack.c.b16 %v5024, %v5020
    %v5065 = vpack.c.b16 %v5025, %v5021
    %v5066 = vpack.c.b16 %v5030, %v5026
    %v5067 = vpack.c.b16 %v5031, %v5027
    %v5068 = vpack.c.b16 %v5032, %v5028
    %v5069 = vpack.c.b16 %v5033, %v5029
    %v5070 = vpack.c.b16 %v5038, %v5034
    %v5071 = vpack.c.b16 %v5039, %v5035
    %v5072 = vpack.c.b16 %v5040, %v5036
    %v5073 = vpack.c.b16 %v5041, %v5037
    %5106 = vmatprep.subr.bf16.mxu0 %v5071
    %5107 = vmatpush1.bf16.msra.mxu0 %v5070
    %5108 = vmatprep.subr.bf16.mxu0 %v5067
    %5109 = vmatpush1.bf16.msra.mxu0 %v5066
    %5110 = vmatprep.subr.bf16.mxu0 %v5063
    %5111 = vmatpush1.bf16.msra.mxu0 %v5062
    %5112 = vmatprep.subr.bf16.mxu0 %v5059
    %5113 = vmatpush1.bf16.msra.mxu0 %v5058
    %5114 = vmatprep.subr.bf16.mxu0 %v5055
    %5115 = vmatpush1.bf16.msra.mxu0 %v5054
    %5116 = vmatprep.subr.bf16.mxu0 %v5051
    %5117 = vmatpush1.bf16.msra.mxu0 %v5050
    %5118 = vmatprep.subr.bf16.mxu0 %v5047
    %5119 = vmatpush1.bf16.msra.mxu0 %v5046
    %5120 = vmatprep.subr.bf16.mxu0 %v5043
    %5121 = vmatpush1.bf16.msra.mxu0 %v5042
    %5122 = vmatprep.subr.bf16.mxu0 0
    %5123 = vmatpush2.bf16.msra.mxu0 0
    %5124 = vmatprep.subr.bf16.mxu0 0
    %5125 = vmatpush2.bf16.msra.mxu0 0
    %5126 = vmatprep.subr.bf16.mxu0 0
    %5127 = vmatpush2.bf16.msra.mxu0 0
    %5128 = vmatprep.subr.bf16.mxu0 0
    %5129 = vmatpush2.bf16.msra.mxu0 0
    %5130 = vmatprep.subr.bf16.mxu0 0
    %5131 = vmatpush2.bf16.msra.mxu0 0
    %5132 = vmatprep.subr.bf16.mxu0 0
    %5133 = vmatpush2.bf16.msra.mxu0 0
    %5134 = vmatprep.subr.bf16.mxu0 0
    %5135 = vmatpush2.bf16.msra.mxu0 0
    %5136 = vmatprep.subr.bf16.mxu0 0
    %5137 = vmatpush2.bf16.msra.mxu0 0
    %5138 = vmatprep.mubr.bf16.mxu0 0
    %5139 = vmatmul.mubr.bf16.gmra.mxu0 %v4945
    %v5140 = vpop.f32.mrf.mxu0
    %v5141 = vadd.f32 %v2985, %v5140
    %v5142 = vpop.f32.mrf.mxu0
    %v5143 = vadd.f32 %v2987, %v5142
    %v5144 = vpop.f32.mrf.mxu0
    %v5145 = vpop.f32.mrf.mxu0
    %5146 = vdwg.mxu0
    %5147 = vmatprep.subr.bf16.mxu0 %v5073
    %5148 = vmatpush1.bf16.msra.mxu0 %v5072
    %5149 = vmatprep.subr.bf16.mxu0 %v5069
    %5150 = vmatpush1.bf16.msra.mxu0 %v5068
    %5151 = vmatprep.subr.bf16.mxu0 %v5065
    %5152 = vmatpush1.bf16.msra.mxu0 %v5064
    %5153 = vmatprep.subr.bf16.mxu0 %v5061
    %5154 = vmatpush1.bf16.msra.mxu0 %v5060
    %5155 = vmatprep.subr.bf16.mxu0 %v5057
    %5156 = vmatpush1.bf16.msra.mxu0 %v5056
    %5157 = vmatprep.subr.bf16.mxu0 %v5053
    %5158 = vmatpush1.bf16.msra.mxu0 %v5052
    %5159 = vmatprep.subr.bf16.mxu0 %v5049
    %5160 = vmatpush1.bf16.msra.mxu0 %v5048
    %5161 = vmatprep.subr.bf16.mxu0 %v5045
    %5162 = vmatpush1.bf16.msra.mxu0 %v5044
    %5163 = vmatprep.subr.bf16.mxu0 0
    %5164 = vmatpush2.bf16.msra.mxu0 0
    %5165 = vmatprep.subr.bf16.mxu0 0
    %5166 = vmatpush2.bf16.msra.mxu0 0
    %5167 = vmatprep.subr.bf16.mxu0 0
    %5168 = vmatpush2.bf16.msra.mxu0 0
    %5169 = vmatprep.subr.bf16.mxu0 0
    %5170 = vmatpush2.bf16.msra.mxu0 0
    %5171 = vmatprep.subr.bf16.mxu0 0
    %5172 = vmatpush2.bf16.msra.mxu0 0
    %5173 = vmatprep.subr.bf16.mxu0 0
    %5174 = vmatpush2.bf16.msra.mxu0 0
    %5175 = vmatprep.subr.bf16.mxu0 0
    %5176 = vmatpush2.bf16.msra.mxu0 0
    %5177 = vmatprep.subr.bf16.mxu0 0
    %5178 = vmatpush2.bf16.msra.mxu0 0
    %5179 = vmatprep.mubr.bf16.mxu0 0
    %5180 = vmatmul.mubr.bf16.gmra.mxu0 %v4945
    %v5181 = vpop.f32.mrf.mxu0
    %v5182 = vadd.f32 %v3026, %v5181
    %v5183 = vpop.f32.mrf.mxu0
    %v5184 = vadd.f32 %v3028, %v5183
    %v5185 = vpop.f32.mrf.mxu0
    %v5186 = vpop.f32.mrf.mxu0
    %5187 = vdwg.mxu0
    %v5188 = vxor.u32 %v5141, 2147483648
    %v5189 = vmul.f32 %v5188, 1.442695
    %v5190 = vpow.pop %v5189
    %v5191 = vadd.f32 %v5190, 1.0
    %v5192 = vrcp.pop %v5191
    %v5193 = vmul.f32 1.0, %v5192
    %v5194 = vxor.u32 %v5143, 2147483648
    %v5195 = vmul.f32 %v5194, 1.442695
    %v5196 = vpow.pop %v5195
    %v5197 = vadd.f32 %v5196, 1.0
    %v5198 = vrcp.pop %v5197
    %v5199 = vmul.f32 1.0, %v5198
    %v5200 = vtanh.pop %v5182
    %v5201 = vxor.u32 %v5184, 2147483648
    %v5202 = vmul.f32 %v5201, 1.442695
    %v5203 = vpow.pop %v5202
    %v5204 = vadd.f32 %v5203, 1.0
    %v5205 = vrcp.pop %v5204
    %v5206 = vmul.f32 1.0, %v5205
    %v5207 = vmul.f32 %v5199, %v1538
    %v5208 = vmul.f32 %v5193, %v5200
    %v5209 = vadd.f32 %v5207, %v5208
    %v5210 = vtanh.pop %v5209
    %v5211 = vmul.f32 %v5206, %v5210
    %s5212 = scalar_lea.vmem %s8, 4
    %5213 = vst [vmem:[%s5212] sm:$0x1] %v5211
    %s5214 = scalar_lea.vmem %s8, 9
    %5215 = vst [vmem:[%s5214] sm:$0x1] %v5209
    // Predicated region
    $region58: #{rubiks_forward.1} parent=1 // pred_check
      _
    $region59: #{rubiks_forward.1} parent=1 // pred_check_branch
      %5217 = sbr.rel (0) target = $region61
    $region60: #{rubiks_forward.1} parent=1 // pred_region
      _
    $region61: #{rubiks_forward.1} parent=1 // pred_fallthru
      _
    // Predicated region
    $region62: #{rubiks_forward.1} parent=1 // pred_check
      _
    $region63: #{rubiks_forward.1} parent=1 // pred_check_branch
      %5219 = sbr.rel (0) target = $region65
    $region64: #{rubiks_forward.1} parent=1 // pred_region
      _
    $region65: #{rubiks_forward.1} parent=1 // pred_fallthru
      _
    %5220 = vsyncpa [#allocation3], 1
    %5221 = vsyncpa [#allocation5], 1
    %5222 = vsyncpa [#allocation8], 1
    %5223 = vsyncpa [#allocation11], 1

</llo_original>
